<compile_context>
chip_gen: v7x
topology: tpu7x:2x2x1
jax: 0.10.0
libtpu: 0.0.40
codegen_flags: <defaults>
</compile_context>

<pallas_src>
import functools

import jax
import jax.numpy as jnp
from jax.experimental import pallas as pl
from jax.experimental.pallas import tpu as pltpu

# Small, module-consistent dims (original: embedding_size = hidden_size = 300).
VOCAB = 64
EMBED = 32      # embedding_size
HIDDEN = 32     # hidden_size
SEQ = 8
BATCH = 2

VMEM_SPEC = pl.BlockSpec(memory_space=pltpu.MemorySpace.VMEM)


def _sigmoid(x):
    # exp on the EUP + approx reciprocal (also EUP) keeps the divide off the VALU slot.
    return pl.reciprocal(1.0 + jnp.exp(-x), approx=True)


def _softmax_last(x):
    m = jnp.max(x, axis=-1, keepdims=True)
    e = jnp.exp(x - m)
    return e * pl.reciprocal(jnp.sum(e, axis=-1, keepdims=True), approx=True)


# --------------------------------------------------------------------------
# Fused bidirectional LSTM recurrence (shared by kernels 1 and 3).
#
# Gate/feature layout (G = 8*H columns): [i_f, i_b, f_f, f_b, g_f, g_b, o_f, o_b]
# so that gate k occupies columns [2kH, 2(k+1)H) = [fwd | bwd], matching the
# h/c state layout (Beff, 2H) = [h_fwd | h_bwd].
#
# x2d is time-major flattened: row = t * Beff + b. Forward direction consumes
# time t, backward consumes time S-1-t; the hoisted projections xp_f / xp_b are
# sliced accordingly inside the (fully unrolled) loop.
# --------------------------------------------------------------------------
def _bilstm_steps(x2d, wf, wb, whh, bias, S, Beff):
    H = HIDDEN
    xp_f = jnp.dot(x2d, wf, preferred_element_type=jnp.float32) + bias
    xp_b = jnp.dot(x2d, wb, preferred_element_type=jnp.float32)
    h = jnp.zeros((Beff, 2 * H), jnp.float32)
    c = jnp.zeros((Beff, 2 * H), jnp.float32)
    hs = []
    for t in range(S):                      # static unroll (S is small & fixed)
        rf = slice(t * Beff, (t + 1) * Beff)
        rb = slice((S - 1 - t) * Beff, (S - t) * Beff)
        gates = (xp_f[rf, :] + xp_b[rb, :]
                 + jnp.dot(h, whh, preferred_element_type=jnp.float32))
        i_g = _sigmoid(gates[:, 0 * H:2 * H])
        f_g = _sigmoid(gates[:, 2 * H:4 * H])
        g_g = jnp.tanh(gates[:, 4 * H:6 * H])
        o_g = _sigmoid(gates[:, 6 * H:8 * H])
        c = f_g * c + i_g * g_g
        h = o_g * jnp.tanh(c)
        hs.append(h)                        # h[:, :H] = fwd@t ; h[:, H:] = bwd@(S-1-t)
    return hs


# --------------------------------------------------------------------------
# Kernel 1: fused BiLSTM (both sentences, both directions).
# --------------------------------------------------------------------------
def _bilstm_kernel(x_ref, wf_ref, wb_ref, whh_ref, b_ref, out_ref, *, S, Beff):
    H = HIDDEN
    hs = _bilstm_steps(x_ref[...], wf_ref[...], wb_ref[...], whh_ref[...],
                       b_ref[...], S, Beff)
    for t, h in enumerate(hs):
        out_ref[t * Beff:(t + 1) * Beff, 0:H] = h[:, 0:H]               # fwd at time t
        out_ref[(S - 1 - t) * Beff:(S - t) * Beff, H:2 * H] = h[:, H:2 * H]  # bwd at S-1-t


def bilstm_fused(x_tm, lp, S, Beff):
    kern = functools.partial(_bilstm_kernel, S=S, Beff=Beff)
    return pl.pallas_call(
        kern,
        out_shape=jax.ShapeDtypeStruct((S * Beff, 2 * HIDDEN), jnp.float32),
        in_specs=[VMEM_SPEC] * 5,
        out_specs=VMEM_SPEC,
    )(x_tm, lp['wf'], lp['wb'], lp['whh'], lp['b'])


# --------------------------------------------------------------------------
# Kernel 2: soft attention align + submul feature block + linear1 MLP.
# --------------------------------------------------------------------------
def _attn_mlp_kernel(o_ref, m1_ref, m2_ref, w1_ref, b1_ref, w2_ref, b2_ref,
                     q_ref, *, B):
    H = HIDDEN
    o = o_ref[...]                       # (2B, S, 2H) batch-major, rows 0:B = sentence1
    o1 = o[:B]
    o2 = o[B:]
    att1 = jnp.einsum('bqd,bkd->bqk', o1, o2, preferred_element_type=jnp.float32)
    att2 = jnp.einsum('bqd,bkd->bqk', o2, o1, preferred_element_type=jnp.float32)
    # Faithful to the reference module: the query sentence's 0/1 pad mask is added
    # to the scores along the key axis (torch promotes the bool mask to 0/1 float).
    w1s = _softmax_last(att1 + m1_ref[...][:, None, :])
    w2s = _softmax_last(att2 + m2_ref[...][:, None, :])
    a1 = jnp.einsum('bqk,bkd->bqd', w1s, o2, preferred_element_type=jnp.float32)
    a2 = jnp.einsum('bqk,bkd->bqd', w2s, o1, preferred_element_type=jnp.float32)

    align = jnp.concatenate([a1, a2], axis=0)                          # (2B, S, 2H)
    comb = jnp.concatenate([o, align, o - align, o * align], axis=-1)  # (2B, S, 8H)
    comb2 = comb.reshape(o.shape[0] * o.shape[1], 8 * H)               # (2B*S, 8H)

    hmid = jnp.dot(comb2, w1_ref[...], preferred_element_type=jnp.float32) + b1_ref[...]
    hmid = jnp.maximum(hmid, 0.0)
    q_ref[...] = jnp.dot(hmid, w2_ref[...], preferred_element_type=jnp.float32) + b2_ref[...]


def attention_mlp(o_bsd, m1, m2, l1, B, S):
    kern = functools.partial(_attn_mlp_kernel, B=B)
    return pl.pallas_call(
        kern,
        out_shape=jax.ShapeDtypeStruct((2 * B * S, HIDDEN), jnp.float32),
        in_specs=[VMEM_SPEC] * 7,
        out_specs=VMEM_SPEC,
    )(o_bsd, m1, m2, l1['w1'], l1['b1'], l1['w2'], l1['b2'])


# --------------------------------------------------------------------------
# Kernel 3: compose BiLSTM (lstm2) with fused avg/max pooling + classifier head.
# --------------------------------------------------------------------------
def _compose_head_kernel(q_ref, wf_ref, wb_ref, whh_ref, b_ref,
                         l1w1, l1b1, l1w2, l1b2,
                         l2w1, l2b1, l2w2, l2b2,
                         out_ref, *, S, B):
    Beff = 2 * B
    hs = _bilstm_steps(q_ref[...], wf_ref[...], wb_ref[...], whh_ref[...],
                       b_ref[...], S, Beff)
    # avg/max pooling over the full sequence is order-independent, so accumulate
    # directly from the per-step outputs (the compose output never hits memory).
    ssum = hs[0]
    smax = hs[0]
    for h in hs[1:]:
        ssum = ssum + h
        smax = jnp.maximum(smax, h)
    avg = ssum * (1.0 / S)
    rep = jnp.concatenate([avg, smax], axis=-1)               # (2B, 4H)
    out_cat = jnp.concatenate([rep[:B], rep[B:]], axis=-1)    # (B, 8H)

    # out = tanh(linear1(out)); out = linear2(out)
    hh = jnp.dot(out_cat, l1w1[...], preferred_element_type=jnp.float32) + l1b1[...]
    hh = jnp.maximum(hh, 0.0)
    hh = jnp.dot(hh, l1w2[...], preferred_element_type=jnp.float32) + l1b2[...]
    hh = jnp.tanh(hh)
    hh = jnp.dot(hh, l2w1[...], preferred_element_type=jnp.float32) + l2b1[...]
    hh = jnp.maximum(hh, 0.0)
    out_ref[...] = jnp.dot(hh, l2w2[...], preferred_element_type=jnp.float32) + l2b2[...]


def compose_pool_head(q_tm, lp, l1, l2, B, S):
    kern = functools.partial(_compose_head_kernel, S=S, B=B)
    return pl.pallas_call(
        kern,
        out_shape=jax.ShapeDtypeStruct((B, 3), jnp.float32),
        in_specs=[VMEM_SPEC] * 13,
        out_specs=VMEM_SPEC,
    )(q_tm, lp['wf'], lp['wb'], lp['whh'], lp['b'],
      l1['w1'], l1['b1'], l1['w2'], l1['b2'],
      l2['w1'], l2['b1'], l2['w2'], l2['b2'])


# --------------------------------------------------------------------------
# Full forward pass (embedding lookup / masks / tiny transposes are JAX glue,
# all dense compute lives in the 3 Pallas kernels above).
# --------------------------------------------------------------------------
def esim_forward(text1, text2, kp):
    B, S = text1.shape
    H = HIDDEN
    Beff = 2 * B

    mask1 = (text1 == 1).astype(jnp.float32)   # torch: text.eq(1) -> 0/1 float on add
    mask2 = (text2 == 1).astype(jnp.float32)

    x1 = jnp.take(kp['embed'], text1, axis=0)  # (B, S, E)
    x2 = jnp.take(kp['embed'], text2, axis=0)

    # Stack both sentences along batch; flatten time-major for the fused BiLSTM.
    x12 = jnp.concatenate([x1, x2], axis=0)                             # (2B, S, E)
    x_tm = jnp.transpose(x12, (1, 0, 2)).reshape(S * Beff, EMBED)       # (S*2B, E)

    o_tm = bilstm_fused(x_tm, kp['lstm1'], S, Beff)                     # (S*2B, 2H)
    o_bsd = o_tm.reshape(S, Beff, 2 * H).transpose(1, 0, 2)             # (2B, S, 2H)

    q_bm = attention_mlp(o_bsd, mask1, mask2, kp['linear1'], B, S)      # (2B*S, H)
    q_tm = q_bm.reshape(Beff, S, H).transpose(1, 0, 2).reshape(S * Beff, H)

    return compose_pool_head(q_tm, kp['lstm2'], kp['linear1'], kp['linear2'], B, S)


# --------------------------------------------------------------------------
# Parameters: PyTorch-style per-gate LSTM weights (gate order i, f, g, o) are
# assembled once into the fused/interleaved layout consumed by the kernels.
# --------------------------------------------------------------------------
def _fuse_bilstm(p, in_dim):
    H = HIDDEN
    G = 8 * H
    wf = jnp.zeros((in_dim, G), jnp.float32)
    wb = jnp.zeros((in_dim, G), jnp.float32)
    whh = jnp.zeros((2 * H, G), jnp.float32)
    b = jnp.zeros((1, G), jnp.float32)
    for g in range(4):                                  # torch gate order: i, f, g, o
        cf = slice((2 * g) * H, (2 * g + 1) * H)        # forward-direction slot
        cb = slice((2 * g + 1) * H, (2 * g + 2) * H)    # backward-direction slot
        wf = wf.at[:, cf].set(p['wih_f'][g])
        wb = wb.at[:, cb].set(p['wih_b'][g])
        whh = whh.at[:H, cf].set(p['whh_f'][g])
        whh = whh.at[H:, cb].set(p['whh_b'][g])
        b = b.at[:, cf].set(p['b_f'][g])
        b = b.at[:, cb].set(p['b_b'][g])
    return {'wf': wf, 'wb': wb, 'whh': whh, 'b': b}


def build_kernel_params(params):
    return {
        'embed': params['embed'],
        'lstm1': _fuse_bilstm(params['lstm1'], EMBED),
        'lstm2': _fuse_bilstm(params['lstm2'], HIDDEN),
        'linear1': params['linear1'],
        'linear2': params['linear2'],
    }


def init_params(key):
    keys = iter(jax.random.split(key, 40))

    def w(shape, scale=0.1):
        return (jax.random.normal(next(keys), shape) * scale).astype(jnp.float32)

    def lstm_params(in_dim):
        return {
            'wih_f': w((4, in_dim, HIDDEN)), 'whh_f': w((4, HIDDEN, HIDDEN)), 'b_f': w((4, 1, HIDDEN)),
            'wih_b': w((4, in_dim, HIDDEN)), 'whh_b': w((4, HIDDEN, HIDDEN)), 'b_b': w((4, 1, HIDDEN)),
        }

    return {
        'embed': w((VOCAB, EMBED), 1.0),
        'lstm1': lstm_params(EMBED),
        'lstm2': lstm_params(HIDDEN),
        'linear1': {'w1': w((8 * HIDDEN, 2 * HIDDEN)), 'b1': w((1, 2 * HIDDEN)),
                    'w2': w((2 * HIDDEN, HIDDEN)), 'b2': w((1, HIDDEN))},
        'linear2': {'w1': w((HIDDEN, HIDDEN // 8)), 'b1': w((1, HIDDEN // 8)),
                    'w2': w((HIDDEN // 8, 3)), 'b2': w((1, 3))},
    }


if __name__ == "__main__":
    root = jax.random.PRNGKey(0)
    pkey, tkey1, tkey2 = jax.random.split(root, 3)
    params = init_params(pkey)
    kparams = build_kernel_params(params)

    text1 = jax.random.randint(tkey1, (BATCH, SEQ), 0, VOCAB, dtype=jnp.int32)
    text2 = jax.random.randint(tkey2, (BATCH, SEQ), 0, VOCAB, dtype=jnp.int32)
    # Inject PAD tokens (id 1) so the attention-mask path is exercised.
    text1 = text1.at[:, -2:].set(1)
    text2 = text2.at[:, -1:].set(1)

    fwd = jax.jit(esim_forward)
    out = fwd(text1, text2, kparams)
    out = jax.block_until_ready(out)

    assert out.shape == (BATCH, 3), out.shape
    assert bool(jnp.all(jnp.isfinite(out)))
    print("KERNEL_OK")
</pallas_src>

<mosaic_0001>
module attributes {stable_mosaic.version = 11 : i64} {
  func.func @_bilstm_kernel(%arg0: memref<32x32xf32, #tpu.memory_space<vmem>>, %arg1: memref<32x256xf32, #tpu.memory_space<vmem>>, %arg2: memref<32x256xf32, #tpu.memory_space<vmem>>, %arg3: memref<64x256xf32, #tpu.memory_space<vmem>>, %arg4: memref<1x256xf32, #tpu.memory_space<vmem>>, %arg5: memref<32x64xf32, #tpu.memory_space<vmem>>) attributes {dimension_semantics = [], scalar_prefetch = 0 : i64, scratch_operands = 0 : i64, tpu.core_type = #tpu.core_type<tc>} {
    %c0 = arith.constant 0 : index
    %c0_0 = arith.constant 0 : index
    %0 = vector.load %arg0[%c0, %c0_0] : memref<32x32xf32, #tpu.memory_space<vmem>>, vector<32x32xf32>
    %c0_1 = arith.constant 0 : index
    %c0_2 = arith.constant 0 : index
    %1 = vector.load %arg1[%c0_1, %c0_2] : memref<32x256xf32, #tpu.memory_space<vmem>>, vector<32x256xf32>
    %c0_3 = arith.constant 0 : index
    %c0_4 = arith.constant 0 : index
    %2 = vector.load %arg2[%c0_3, %c0_4] : memref<32x256xf32, #tpu.memory_space<vmem>>, vector<32x256xf32>
    %c0_5 = arith.constant 0 : index
    %c0_6 = arith.constant 0 : index
    %3 = vector.load %arg3[%c0_5, %c0_6] : memref<64x256xf32, #tpu.memory_space<vmem>>, vector<64x256xf32>
    %c0_7 = arith.constant 0 : index
    %c0_8 = arith.constant 0 : index
    %4 = vector.load %arg4[%c0_7, %c0_8] : memref<1x256xf32, #tpu.memory_space<vmem>>, vector<1x256xf32>
    %cst = arith.constant dense<0.000000e+00> : vector<32x256xf32>
    %5 = tpu.matmul %0, %1, %cst {dimension_numbers = #tpu.dot_dimension_numbers<[1], [0], [0], [1], [0, 0, 1, 1], [], []>} : vector<32x32xf32>, vector<32x256xf32>, vector<32x256xf32> -> vector<32x256xf32>
    %6 = vector.broadcast %4 : vector<1x256xf32> to vector<32x256xf32>
    %7 = arith.addf %5, %6 : vector<32x256xf32>
    %cst_9 = arith.constant dense<0.000000e+00> : vector<32x256xf32>
    %8 = tpu.matmul %0, %2, %cst_9 {dimension_numbers = #tpu.dot_dimension_numbers<[1], [0], [0], [1], [0, 0, 1, 1], [], []>} : vector<32x32xf32>, vector<32x256xf32>, vector<32x256xf32> -> vector<32x256xf32>
    %cst_10 = arith.constant 0.000000e+00 : f32
    %9 = vector.broadcast %cst_10 : f32 to vector<4x64xf32>
    %cst_11 = arith.constant 0.000000e+00 : f32
    %10 = vector.broadcast %cst_11 : f32 to vector<4x64xf32>
    %11 = vector.extract_strided_slice %7 {offsets = [0, 0], sizes = [4, 256], strides = [1, 1]} : vector<32x256xf32> to vector<4x256xf32>
    %12 = vector.extract_strided_slice %8 {offsets = [28, 0], sizes = [4, 256], strides = [1, 1]} : vector<32x256xf32> to vector<4x256xf32>
    %13 = arith.addf %11, %12 : vector<4x256xf32>
    %cst_12 = arith.constant dense<0.000000e+00> : vector<4x256xf32>
    %14 = tpu.matmul %9, %3, %cst_12 {dimension_numbers = #tpu.dot_dimension_numbers<[1], [0], [0], [1], [0, 0, 1, 1], [], []>} : vector<4x64xf32>, vector<64x256xf32>, vector<4x256xf32> -> vector<4x256xf32>
    %15 = arith.addf %13, %14 : vector<4x256xf32>
    %16 = vector.extract_strided_slice %15 {offsets = [0, 0], sizes = [4, 64], strides = [1, 1]} : vector<4x256xf32> to vector<4x64xf32>
    %cst_13 = arith.constant 0.000000e+00 : f32
    %17 = vector.broadcast %cst_13 : f32 to vector<4x64xf32>
    %18 = arith.subf %17, %16 : vector<4x64xf32>
    %19 = math.exp %18 : vector<4x64xf32>
    %cst_14 = arith.constant 1.000000e+00 : f32
    %20 = vector.broadcast %cst_14 : f32 to vector<4x64xf32>
    %21 = arith.addf %20, %19 : vector<4x64xf32>
    %22 = tpu.reciprocal %21 {approx = true} : vector<4x64xf32> -> vector<4x64xf32>
    %23 = vector.extract_strided_slice %15 {offsets = [0, 64], sizes = [4, 64], strides = [1, 1]} : vector<4x256xf32> to vector<4x64xf32>
    %cst_15 = arith.constant 0.000000e+00 : f32
    %24 = vector.broadcast %cst_15 : f32 to vector<4x64xf32>
    %25 = arith.subf %24, %23 : vector<4x64xf32>
    %26 = math.exp %25 : vector<4x64xf32>
    %cst_16 = arith.constant 1.000000e+00 : f32
    %27 = vector.broadcast %cst_16 : f32 to vector<4x64xf32>
    %28 = arith.addf %27, %26 : vector<4x64xf32>
    %29 = tpu.reciprocal %28 {approx = true} : vector<4x64xf32> -> vector<4x64xf32>
    %30 = vector.extract_strided_slice %15 {offsets = [0, 128], sizes = [4, 64], strides = [1, 1]} : vector<4x256xf32> to vector<4x64xf32>
    %31 = math.tanh %30 : vector<4x64xf32>
    %32 = vector.extract_strided_slice %15 {offsets = [0, 192], sizes = [4, 64], strides = [1, 1]} : vector<4x256xf32> to vector<4x64xf32>
    %cst_17 = arith.constant 0.000000e+00 : f32
    %33 = vector.broadcast %cst_17 : f32 to vector<4x64xf32>
    %34 = arith.subf %33, %32 : vector<4x64xf32>
    %35 = math.exp %34 : vector<4x64xf32>
    %cst_18 = arith.constant 1.000000e+00 : f32
    %36 = vector.broadcast %cst_18 : f32 to vector<4x64xf32>
    %37 = arith.addf %36, %35 : vector<4x64xf32>
    %38 = tpu.reciprocal %37 {approx = true} : vector<4x64xf32> -> vector<4x64xf32>
    %39 = arith.mulf %29, %10 : vector<4x64xf32>
    %40 = arith.mulf %22, %31 : vector<4x64xf32>
    %41 = arith.addf %39, %40 : vector<4x64xf32>
    %42 = math.tanh %41 : vector<4x64xf32>
    %43 = arith.mulf %38, %42 : vector<4x64xf32>
    %44 = vector.extract_strided_slice %7 {offsets = [4, 0], sizes = [4, 256], strides = [1, 1]} : vector<32x256xf32> to vector<4x256xf32>
    %45 = vector.extract_strided_slice %8 {offsets = [24, 0], sizes = [4, 256], strides = [1, 1]} : vector<32x256xf32> to vector<4x256xf32>
    %46 = arith.addf %44, %45 : vector<4x256xf32>
    %cst_19 = arith.constant dense<0.000000e+00> : vector<4x256xf32>
    %47 = tpu.matmul %43, %3, %cst_19 {dimension_numbers = #tpu.dot_dimension_numbers<[1], [0], [0], [1], [0, 0, 1, 1], [], []>} : vector<4x64xf32>, vector<64x256xf32>, vector<4x256xf32> -> vector<4x256xf32>
    %48 = arith.addf %46, %47 : vector<4x256xf32>
    %49 = vector.extract_strided_slice %48 {offsets = [0, 0], sizes = [4, 64], strides = [1, 1]} : vector<4x256xf32> to vector<4x64xf32>
    %cst_20 = arith.constant 0.000000e+00 : f32
    %50 = vector.broadcast %cst_20 : f32 to vector<4x64xf32>
    %51 = arith.subf %50, %49 : vector<4x64xf32>
    %52 = math.exp %51 : vector<4x64xf32>
    %cst_21 = arith.constant 1.000000e+00 : f32
    %53 = vector.broadcast %cst_21 : f32 to vector<4x64xf32>
    %54 = arith.addf %53, %52 : vector<4x64xf32>
    %55 = tpu.reciprocal %54 {approx = true} : vector<4x64xf32> -> vector<4x64xf32>
    %56 = vector.extract_strided_slice %48 {offsets = [0, 64], sizes = [4, 64], strides = [1, 1]} : vector<4x256xf32> to vector<4x64xf32>
    %cst_22 = arith.constant 0.000000e+00 : f32
    %57 = vector.broadcast %cst_22 : f32 to vector<4x64xf32>
    %58 = arith.subf %57, %56 : vector<4x64xf32>
    %59 = math.exp %58 : vector<4x64xf32>
    %cst_23 = arith.constant 1.000000e+00 : f32
    %60 = vector.broadcast %cst_23 : f32 to vector<4x64xf32>
    %61 = arith.addf %60, %59 : vector<4x64xf32>
    %62 = tpu.reciprocal %61 {approx = true} : vector<4x64xf32> -> vector<4x64xf32>
    %63 = vector.extract_strided_slice %48 {offsets = [0, 128], sizes = [4, 64], strides = [1, 1]} : vector<4x256xf32> to vector<4x64xf32>
    %64 = math.tanh %63 : vector<4x64xf32>
    %65 = vector.extract_strided_slice %48 {offsets = [0, 192], sizes = [4, 64], strides = [1, 1]} : vector<4x256xf32> to vector<4x64xf32>
    %cst_24 = arith.constant 0.000000e+00 : f32
    %66 = vector.broadcast %cst_24 : f32 to vector<4x64xf32>
    %67 = arith.subf %66, %65 : vector<4x64xf32>
    %68 = math.exp %67 : vector<4x64xf32>
    %cst_25 = arith.constant 1.000000e+00 : f32
    %69 = vector.broadcast %cst_25 : f32 to vector<4x64xf32>
    %70 = arith.addf %69, %68 : vector<4x64xf32>
    %71 = tpu.reciprocal %70 {approx = true} : vector<4x64xf32> -> vector<4x64xf32>
    %72 = arith.mulf %62, %41 : vector<4x64xf32>
    %73 = arith.mulf %55, %64 : vector<4x64xf32>
    %74 = arith.addf %72, %73 : vector<4x64xf32>
    %75 = math.tanh %74 : vector<4x64xf32>
    %76 = arith.mulf %71, %75 : vector<4x64xf32>
    %77 = vector.extract_strided_slice %7 {offsets = [8, 0], sizes = [4, 256], strides = [1, 1]} : vector<32x256xf32> to vector<4x256xf32>
    %78 = vector.extract_strided_slice %8 {offsets = [20, 0], sizes = [4, 256], strides = [1, 1]} : vector<32x256xf32> to vector<4x256xf32>
    %79 = arith.addf %77, %78 : vector<4x256xf32>
    %cst_26 = arith.constant dense<0.000000e+00> : vector<4x256xf32>
    %80 = tpu.matmul %76, %3, %cst_26 {dimension_numbers = #tpu.dot_dimension_numbers<[1], [0], [0], [1], [0, 0, 1, 1], [], []>} : vector<4x64xf32>, vector<64x256xf32>, vector<4x256xf32> -> vector<4x256xf32>
    %81 = arith.addf %79, %80 : vector<4x256xf32>
    %82 = vector.extract_strided_slice %81 {offsets = [0, 0], sizes = [4, 64], strides = [1, 1]} : vector<4x256xf32> to vector<4x64xf32>
    %cst_27 = arith.constant 0.000000e+00 : f32
    %83 = vector.broadcast %cst_27 : f32 to vector<4x64xf32>
    %84 = arith.subf %83, %82 : vector<4x64xf32>
    %85 = math.exp %84 : vector<4x64xf32>
    %cst_28 = arith.constant 1.000000e+00 : f32
    %86 = vector.broadcast %cst_28 : f32 to vector<4x64xf32>
    %87 = arith.addf %86, %85 : vector<4x64xf32>
    %88 = tpu.reciprocal %87 {approx = true} : vector<4x64xf32> -> vector<4x64xf32>
    %89 = vector.extract_strided_slice %81 {offsets = [0, 64], sizes = [4, 64], strides = [1, 1]} : vector<4x256xf32> to vector<4x64xf32>
    %cst_29 = arith.constant 0.000000e+00 : f32
    %90 = vector.broadcast %cst_29 : f32 to vector<4x64xf32>
    %91 = arith.subf %90, %89 : vector<4x64xf32>
    %92 = math.exp %91 : vector<4x64xf32>
    %cst_30 = arith.constant 1.000000e+00 : f32
    %93 = vector.broadcast %cst_30 : f32 to vector<4x64xf32>
    %94 = arith.addf %93, %92 : vector<4x64xf32>
    %95 = tpu.reciprocal %94 {approx = true} : vector<4x64xf32> -> vector<4x64xf32>
    %96 = vector.extract_strided_slice %81 {offsets = [0, 128], sizes = [4, 64], strides = [1, 1]} : vector<4x256xf32> to vector<4x64xf32>
    %97 = math.tanh %96 : vector<4x64xf32>
    %98 = vector.extract_strided_slice %81 {offsets = [0, 192], sizes = [4, 64], strides = [1, 1]} : vector<4x256xf32> to vector<4x64xf32>
    %cst_31 = arith.constant 0.000000e+00 : f32
    %99 = vector.broadcast %cst_31 : f32 to vector<4x64xf32>
    %100 = arith.subf %99, %98 : vector<4x64xf32>
    %101 = math.exp %100 : vector<4x64xf32>
    %cst_32 = arith.constant 1.000000e+00 : f32
    %102 = vector.broadcast %cst_32 : f32 to vector<4x64xf32>
    %103 = arith.addf %102, %101 : vector<4x64xf32>
    %104 = tpu.reciprocal %103 {approx = true} : vector<4x64xf32> -> vector<4x64xf32>
    %105 = arith.mulf %95, %74 : vector<4x64xf32>
    %106 = arith.mulf %88, %97 : vector<4x64xf32>
    %107 = arith.addf %105, %106 : vector<4x64xf32>
    %108 = math.tanh %107 : vector<4x64xf32>
    %109 = arith.mulf %104, %108 : vector<4x64xf32>
    %110 = vector.extract_strided_slice %7 {offsets = [12, 0], sizes = [4, 256], strides = [1, 1]} : vector<32x256xf32> to vector<4x256xf32>
    %111 = vector.extract_strided_slice %8 {offsets = [16, 0], sizes = [4, 256], strides = [1, 1]} : vector<32x256xf32> to vector<4x256xf32>
    %112 = arith.addf %110, %111 : vector<4x256xf32>
    %cst_33 = arith.constant dense<0.000000e+00> : vector<4x256xf32>
    %113 = tpu.matmul %109, %3, %cst_33 {dimension_numbers = #tpu.dot_dimension_numbers<[1], [0], [0], [1], [0, 0, 1, 1], [], []>} : vector<4x64xf32>, vector<64x256xf32>, vector<4x256xf32> -> vector<4x256xf32>
    %114 = arith.addf %112, %113 : vector<4x256xf32>
    %115 = vector.extract_strided_slice %114 {offsets = [0, 0], sizes = [4, 64], strides = [1, 1]} : vector<4x256xf32> to vector<4x64xf32>
    %cst_34 = arith.constant 0.000000e+00 : f32
    %116 = vector.broadcast %cst_34 : f32 to vector<4x64xf32>
    %117 = arith.subf %116, %115 : vector<4x64xf32>
    %118 = math.exp %117 : vector<4x64xf32>
    %cst_35 = arith.constant 1.000000e+00 : f32
    %119 = vector.broadcast %cst_35 : f32 to vector<4x64xf32>
    %120 = arith.addf %119, %118 : vector<4x64xf32>
    %121 = tpu.reciprocal %120 {approx = true} : vector<4x64xf32> -> vector<4x64xf32>
    %122 = vector.extract_strided_slice %114 {offsets = [0, 64], sizes = [4, 64], strides = [1, 1]} : vector<4x256xf32> to vector<4x64xf32>
    %cst_36 = arith.constant 0.000000e+00 : f32
    %123 = vector.broadcast %cst_36 : f32 to vector<4x64xf32>
    %124 = arith.subf %123, %122 : vector<4x64xf32>
    %125 = math.exp %124 : vector<4x64xf32>
    %cst_37 = arith.constant 1.000000e+00 : f32
    %126 = vector.broadcast %cst_37 : f32 to vector<4x64xf32>
    %127 = arith.addf %126, %125 : vector<4x64xf32>
    %128 = tpu.reciprocal %127 {approx = true} : vector<4x64xf32> -> vector<4x64xf32>
    %129 = vector.extract_strided_slice %114 {offsets = [0, 128], sizes = [4, 64], strides = [1, 1]} : vector<4x256xf32> to vector<4x64xf32>
    %130 = math.tanh %129 : vector<4x64xf32>
    %131 = vector.extract_strided_slice %114 {offsets = [0, 192], sizes = [4, 64], strides = [1, 1]} : vector<4x256xf32> to vector<4x64xf32>
    %cst_38 = arith.constant 0.000000e+00 : f32
    %132 = vector.broadcast %cst_38 : f32 to vector<4x64xf32>
    %133 = arith.subf %132, %131 : vector<4x64xf32>
    %134 = math.exp %133 : vector<4x64xf32>
    %cst_39 = arith.constant 1.000000e+00 : f32
    %135 = vector.broadcast %cst_39 : f32 to vector<4x64xf32>
    %136 = arith.addf %135, %134 : vector<4x64xf32>
    %137 = tpu.reciprocal %136 {approx = true} : vector<4x64xf32> -> vector<4x64xf32>
    %138 = arith.mulf %128, %107 : vector<4x64xf32>
    %139 = arith.mulf %121, %130 : vector<4x64xf32>
    %140 = arith.addf %138, %139 : vector<4x64xf32>
    %141 = math.tanh %140 : vector<4x64xf32>
    %142 = arith.mulf %137, %141 : vector<4x64xf32>
    %143 = vector.extract_strided_slice %7 {offsets = [16, 0], sizes = [4, 256], strides = [1, 1]} : vector<32x256xf32> to vector<4x256xf32>
    %144 = vector.extract_strided_slice %8 {offsets = [12, 0], sizes = [4, 256], strides = [1, 1]} : vector<32x256xf32> to vector<4x256xf32>
    %145 = arith.addf %143, %144 : vector<4x256xf32>
    %cst_40 = arith.constant dense<0.000000e+00> : vector<4x256xf32>
    %146 = tpu.matmul %142, %3, %cst_40 {dimension_numbers = #tpu.dot_dimension_numbers<[1], [0], [0], [1], [0, 0, 1, 1], [], []>} : vector<4x64xf32>, vector<64x256xf32>, vector<4x256xf32> -> vector<4x256xf32>
    %147 = arith.addf %145, %146 : vector<4x256xf32>
    %148 = vector.extract_strided_slice %147 {offsets = [0, 0], sizes = [4, 64], strides = [1, 1]} : vector<4x256xf32> to vector<4x64xf32>
    %cst_41 = arith.constant 0.000000e+00 : f32
    %149 = vector.broadcast %cst_41 : f32 to vector<4x64xf32>
    %150 = arith.subf %149, %148 : vector<4x64xf32>
    %151 = math.exp %150 : vector<4x64xf32>
    %cst_42 = arith.constant 1.000000e+00 : f32
    %152 = vector.broadcast %cst_42 : f32 to vector<4x64xf32>
    %153 = arith.addf %152, %151 : vector<4x64xf32>
    %154 = tpu.reciprocal %153 {approx = true} : vector<4x64xf32> -> vector<4x64xf32>
    %155 = vector.extract_strided_slice %147 {offsets = [0, 64], sizes = [4, 64], strides = [1, 1]} : vector<4x256xf32> to vector<4x64xf32>
    %cst_43 = arith.constant 0.000000e+00 : f32
    %156 = vector.broadcast %cst_43 : f32 to vector<4x64xf32>
    %157 = arith.subf %156, %155 : vector<4x64xf32>
    %158 = math.exp %157 : vector<4x64xf32>
    %cst_44 = arith.constant 1.000000e+00 : f32
    %159 = vector.broadcast %cst_44 : f32 to vector<4x64xf32>
    %160 = arith.addf %159, %158 : vector<4x64xf32>
    %161 = tpu.reciprocal %160 {approx = true} : vector<4x64xf32> -> vector<4x64xf32>
    %162 = vector.extract_strided_slice %147 {offsets = [0, 128], sizes = [4, 64], strides = [1, 1]} : vector<4x256xf32> to vector<4x64xf32>
    %163 = math.tanh %162 : vector<4x64xf32>
    %164 = vector.extract_strided_slice %147 {offsets = [0, 192], sizes = [4, 64], strides = [1, 1]} : vector<4x256xf32> to vector<4x64xf32>
    %cst_45 = arith.constant 0.000000e+00 : f32
    %165 = vector.broadcast %cst_45 : f32 to vector<4x64xf32>
    %166 = arith.subf %165, %164 : vector<4x64xf32>
    %167 = math.exp %166 : vector<4x64xf32>
    %cst_46 = arith.constant 1.000000e+00 : f32
    %168 = vector.broadcast %cst_46 : f32 to vector<4x64xf32>
    %169 = arith.addf %168, %167 : vector<4x64xf32>
    %170 = tpu.reciprocal %169 {approx = true} : vector<4x64xf32> -> vector<4x64xf32>
    %171 = arith.mulf %161, %140 : vector<4x64xf32>
    %172 = arith.mulf %154, %163 : vector<4x64xf32>
    %173 = arith.addf %171, %172 : vector<4x64xf32>
    %174 = math.tanh %173 : vector<4x64xf32>
    %175 = arith.mulf %170, %174 : vector<4x64xf32>
    %176 = vector.extract_strided_slice %7 {offsets = [20, 0], sizes = [4, 256], strides = [1, 1]} : vector<32x256xf32> to vector<4x256xf32>
    %177 = vector.extract_strided_slice %8 {offsets = [8, 0], sizes = [4, 256], strides = [1, 1]} : vector<32x256xf32> to vector<4x256xf32>
    %178 = arith.addf %176, %177 : vector<4x256xf32>
    %cst_47 = arith.constant dense<0.000000e+00> : vector<4x256xf32>
    %179 = tpu.matmul %175, %3, %cst_47 {dimension_numbers = #tpu.dot_dimension_numbers<[1], [0], [0], [1], [0, 0, 1, 1], [], []>} : vector<4x64xf32>, vector<64x256xf32>, vector<4x256xf32> -> vector<4x256xf32>
    %180 = arith.addf %178, %179 : vector<4x256xf32>
    %181 = vector.extract_strided_slice %180 {offsets = [0, 0], sizes = [4, 64], strides = [1, 1]} : vector<4x256xf32> to vector<4x64xf32>
    %cst_48 = arith.constant 0.000000e+00 : f32
    %182 = vector.broadcast %cst_48 : f32 to vector<4x64xf32>
    %183 = arith.subf %182, %181 : vector<4x64xf32>
    %184 = math.exp %183 : vector<4x64xf32>
    %cst_49 = arith.constant 1.000000e+00 : f32
    %185 = vector.broadcast %cst_49 : f32 to vector<4x64xf32>
    %186 = arith.addf %185, %184 : vector<4x64xf32>
    %187 = tpu.reciprocal %186 {approx = true} : vector<4x64xf32> -> vector<4x64xf32>
    %188 = vector.extract_strided_slice %180 {offsets = [0, 64], sizes = [4, 64], strides = [1, 1]} : vector<4x256xf32> to vector<4x64xf32>
    %cst_50 = arith.constant 0.000000e+00 : f32
    %189 = vector.broadcast %cst_50 : f32 to vector<4x64xf32>
    %190 = arith.subf %189, %188 : vector<4x64xf32>
    %191 = math.exp %190 : vector<4x64xf32>
    %cst_51 = arith.constant 1.000000e+00 : f32
    %192 = vector.broadcast %cst_51 : f32 to vector<4x64xf32>
    %193 = arith.addf %192, %191 : vector<4x64xf32>
    %194 = tpu.reciprocal %193 {approx = true} : vector<4x64xf32> -> vector<4x64xf32>
    %195 = vector.extract_strided_slice %180 {offsets = [0, 128], sizes = [4, 64], strides = [1, 1]} : vector<4x256xf32> to vector<4x64xf32>
    %196 = math.tanh %195 : vector<4x64xf32>
    %197 = vector.extract_strided_slice %180 {offsets = [0, 192], sizes = [4, 64], strides = [1, 1]} : vector<4x256xf32> to vector<4x64xf32>
    %cst_52 = arith.constant 0.000000e+00 : f32
    %198 = vector.broadcast %cst_52 : f32 to vector<4x64xf32>
    %199 = arith.subf %198, %197 : vector<4x64xf32>
    %200 = math.exp %199 : vector<4x64xf32>
    %cst_53 = arith.constant 1.000000e+00 : f32
    %201 = vector.broadcast %cst_53 : f32 to vector<4x64xf32>
    %202 = arith.addf %201, %200 : vector<4x64xf32>
    %203 = tpu.reciprocal %202 {approx = true} : vector<4x64xf32> -> vector<4x64xf32>
    %204 = arith.mulf %194, %173 : vector<4x64xf32>
    %205 = arith.mulf %187, %196 : vector<4x64xf32>
    %206 = arith.addf %204, %205 : vector<4x64xf32>
    %207 = math.tanh %206 : vector<4x64xf32>
    %208 = arith.mulf %203, %207 : vector<4x64xf32>
    %209 = vector.extract_strided_slice %7 {offsets = [24, 0], sizes = [4, 256], strides = [1, 1]} : vector<32x256xf32> to vector<4x256xf32>
    %210 = vector.extract_strided_slice %8 {offsets = [4, 0], sizes = [4, 256], strides = [1, 1]} : vector<32x256xf32> to vector<4x256xf32>
    %211 = arith.addf %209, %210 : vector<4x256xf32>
    %cst_54 = arith.constant dense<0.000000e+00> : vector<4x256xf32>
    %212 = tpu.matmul %208, %3, %cst_54 {dimension_numbers = #tpu.dot_dimension_numbers<[1], [0], [0], [1], [0, 0, 1, 1], [], []>} : vector<4x64xf32>, vector<64x256xf32>, vector<4x256xf32> -> vector<4x256xf32>
    %213 = arith.addf %211, %212 : vector<4x256xf32>
    %214 = vector.extract_strided_slice %213 {offsets = [0, 0], sizes = [4, 64], strides = [1, 1]} : vector<4x256xf32> to vector<4x64xf32>
    %cst_55 = arith.constant 0.000000e+00 : f32
    %215 = vector.broadcast %cst_55 : f32 to vector<4x64xf32>
    %216 = arith.subf %215, %214 : vector<4x64xf32>
    %217 = math.exp %216 : vector<4x64xf32>
    %cst_56 = arith.constant 1.000000e+00 : f32
    %218 = vector.broadcast %cst_56 : f32 to vector<4x64xf32>
    %219 = arith.addf %218, %217 : vector<4x64xf32>
    %220 = tpu.reciprocal %219 {approx = true} : vector<4x64xf32> -> vector<4x64xf32>
    %221 = vector.extract_strided_slice %213 {offsets = [0, 64], sizes = [4, 64], strides = [1, 1]} : vector<4x256xf32> to vector<4x64xf32>
    %cst_57 = arith.constant 0.000000e+00 : f32
    %222 = vector.broadcast %cst_57 : f32 to vector<4x64xf32>
    %223 = arith.subf %222, %221 : vector<4x64xf32>
    %224 = math.exp %223 : vector<4x64xf32>
    %cst_58 = arith.constant 1.000000e+00 : f32
    %225 = vector.broadcast %cst_58 : f32 to vector<4x64xf32>
    %226 = arith.addf %225, %224 : vector<4x64xf32>
    %227 = tpu.reciprocal %226 {approx = true} : vector<4x64xf32> -> vector<4x64xf32>
    %228 = vector.extract_strided_slice %213 {offsets = [0, 128], sizes = [4, 64], strides = [1, 1]} : vector<4x256xf32> to vector<4x64xf32>
    %229 = math.tanh %228 : vector<4x64xf32>
    %230 = vector.extract_strided_slice %213 {offsets = [0, 192], sizes = [4, 64], strides = [1, 1]} : vector<4x256xf32> to vector<4x64xf32>
    %cst_59 = arith.constant 0.000000e+00 : f32
    %231 = vector.broadcast %cst_59 : f32 to vector<4x64xf32>
    %232 = arith.subf %231, %230 : vector<4x64xf32>
    %233 = math.exp %232 : vector<4x64xf32>
    %cst_60 = arith.constant 1.000000e+00 : f32
    %234 = vector.broadcast %cst_60 : f32 to vector<4x64xf32>
    %235 = arith.addf %234, %233 : vector<4x64xf32>
    %236 = tpu.reciprocal %235 {approx = true} : vector<4x64xf32> -> vector<4x64xf32>
    %237 = arith.mulf %227, %206 : vector<4x64xf32>
    %238 = arith.mulf %220, %229 : vector<4x64xf32>
    %239 = arith.addf %237, %238 : vector<4x64xf32>
    %240 = math.tanh %239 : vector<4x64xf32>
    %241 = arith.mulf %236, %240 : vector<4x64xf32>
    %242 = vector.extract_strided_slice %7 {offsets = [28, 0], sizes = [4, 256], strides = [1, 1]} : vector<32x256xf32> to vector<4x256xf32>
    %243 = vector.extract_strided_slice %8 {offsets = [0, 0], sizes = [4, 256], strides = [1, 1]} : vector<32x256xf32> to vector<4x256xf32>
    %244 = arith.addf %242, %243 : vector<4x256xf32>
    %cst_61 = arith.constant dense<0.000000e+00> : vector<4x256xf32>
    %245 = tpu.matmul %241, %3, %cst_61 {dimension_numbers = #tpu.dot_dimension_numbers<[1], [0], [0], [1], [0, 0, 1, 1], [], []>} : vector<4x64xf32>, vector<64x256xf32>, vector<4x256xf32> -> vector<4x256xf32>
    %246 = arith.addf %244, %245 : vector<4x256xf32>
    %247 = vector.extract_strided_slice %246 {offsets = [0, 0], sizes = [4, 64], strides = [1, 1]} : vector<4x256xf32> to vector<4x64xf32>
    %cst_62 = arith.constant 0.000000e+00 : f32
    %248 = vector.broadcast %cst_62 : f32 to vector<4x64xf32>
    %249 = arith.subf %248, %247 : vector<4x64xf32>
    %250 = math.exp %249 : vector<4x64xf32>
    %cst_63 = arith.constant 1.000000e+00 : f32
    %251 = vector.broadcast %cst_63 : f32 to vector<4x64xf32>
    %252 = arith.addf %251, %250 : vector<4x64xf32>
    %253 = tpu.reciprocal %252 {approx = true} : vector<4x64xf32> -> vector<4x64xf32>
    %254 = vector.extract_strided_slice %246 {offsets = [0, 64], sizes = [4, 64], strides = [1, 1]} : vector<4x256xf32> to vector<4x64xf32>
    %cst_64 = arith.constant 0.000000e+00 : f32
    %255 = vector.broadcast %cst_64 : f32 to vector<4x64xf32>
    %256 = arith.subf %255, %254 : vector<4x64xf32>
    %257 = math.exp %256 : vector<4x64xf32>
    %cst_65 = arith.constant 1.000000e+00 : f32
    %258 = vector.broadcast %cst_65 : f32 to vector<4x64xf32>
    %259 = arith.addf %258, %257 : vector<4x64xf32>
    %260 = tpu.reciprocal %259 {approx = true} : vector<4x64xf32> -> vector<4x64xf32>
    %261 = vector.extract_strided_slice %246 {offsets = [0, 128], sizes = [4, 64], strides = [1, 1]} : vector<4x256xf32> to vector<4x64xf32>
    %262 = math.tanh %261 : vector<4x64xf32>
    %263 = vector.extract_strided_slice %246 {offsets = [0, 192], sizes = [4, 64], strides = [1, 1]} : vector<4x256xf32> to vector<4x64xf32>
    %cst_66 = arith.constant 0.000000e+00 : f32
    %264 = vector.broadcast %cst_66 : f32 to vector<4x64xf32>
    %265 = arith.subf %264, %263 : vector<4x64xf32>
    %266 = math.exp %265 : vector<4x64xf32>
    %cst_67 = arith.constant 1.000000e+00 : f32
    %267 = vector.broadcast %cst_67 : f32 to vector<4x64xf32>
    %268 = arith.addf %267, %266 : vector<4x64xf32>
    %269 = tpu.reciprocal %268 {approx = true} : vector<4x64xf32> -> vector<4x64xf32>
    %270 = arith.mulf %260, %239 : vector<4x64xf32>
    %271 = arith.mulf %253, %262 : vector<4x64xf32>
    %272 = arith.addf %270, %271 : vector<4x64xf32>
    %273 = math.tanh %272 : vector<4x64xf32>
    %274 = arith.mulf %269, %273 : vector<4x64xf32>
    %275 = vector.extract_strided_slice %43 {offsets = [0, 0], sizes = [4, 32], strides = [1, 1]} : vector<4x64xf32> to vector<4x32xf32>
    %c0_68 = arith.constant 0 : index
    %c0_69 = arith.constant 0 : index
    %276 = vector.load %arg5[%c0_68, %c0_69] : memref<32x64xf32, #tpu.memory_space<vmem>>, vector<4x32xf32>
    tpu.vector_store %arg5[%c0_68, %c0_69], %275 {strides = array<i32>} : memref<32x64xf32, #tpu.memory_space<vmem>>, vector<4x32xf32>,
    %277 = vector.extract_strided_slice %43 {offsets = [0, 32], sizes = [4, 32], strides = [1, 1]} : vector<4x64xf32> to vector<4x32xf32>
    %c28 = arith.constant 28 : index
    %c32 = arith.constant 32 : index
    %278 = vector.load %arg5[%c28, %c32] : memref<32x64xf32, #tpu.memory_space<vmem>>, vector<4x32xf32>
    tpu.vector_store %arg5[%c28, %c32], %277 {strides = array<i32>} : memref<32x64xf32, #tpu.memory_space<vmem>>, vector<4x32xf32>,
    %279 = vector.extract_strided_slice %76 {offsets = [0, 0], sizes = [4, 32], strides = [1, 1]} : vector<4x64xf32> to vector<4x32xf32>
    %c4 = arith.constant 4 : index
    %c0_70 = arith.constant 0 : index
    %280 = vector.load %arg5[%c4, %c0_70] : memref<32x64xf32, #tpu.memory_space<vmem>>, vector<4x32xf32>
    tpu.vector_store %arg5[%c4, %c0_70], %279 {strides = array<i32>} : memref<32x64xf32, #tpu.memory_space<vmem>>, vector<4x32xf32>,
    %281 = vector.extract_strided_slice %76 {offsets = [0, 32], sizes = [4, 32], strides = [1, 1]} : vector<4x64xf32> to vector<4x32xf32>
    %c24 = arith.constant 24 : index
    %c32_71 = arith.constant 32 : index
    %282 = vector.load %arg5[%c24, %c32_71] : memref<32x64xf32, #tpu.memory_space<vmem>>, vector<4x32xf32>
    tpu.vector_store %arg5[%c24, %c32_71], %281 {strides = array<i32>} : memref<32x64xf32, #tpu.memory_space<vmem>>, vector<4x32xf32>,
    %283 = vector.extract_strided_slice %109 {offsets = [0, 0], sizes = [4, 32], strides = [1, 1]} : vector<4x64xf32> to vector<4x32xf32>
    %c8 = arith.constant 8 : index
    %c0_72 = arith.constant 0 : index
    %284 = vector.load %arg5[%c8, %c0_72] : memref<32x64xf32, #tpu.memory_space<vmem>>, vector<4x32xf32>
    tpu.vector_store %arg5[%c8, %c0_72], %283 {strides = array<i32>} : memref<32x64xf32, #tpu.memory_space<vmem>>, vector<4x32xf32>,
    %285 = vector.extract_strided_slice %109 {offsets = [0, 32], sizes = [4, 32], strides = [1, 1]} : vector<4x64xf32> to vector<4x32xf32>
    %c20 = arith.constant 20 : index
    %c32_73 = arith.constant 32 : index
    %286 = vector.load %arg5[%c20, %c32_73] : memref<32x64xf32, #tpu.memory_space<vmem>>, vector<4x32xf32>
    tpu.vector_store %arg5[%c20, %c32_73], %285 {strides = array<i32>} : memref<32x64xf32, #tpu.memory_space<vmem>>, vector<4x32xf32>,
    %287 = vector.extract_strided_slice %142 {offsets = [0, 0], sizes = [4, 32], strides = [1, 1]} : vector<4x64xf32> to vector<4x32xf32>
    %c12 = arith.constant 12 : index
    %c0_74 = arith.constant 0 : index
    %288 = vector.load %arg5[%c12, %c0_74] : memref<32x64xf32, #tpu.memory_space<vmem>>, vector<4x32xf32>
    tpu.vector_store %arg5[%c12, %c0_74], %287 {strides = array<i32>} : memref<32x64xf32, #tpu.memory_space<vmem>>, vector<4x32xf32>,
    %289 = vector.extract_strided_slice %142 {offsets = [0, 32], sizes = [4, 32], strides = [1, 1]} : vector<4x64xf32> to vector<4x32xf32>
    %c16 = arith.constant 16 : index
    %c32_75 = arith.constant 32 : index
    %290 = vector.load %arg5[%c16, %c32_75] : memref<32x64xf32, #tpu.memory_space<vmem>>, vector<4x32xf32>
    tpu.vector_store %arg5[%c16, %c32_75], %289 {strides = array<i32>} : memref<32x64xf32, #tpu.memory_space<vmem>>, vector<4x32xf32>,
    %291 = vector.extract_strided_slice %175 {offsets = [0, 0], sizes = [4, 32], strides = [1, 1]} : vector<4x64xf32> to vector<4x32xf32>
    %c16_76 = arith.constant 16 : index
    %c0_77 = arith.constant 0 : index
    %292 = vector.load %arg5[%c16_76, %c0_77] : memref<32x64xf32, #tpu.memory_space<vmem>>, vector<4x32xf32>
    tpu.vector_store %arg5[%c16_76, %c0_77], %291 {strides = array<i32>} : memref<32x64xf32, #tpu.memory_space<vmem>>, vector<4x32xf32>,
    %293 = vector.extract_strided_slice %175 {offsets = [0, 32], sizes = [4, 32], strides = [1, 1]} : vector<4x64xf32> to vector<4x32xf32>
    %c12_78 = arith.constant 12 : index
    %c32_79 = arith.constant 32 : index
    %294 = vector.load %arg5[%c12_78, %c32_79] : memref<32x64xf32, #tpu.memory_space<vmem>>, vector<4x32xf32>
    tpu.vector_store %arg5[%c12_78, %c32_79], %293 {strides = array<i32>} : memref<32x64xf32, #tpu.memory_space<vmem>>, vector<4x32xf32>,
    %295 = vector.extract_strided_slice %208 {offsets = [0, 0], sizes = [4, 32], strides = [1, 1]} : vector<4x64xf32> to vector<4x32xf32>
    %c20_80 = arith.constant 20 : index
    %c0_81 = arith.constant 0 : index
    %296 = vector.load %arg5[%c20_80, %c0_81] : memref<32x64xf32, #tpu.memory_space<vmem>>, vector<4x32xf32>
    tpu.vector_store %arg5[%c20_80, %c0_81], %295 {strides = array<i32>} : memref<32x64xf32, #tpu.memory_space<vmem>>, vector<4x32xf32>,
    %297 = vector.extract_strided_slice %208 {offsets = [0, 32], sizes = [4, 32], strides = [1, 1]} : vector<4x64xf32> to vector<4x32xf32>
    %c8_82 = arith.constant 8 : index
    %c32_83 = arith.constant 32 : index
    %298 = vector.load %arg5[%c8_82, %c32_83] : memref<32x64xf32, #tpu.memory_space<vmem>>, vector<4x32xf32>
    tpu.vector_store %arg5[%c8_82, %c32_83], %297 {strides = array<i32>} : memref<32x64xf32, #tpu.memory_space<vmem>>, vector<4x32xf32>,
    %299 = vector.extract_strided_slice %241 {offsets = [0, 0], sizes = [4, 32], strides = [1, 1]} : vector<4x64xf32> to vector<4x32xf32>
    %c24_84 = arith.constant 24 : index
    %c0_85 = arith.constant 0 : index
    %300 = vector.load %arg5[%c24_84, %c0_85] : memref<32x64xf32, #tpu.memory_space<vmem>>, vector<4x32xf32>
    tpu.vector_store %arg5[%c24_84, %c0_85], %299 {strides = array<i32>} : memref<32x64xf32, #tpu.memory_space<vmem>>, vector<4x32xf32>,
    %301 = vector.extract_strided_slice %241 {offsets = [0, 32], sizes = [4, 32], strides = [1, 1]} : vector<4x64xf32> to vector<4x32xf32>
    %c4_86 = arith.constant 4 : index
    %c32_87 = arith.constant 32 : index
    %302 = vector.load %arg5[%c4_86, %c32_87] : memref<32x64xf32, #tpu.memory_space<vmem>>, vector<4x32xf32>
    tpu.vector_store %arg5[%c4_86, %c32_87], %301 {strides = array<i32>} : memref<32x64xf32, #tpu.memory_space<vmem>>, vector<4x32xf32>,
    %303 = vector.extract_strided_slice %274 {offsets = [0, 0], sizes = [4, 32], strides = [1, 1]} : vector<4x64xf32> to vector<4x32xf32>
    %c28_88 = arith.constant 28 : index
    %c0_89 = arith.constant 0 : index
    %304 = vector.load %arg5[%c28_88, %c0_89] : memref<32x64xf32, #tpu.memory_space<vmem>>, vector<4x32xf32>
    tpu.vector_store %arg5[%c28_88, %c0_89], %303 {strides = array<i32>} : memref<32x64xf32, #tpu.memory_space<vmem>>, vector<4x32xf32>,
    %305 = vector.extract_strided_slice %274 {offsets = [0, 32], sizes = [4, 32], strides = [1, 1]} : vector<4x64xf32> to vector<4x32xf32>
    %c0_90 = arith.constant 0 : index
    %c32_91 = arith.constant 32 : index
    %306 = vector.load %arg5[%c0_90, %c32_91] : memref<32x64xf32, #tpu.memory_space<vmem>>, vector<4x32xf32>
    tpu.vector_store %arg5[%c0_90, %c32_91], %305 {strides = array<i32>} : memref<32x64xf32, #tpu.memory_space<vmem>>, vector<4x32xf32>,
    return
  }
}

module attributes {stable_mosaic.version = 11 : i64} {
  func.func @_attn_mlp_kernel(%arg0: memref<4x8x64xf32, #tpu.memory_space<vmem>>, %arg1: memref<2x8xf32, #tpu.memory_space<vmem>>, %arg2: memref<2x8xf32, #tpu.memory_space<vmem>>, %arg3: memref<256x64xf32, #tpu.memory_space<vmem>>, %arg4: memref<1x64xf32, #tpu.memory_space<vmem>>, %arg5: memref<64x32xf32, #tpu.memory_space<vmem>>, %arg6: memref<1x32xf32, #tpu.memory_space<vmem>>, %arg7: memref<32x32xf32, #tpu.memory_space<vmem>>) attributes {dimension_semantics = [], scalar_prefetch = 0 : i64, scratch_operands = 0 : i64, tpu.core_type = #tpu.core_type<tc>} {
    %c0 = arith.constant 0 : index
    %c0_0 = arith.constant 0 : index
    %c0_1 = arith.constant 0 : index
    %0 = vector.load %arg0[%c0, %c0_0, %c0_1] : memref<4x8x64xf32, #tpu.memory_space<vmem>>, vector<4x8x64xf32>
    %1 = vector.extract_strided_slice %0 {offsets = [0, 0, 0], sizes = [2, 8, 64], strides = [1, 1, 1]} : vector<4x8x64xf32> to vector<2x8x64xf32>
    %2 = vector.extract_strided_slice %0 {offsets = [2, 0, 0], sizes = [2, 8, 64], strides = [1, 1, 1]} : vector<4x8x64xf32> to vector<2x8x64xf32>
    "tpu.trace_start"() <{level = 10 : i32, message = "bqd,bkd->bqk"}> : () -> ()
    %cst = arith.constant dense<0.000000e+00> : vector<2x8x8xf32>
    %3 = tpu.matmul %1, %2, %cst {dimension_numbers = #tpu.dot_dimension_numbers<[2], [2], [1], [1], [0, 0, 0, 1, 1, 1], [0], [0]>} : vector<2x8x64xf32>, vector<2x8x64xf32>, vector<2x8x8xf32> -> vector<2x8x8xf32>
    %cst_2 = arith.constant dense<0.000000e+00> : vector<2x8x8xf32>
    %4 = tpu.matmul %2, %1, %cst_2 {dimension_numbers = #tpu.dot_dimension_numbers<[2], [2], [1], [1], [0, 0, 0, 1, 1, 1], [0], [0]>} : vector<2x8x64xf32>, vector<2x8x64xf32>, vector<2x8x8xf32> -> vector<2x8x8xf32>
    "tpu.trace_stop"() : () -> ()
    %c0_3 = arith.constant 0 : index
    %c0_4 = arith.constant 0 : index
    %5 = vector.load %arg1[%c0_3, %c0_4] : memref<2x8xf32, #tpu.memory_space<vmem>>, vector<2x8xf32>
    %6 = vector.shape_cast %5 : vector<2x8xf32> to vector<2x1x8xf32>
    %7 = vector.broadcast %6 : vector<2x1x8xf32> to vector<2x8x8xf32>
    %8 = arith.addf %3, %7 : vector<2x8x8xf32>
    %cst_5 = arith.constant dense<0xFF800000> : vector<2x8xf32>
    %9 = vector.multi_reduction <maximumf>, %8, %cst_5 [2] : vector<2x8x8xf32> to vector<2x8xf32>
    %10 = vector.shape_cast %9 : vector<2x8xf32> to vector<2x8x1xf32>
    %11 = vector.broadcast %10 : vector<2x8x1xf32> to vector<2x8x8xf32>
    %12 = arith.subf %8, %11 : vector<2x8x8xf32>
    %13 = math.exp %12 : vector<2x8x8xf32>
    %cst_6 = arith.constant dense<0.000000e+00> : vector<2x8xf32>
    %14 = vector.multi_reduction <add>, %13, %cst_6 [2] : vector<2x8x8xf32> to vector<2x8xf32>
    %15 = vector.shape_cast %14 : vector<2x8xf32> to vector<2x8x1xf32>
    %16 = tpu.reciprocal %15 {approx = true} : vector<2x8x1xf32> -> vector<2x8x1xf32>
    %17 = vector.broadcast %16 : vector<2x8x1xf32> to vector<2x8x8xf32>
    %18 = arith.mulf %13, %17 : vector<2x8x8xf32>
    %c0_7 = arith.constant 0 : index
    %c0_8 = arith.constant 0 : index
    %19 = vector.load %arg2[%c0_7, %c0_8] : memref<2x8xf32, #tpu.memory_space<vmem>>, vector<2x8xf32>
    %20 = vector.shape_cast %19 : vector<2x8xf32> to vector<2x1x8xf32>
    %21 = vector.broadcast %20 : vector<2x1x8xf32> to vector<2x8x8xf32>
    %22 = arith.addf %4, %21 : vector<2x8x8xf32>
    %cst_9 = arith.constant dense<0xFF800000> : vector<2x8xf32>
    %23 = vector.multi_reduction <maximumf>, %22, %cst_9 [2] : vector<2x8x8xf32> to vector<2x8xf32>
    %24 = vector.shape_cast %23 : vector<2x8xf32> to vector<2x8x1xf32>
    %25 = vector.broadcast %24 : vector<2x8x1xf32> to vector<2x8x8xf32>
    %26 = arith.subf %22, %25 : vector<2x8x8xf32>
    %27 = math.exp %26 : vector<2x8x8xf32>
    %cst_10 = arith.constant dense<0.000000e+00> : vector<2x8xf32>
    %28 = vector.multi_reduction <add>, %27, %cst_10 [2] : vector<2x8x8xf32> to vector<2x8xf32>
    %29 = vector.shape_cast %28 : vector<2x8xf32> to vector<2x8x1xf32>
    %30 = tpu.reciprocal %29 {approx = true} : vector<2x8x1xf32> -> vector<2x8x1xf32>
    %31 = vector.broadcast %30 : vector<2x8x1xf32> to vector<2x8x8xf32>
    %32 = arith.mulf %27, %31 : vector<2x8x8xf32>
    "tpu.trace_start"() <{level = 10 : i32, message = "bqk,bkd->bqd"}> : () -> ()
    %cst_11 = arith.constant dense<0.000000e+00> : vector<2x8x64xf32>
    %33 = tpu.matmul %18, %2, %cst_11 {dimension_numbers = #tpu.dot_dimension_numbers<[2], [1], [1], [2], [0, 0, 0, 1, 1, 2], [0], [0]>} : vector<2x8x8xf32>, vector<2x8x64xf32>, vector<2x8x64xf32> -> vector<2x8x64xf32>
    %cst_12 = arith.constant dense<0.000000e+00> : vector<2x8x64xf32>
    %34 = tpu.matmul %32, %1, %cst_12 {dimension_numbers = #tpu.dot_dimension_numbers<[2], [1], [1], [2], [0, 0, 0, 1, 1, 2], [0], [0]>} : vector<2x8x8xf32>, vector<2x8x64xf32>, vector<2x8x64xf32> -> vector<2x8x64xf32>
    "tpu.trace_stop"() : () -> ()
    %35 = tpu.concatenate %33, %34 in 0 : vector<2x8x64xf32>, vector<2x8x64xf32> -> vector<4x8x64xf32>
    %36 = arith.subf %0, %35 : vector<4x8x64xf32>
    %37 = arith.mulf %0, %35 : vector<4x8x64xf32>
    %38 = tpu.concatenate %0, %35, %36, %37 in 2 : vector<4x8x64xf32>, vector<4x8x64xf32>, vector<4x8x64xf32>, vector<4x8x64xf32> -> vector<4x8x256xf32>
    %39 = vector.shape_cast %38 : vector<4x8x256xf32> to vector<32x256xf32>
    %c0_13 = arith.constant 0 : index
    %c0_14 = arith.constant 0 : index
    %40 = vector.load %arg3[%c0_13, %c0_14] : memref<256x64xf32, #tpu.memory_space<vmem>>, vector<256x64xf32>
    %cst_15 = arith.constant dense<0.000000e+00> : vector<32x64xf32>
    %41 = tpu.matmul %39, %40, %cst_15 {dimension_numbers = #tpu.dot_dimension_numbers<[1], [0], [0], [1], [0, 0, 1, 1], [], []>} : vector<32x256xf32>, vector<256x64xf32>, vector<32x64xf32> -> vector<32x64xf32>
    %c0_16 = arith.constant 0 : index
    %c0_17 = arith.constant 0 : index
    %42 = vector.load %arg4[%c0_16, %c0_17] : memref<1x64xf32, #tpu.memory_space<vmem>>, vector<1x64xf32>
    %43 = vector.broadcast %42 : vector<1x64xf32> to vector<32x64xf32>
    %44 = arith.addf %41, %43 : vector<32x64xf32>
    %cst_18 = arith.constant 0.000000e+00 : f32
    %45 = vector.broadcast %cst_18 : f32 to vector<32x64xf32>
    %46 = arith.maximumf %44, %45 : vector<32x64xf32>
    %c0_19 = arith.constant 0 : index
    %c0_20 = arith.constant 0 : index
    %47 = vector.load %arg5[%c0_19, %c0_20] : memref<64x32xf32, #tpu.memory_space<vmem>>, vector<64x32xf32>
    %cst_21 = arith.constant dense<0.000000e+00> : vector<32x32xf32>
    %48 = tpu.matmul %46, %47, %cst_21 {dimension_numbers = #tpu.dot_dimension_numbers<[1], [0], [0], [1], [0, 0, 1, 1], [], []>} : vector<32x64xf32>, vector<64x32xf32>, vector<32x32xf32> -> vector<32x32xf32>
    %c0_22 = arith.constant 0 : index
    %c0_23 = arith.constant 0 : index
    %49 = vector.load %arg6[%c0_22, %c0_23] : memref<1x32xf32, #tpu.memory_space<vmem>>, vector<1x32xf32>
    %50 = vector.broadcast %49 : vector<1x32xf32> to vector<32x32xf32>
    %51 = arith.addf %48, %50 : vector<32x32xf32>
    %c0_24 = arith.constant 0 : index
    %c0_25 = arith.constant 0 : index
    %52 = vector.load %arg7[%c0_24, %c0_25] : memref<32x32xf32, #tpu.memory_space<vmem>>, vector<32x32xf32>
    tpu.vector_store %arg7[%c0_24, %c0_25], %51 {strides = array<i32>} : memref<32x32xf32, #tpu.memory_space<vmem>>, vector<32x32xf32>,
    return
  }
}

module attributes {stable_mosaic.version = 11 : i64} {
  func.func @_compose_head_kernel(%arg0: memref<32x32xf32, #tpu.memory_space<vmem>>, %arg1: memref<32x256xf32, #tpu.memory_space<vmem>>, %arg2: memref<32x256xf32, #tpu.memory_space<vmem>>, %arg3: memref<64x256xf32, #tpu.memory_space<vmem>>, %arg4: memref<1x256xf32, #tpu.memory_space<vmem>>, %arg5: memref<256x64xf32, #tpu.memory_space<vmem>>, %arg6: memref<1x64xf32, #tpu.memory_space<vmem>>, %arg7: memref<64x32xf32, #tpu.memory_space<vmem>>, %arg8: memref<1x32xf32, #tpu.memory_space<vmem>>, %arg9: memref<32x4xf32, #tpu.memory_space<vmem>>, %arg10: memref<1x4xf32, #tpu.memory_space<vmem>>, %arg11: memref<4x3xf32, #tpu.memory_space<vmem>>, %arg12: memref<1x3xf32, #tpu.memory_space<vmem>>, %arg13: memref<2x3xf32, #tpu.memory_space<vmem>>) attributes {dimension_semantics = [], scalar_prefetch = 0 : i64, scratch_operands = 0 : i64, tpu.core_type = #tpu.core_type<tc>} {
    %c0 = arith.constant 0 : index
    %c0_0 = arith.constant 0 : index
    %0 = vector.load %arg0[%c0, %c0_0] : memref<32x32xf32, #tpu.memory_space<vmem>>, vector<32x32xf32>
    %c0_1 = arith.constant 0 : index
    %c0_2 = arith.constant 0 : index
    %1 = vector.load %arg1[%c0_1, %c0_2] : memref<32x256xf32, #tpu.memory_space<vmem>>, vector<32x256xf32>
    %c0_3 = arith.constant 0 : index
    %c0_4 = arith.constant 0 : index
    %2 = vector.load %arg2[%c0_3, %c0_4] : memref<32x256xf32, #tpu.memory_space<vmem>>, vector<32x256xf32>
    %c0_5 = arith.constant 0 : index
    %c0_6 = arith.constant 0 : index
    %3 = vector.load %arg3[%c0_5, %c0_6] : memref<64x256xf32, #tpu.memory_space<vmem>>, vector<64x256xf32>
    %c0_7 = arith.constant 0 : index
    %c0_8 = arith.constant 0 : index
    %4 = vector.load %arg4[%c0_7, %c0_8] : memref<1x256xf32, #tpu.memory_space<vmem>>, vector<1x256xf32>
    %cst = arith.constant dense<0.000000e+00> : vector<32x256xf32>
    %5 = tpu.matmul %0, %1, %cst {dimension_numbers = #tpu.dot_dimension_numbers<[1], [0], [0], [1], [0, 0, 1, 1], [], []>} : vector<32x32xf32>, vector<32x256xf32>, vector<32x256xf32> -> vector<32x256xf32>
    %6 = vector.broadcast %4 : vector<1x256xf32> to vector<32x256xf32>
    %7 = arith.addf %5, %6 : vector<32x256xf32>
    %cst_9 = arith.constant dense<0.000000e+00> : vector<32x256xf32>
    %8 = tpu.matmul %0, %2, %cst_9 {dimension_numbers = #tpu.dot_dimension_numbers<[1], [0], [0], [1], [0, 0, 1, 1], [], []>} : vector<32x32xf32>, vector<32x256xf32>, vector<32x256xf32> -> vector<32x256xf32>
    %cst_10 = arith.constant 0.000000e+00 : f32
    %9 = vector.broadcast %cst_10 : f32 to vector<4x64xf32>
    %cst_11 = arith.constant 0.000000e+00 : f32
    %10 = vector.broadcast %cst_11 : f32 to vector<4x64xf32>
    %11 = vector.extract_strided_slice %7 {offsets = [0, 0], sizes = [4, 256], strides = [1, 1]} : vector<32x256xf32> to vector<4x256xf32>
    %12 = vector.extract_strided_slice %8 {offsets = [28, 0], sizes = [4, 256], strides = [1, 1]} : vector<32x256xf32> to vector<4x256xf32>
    %13 = arith.addf %11, %12 : vector<4x256xf32>
    %cst_12 = arith.constant dense<0.000000e+00> : vector<4x256xf32>
    %14 = tpu.matmul %9, %3, %cst_12 {dimension_numbers = #tpu.dot_dimension_numbers<[1], [0], [0], [1], [0, 0, 1, 1], [], []>} : vector<4x64xf32>, vector<64x256xf32>, vector<4x256xf32> -> vector<4x256xf32>
    %15 = arith.addf %13, %14 : vector<4x256xf32>
    %16 = vector.extract_strided_slice %15 {offsets = [0, 0], sizes = [4, 64], strides = [1, 1]} : vector<4x256xf32> to vector<4x64xf32>
    %cst_13 = arith.constant 0.000000e+00 : f32
    %17 = vector.broadcast %cst_13 : f32 to vector<4x64xf32>
    %18 = arith.subf %17, %16 : vector<4x64xf32>
    %19 = math.exp %18 : vector<4x64xf32>
    %cst_14 = arith.constant 1.000000e+00 : f32
    %20 = vector.broadcast %cst_14 : f32 to vector<4x64xf32>
    %21 = arith.addf %20, %19 : vector<4x64xf32>
    %22 = tpu.reciprocal %21 {approx = true} : vector<4x64xf32> -> vector<4x64xf32>
    %23 = vector.extract_strided_slice %15 {offsets = [0, 64], sizes = [4, 64], strides = [1, 1]} : vector<4x256xf32> to vector<4x64xf32>
    %cst_15 = arith.constant 0.000000e+00 : f32
    %24 = vector.broadcast %cst_15 : f32 to vector<4x64xf32>
    %25 = arith.subf %24, %23 : vector<4x64xf32>
    %26 = math.exp %25 : vector<4x64xf32>
    %cst_16 = arith.constant 1.000000e+00 : f32
    %27 = vector.broadcast %cst_16 : f32 to vector<4x64xf32>
    %28 = arith.addf %27, %26 : vector<4x64xf32>
    %29 = tpu.reciprocal %28 {approx = true} : vector<4x64xf32> -> vector<4x64xf32>
    %30 = vector.extract_strided_slice %15 {offsets = [0, 128], sizes = [4, 64], strides = [1, 1]} : vector<4x256xf32> to vector<4x64xf32>
    %31 = math.tanh %30 : vector<4x64xf32>
    %32 = vector.extract_strided_slice %15 {offsets = [0, 192], sizes = [4, 64], strides = [1, 1]} : vector<4x256xf32> to vector<4x64xf32>
    %cst_17 = arith.constant 0.000000e+00 : f32
    %33 = vector.broadcast %cst_17 : f32 to vector<4x64xf32>
    %34 = arith.subf %33, %32 : vector<4x64xf32>
    %35 = math.exp %34 : vector<4x64xf32>
    %cst_18 = arith.constant 1.000000e+00 : f32
    %36 = vector.broadcast %cst_18 : f32 to vector<4x64xf32>
    %37 = arith.addf %36, %35 : vector<4x64xf32>
    %38 = tpu.reciprocal %37 {approx = true} : vector<4x64xf32> -> vector<4x64xf32>
    %39 = arith.mulf %29, %10 : vector<4x64xf32>
    %40 = arith.mulf %22, %31 : vector<4x64xf32>
    %41 = arith.addf %39, %40 : vector<4x64xf32>
    %42 = math.tanh %41 : vector<4x64xf32>
    %43 = arith.mulf %38, %42 : vector<4x64xf32>
    %44 = vector.extract_strided_slice %7 {offsets = [4, 0], sizes = [4, 256], strides = [1, 1]} : vector<32x256xf32> to vector<4x256xf32>
    %45 = vector.extract_strided_slice %8 {offsets = [24, 0], sizes = [4, 256], strides = [1, 1]} : vector<32x256xf32> to vector<4x256xf32>
    %46 = arith.addf %44, %45 : vector<4x256xf32>
    %cst_19 = arith.constant dense<0.000000e+00> : vector<4x256xf32>
    %47 = tpu.matmul %43, %3, %cst_19 {dimension_numbers = #tpu.dot_dimension_numbers<[1], [0], [0], [1], [0, 0, 1, 1], [], []>} : vector<4x64xf32>, vector<64x256xf32>, vector<4x256xf32> -> vector<4x256xf32>
    %48 = arith.addf %46, %47 : vector<4x256xf32>
    %49 = vector.extract_strided_slice %48 {offsets = [0, 0], sizes = [4, 64], strides = [1, 1]} : vector<4x256xf32> to vector<4x64xf32>
    %cst_20 = arith.constant 0.000000e+00 : f32
    %50 = vector.broadcast %cst_20 : f32 to vector<4x64xf32>
    %51 = arith.subf %50, %49 : vector<4x64xf32>
    %52 = math.exp %51 : vector<4x64xf32>
    %cst_21 = arith.constant 1.000000e+00 : f32
    %53 = vector.broadcast %cst_21 : f32 to vector<4x64xf32>
    %54 = arith.addf %53, %52 : vector<4x64xf32>
    %55 = tpu.reciprocal %54 {approx = true} : vector<4x64xf32> -> vector<4x64xf32>
    %56 = vector.extract_strided_slice %48 {offsets = [0, 64], sizes = [4, 64], strides = [1, 1]} : vector<4x256xf32> to vector<4x64xf32>
    %cst_22 = arith.constant 0.000000e+00 : f32
    %57 = vector.broadcast %cst_22 : f32 to vector<4x64xf32>
    %58 = arith.subf %57, %56 : vector<4x64xf32>
    %59 = math.exp %58 : vector<4x64xf32>
    %cst_23 = arith.constant 1.000000e+00 : f32
    %60 = vector.broadcast %cst_23 : f32 to vector<4x64xf32>
    %61 = arith.addf %60, %59 : vector<4x64xf32>
    %62 = tpu.reciprocal %61 {approx = true} : vector<4x64xf32> -> vector<4x64xf32>
    %63 = vector.extract_strided_slice %48 {offsets = [0, 128], sizes = [4, 64], strides = [1, 1]} : vector<4x256xf32> to vector<4x64xf32>
    %64 = math.tanh %63 : vector<4x64xf32>
    %65 = vector.extract_strided_slice %48 {offsets = [0, 192], sizes = [4, 64], strides = [1, 1]} : vector<4x256xf32> to vector<4x64xf32>
    %cst_24 = arith.constant 0.000000e+00 : f32
    %66 = vector.broadcast %cst_24 : f32 to vector<4x64xf32>
    %67 = arith.subf %66, %65 : vector<4x64xf32>
    %68 = math.exp %67 : vector<4x64xf32>
    %cst_25 = arith.constant 1.000000e+00 : f32
    %69 = vector.broadcast %cst_25 : f32 to vector<4x64xf32>
    %70 = arith.addf %69, %68 : vector<4x64xf32>
    %71 = tpu.reciprocal %70 {approx = true} : vector<4x64xf32> -> vector<4x64xf32>
    %72 = arith.mulf %62, %41 : vector<4x64xf32>
    %73 = arith.mulf %55, %64 : vector<4x64xf32>
    %74 = arith.addf %72, %73 : vector<4x64xf32>
    %75 = math.tanh %74 : vector<4x64xf32>
    %76 = arith.mulf %71, %75 : vector<4x64xf32>
    %77 = vector.extract_strided_slice %7 {offsets = [8, 0], sizes = [4, 256], strides = [1, 1]} : vector<32x256xf32> to vector<4x256xf32>
    %78 = vector.extract_strided_slice %8 {offsets = [20, 0], sizes = [4, 256], strides = [1, 1]} : vector<32x256xf32> to vector<4x256xf32>
    %79 = arith.addf %77, %78 : vector<4x256xf32>
    %cst_26 = arith.constant dense<0.000000e+00> : vector<4x256xf32>
    %80 = tpu.matmul %76, %3, %cst_26 {dimension_numbers = #tpu.dot_dimension_numbers<[1], [0], [0], [1], [0, 0, 1, 1], [], []>} : vector<4x64xf32>, vector<64x256xf32>, vector<4x256xf32> -> vector<4x256xf32>
    %81 = arith.addf %79, %80 : vector<4x256xf32>
    %82 = vector.extract_strided_slice %81 {offsets = [0, 0], sizes = [4, 64], strides = [1, 1]} : vector<4x256xf32> to vector<4x64xf32>
    %cst_27 = arith.constant 0.000000e+00 : f32
    %83 = vector.broadcast %cst_27 : f32 to vector<4x64xf32>
    %84 = arith.subf %83, %82 : vector<4x64xf32>
    %85 = math.exp %84 : vector<4x64xf32>
    %cst_28 = arith.constant 1.000000e+00 : f32
    %86 = vector.broadcast %cst_28 : f32 to vector<4x64xf32>
    %87 = arith.addf %86, %85 : vector<4x64xf32>
    %88 = tpu.reciprocal %87 {approx = true} : vector<4x64xf32> -> vector<4x64xf32>
    %89 = vector.extract_strided_slice %81 {offsets = [0, 64], sizes = [4, 64], strides = [1, 1]} : vector<4x256xf32> to vector<4x64xf32>
    %cst_29 = arith.constant 0.000000e+00 : f32
    %90 = vector.broadcast %cst_29 : f32 to vector<4x64xf32>
    %91 = arith.subf %90, %89 : vector<4x64xf32>
    %92 = math.exp %91 : vector<4x64xf32>
    %cst_30 = arith.constant 1.000000e+00 : f32
    %93 = vector.broadcast %cst_30 : f32 to vector<4x64xf32>
    %94 = arith.addf %93, %92 : vector<4x64xf32>
    %95 = tpu.reciprocal %94 {approx = true} : vector<4x64xf32> -> vector<4x64xf32>
    %96 = vector.extract_strided_slice %81 {offsets = [0, 128], sizes = [4, 64], strides = [1, 1]} : vector<4x256xf32> to vector<4x64xf32>
    %97 = math.tanh %96 : vector<4x64xf32>
    %98 = vector.extract_strided_slice %81 {offsets = [0, 192], sizes = [4, 64], strides = [1, 1]} : vector<4x256xf32> to vector<4x64xf32>
    %cst_31 = arith.constant 0.000000e+00 : f32
    %99 = vector.broadcast %cst_31 : f32 to vector<4x64xf32>
    %100 = arith.subf %99, %98 : vector<4x64xf32>
    %101 = math.exp %100 : vector<4x64xf32>
    %cst_32 = arith.constant 1.000000e+00 : f32
    %102 = vector.broadcast %cst_32 : f32 to vector<4x64xf32>
    %103 = arith.addf %102, %101 : vector<4x64xf32>
    %104 = tpu.reciprocal %103 {approx = true} : vector<4x64xf32> -> vector<4x64xf32>
    %105 = arith.mulf %95, %74 : vector<4x64xf32>
    %106 = arith.mulf %88, %97 : vector<4x64xf32>
    %107 = arith.addf %105, %106 : vector<4x64xf32>
    %108 = math.tanh %107 : vector<4x64xf32>
    %109 = arith.mulf %104, %108 : vector<4x64xf32>
    %110 = vector.extract_strided_slice %7 {offsets = [12, 0], sizes = [4, 256], strides = [1, 1]} : vector<32x256xf32> to vector<4x256xf32>
    %111 = vector.extract_strided_slice %8 {offsets = [16, 0], sizes = [4, 256], strides = [1, 1]} : vector<32x256xf32> to vector<4x256xf32>
    %112 = arith.addf %110, %111 : vector<4x256xf32>
    %cst_33 = arith.constant dense<0.000000e+00> : vector<4x256xf32>
    %113 = tpu.matmul %109, %3, %cst_33 {dimension_numbers = #tpu.dot_dimension_numbers<[1], [0], [0], [1], [0, 0, 1, 1], [], []>} : vector<4x64xf32>, vector<64x256xf32>, vector<4x256xf32> -> vector<4x256xf32>
    %114 = arith.addf %112, %113 : vector<4x256xf32>
    %115 = vector.extract_strided_slice %114 {offsets = [0, 0], sizes = [4, 64], strides = [1, 1]} : vector<4x256xf32> to vector<4x64xf32>
    %cst_34 = arith.constant 0.000000e+00 : f32
    %116 = vector.broadcast %cst_34 : f32 to vector<4x64xf32>
    %117 = arith.subf %116, %115 : vector<4x64xf32>
    %118 = math.exp %117 : vector<4x64xf32>
    %cst_35 = arith.constant 1.000000e+00 : f32
    %119 = vector.broadcast %cst_35 : f32 to vector<4x64xf32>
    %120 = arith.addf %119, %118 : vector<4x64xf32>
    %121 = tpu.reciprocal %120 {approx = true} : vector<4x64xf32> -> vector<4x64xf32>
    %122 = vector.extract_strided_slice %114 {offsets = [0, 64], sizes = [4, 64], strides = [1, 1]} : vector<4x256xf32> to vector<4x64xf32>
    %cst_36 = arith.constant 0.000000e+00 : f32
    %123 = vector.broadcast %cst_36 : f32 to vector<4x64xf32>
    %124 = arith.subf %123, %122 : vector<4x64xf32>
    %125 = math.exp %124 : vector<4x64xf32>
    %cst_37 = arith.constant 1.000000e+00 : f32
    %126 = vector.broadcast %cst_37 : f32 to vector<4x64xf32>
    %127 = arith.addf %126, %125 : vector<4x64xf32>
    %128 = tpu.reciprocal %127 {approx = true} : vector<4x64xf32> -> vector<4x64xf32>
    %129 = vector.extract_strided_slice %114 {offsets = [0, 128], sizes = [4, 64], strides = [1, 1]} : vector<4x256xf32> to vector<4x64xf32>
    %130 = math.tanh %129 : vector<4x64xf32>
    %131 = vector.extract_strided_slice %114 {offsets = [0, 192], sizes = [4, 64], strides = [1, 1]} : vector<4x256xf32> to vector<4x64xf32>
    %cst_38 = arith.constant 0.000000e+00 : f32
    %132 = vector.broadcast %cst_38 : f32 to vector<4x64xf32>
    %133 = arith.subf %132, %131 : vector<4x64xf32>
    %134 = math.exp %133 : vector<4x64xf32>
    %cst_39 = arith.constant 1.000000e+00 : f32
    %135 = vector.broadcast %cst_39 : f32 to vector<4x64xf32>
    %136 = arith.addf %135, %134 : vector<4x64xf32>
    %137 = tpu.reciprocal %136 {approx = true} : vector<4x64xf32> -> vector<4x64xf32>
    %138 = arith.mulf %128, %107 : vector<4x64xf32>
    %139 = arith.mulf %121, %130 : vector<4x64xf32>
    %140 = arith.addf %138, %139 : vector<4x64xf32>
    %141 = math.tanh %140 : vector<4x64xf32>
    %142 = arith.mulf %137, %141 : vector<4x64xf32>
    %143 = vector.extract_strided_slice %7 {offsets = [16, 0], sizes = [4, 256], strides = [1, 1]} : vector<32x256xf32> to vector<4x256xf32>
    %144 = vector.extract_strided_slice %8 {offsets = [12, 0], sizes = [4, 256], strides = [1, 1]} : vector<32x256xf32> to vector<4x256xf32>
    %145 = arith.addf %143, %144 : vector<4x256xf32>
    %cst_40 = arith.constant dense<0.000000e+00> : vector<4x256xf32>
    %146 = tpu.matmul %142, %3, %cst_40 {dimension_numbers = #tpu.dot_dimension_numbers<[1], [0], [0], [1], [0, 0, 1, 1], [], []>} : vector<4x64xf32>, vector<64x256xf32>, vector<4x256xf32> -> vector<4x256xf32>
    %147 = arith.addf %145, %146 : vector<4x256xf32>
    %148 = vector.extract_strided_slice %147 {offsets = [0, 0], sizes = [4, 64], strides = [1, 1]} : vector<4x256xf32> to vector<4x64xf32>
    %cst_41 = arith.constant 0.000000e+00 : f32
    %149 = vector.broadcast %cst_41 : f32 to vector<4x64xf32>
    %150 = arith.subf %149, %148 : vector<4x64xf32>
    %151 = math.exp %150 : vector<4x64xf32>
    %cst_42 = arith.constant 1.000000e+00 : f32
    %152 = vector.broadcast %cst_42 : f32 to vector<4x64xf32>
    %153 = arith.addf %152, %151 : vector<4x64xf32>
    %154 = tpu.reciprocal %153 {approx = true} : vector<4x64xf32> -> vector<4x64xf32>
    %155 = vector.extract_strided_slice %147 {offsets = [0, 64], sizes = [4, 64], strides = [1, 1]} : vector<4x256xf32> to vector<4x64xf32>
    %cst_43 = arith.constant 0.000000e+00 : f32
    %156 = vector.broadcast %cst_43 : f32 to vector<4x64xf32>
    %157 = arith.subf %156, %155 : vector<4x64xf32>
    %158 = math.exp %157 : vector<4x64xf32>
    %cst_44 = arith.constant 1.000000e+00 : f32
    %159 = vector.broadcast %cst_44 : f32 to vector<4x64xf32>
    %160 = arith.addf %159, %158 : vector<4x64xf32>
    %161 = tpu.reciprocal %160 {approx = true} : vector<4x64xf32> -> vector<4x64xf32>
    %162 = vector.extract_strided_slice %147 {offsets = [0, 128], sizes = [4, 64], strides = [1, 1]} : vector<4x256xf32> to vector<4x64xf32>
    %163 = math.tanh %162 : vector<4x64xf32>
    %164 = vector.extract_strided_slice %147 {offsets = [0, 192], sizes = [4, 64], strides = [1, 1]} : vector<4x256xf32> to vector<4x64xf32>
    %cst_45 = arith.constant 0.000000e+00 : f32
    %165 = vector.broadcast %cst_45 : f32 to vector<4x64xf32>
    %166 = arith.subf %165, %164 : vector<4x64xf32>
    %167 = math.exp %166 : vector<4x64xf32>
    %cst_46 = arith.constant 1.000000e+00 : f32
    %168 = vector.broadcast %cst_46 : f32 to vector<4x64xf32>
    %169 = arith.addf %168, %167 : vector<4x64xf32>
    %170 = tpu.reciprocal %169 {approx = true} : vector<4x64xf32> -> vector<4x64xf32>
    %171 = arith.mulf %161, %140 : vector<4x64xf32>
    %172 = arith.mulf %154, %163 : vector<4x64xf32>
    %173 = arith.addf %171, %172 : vector<4x64xf32>
    %174 = math.tanh %173 : vector<4x64xf32>
    %175 = arith.mulf %170, %174 : vector<4x64xf32>
    %176 = vector.extract_strided_slice %7 {offsets = [20, 0], sizes = [4, 256], strides = [1, 1]} : vector<32x256xf32> to vector<4x256xf32>
    %177 = vector.extract_strided_slice %8 {offsets = [8, 0], sizes = [4, 256], strides = [1, 1]} : vector<32x256xf32> to vector<4x256xf32>
    %178 = arith.addf %176, %177 : vector<4x256xf32>
    %cst_47 = arith.constant dense<0.000000e+00> : vector<4x256xf32>
    %179 = tpu.matmul %175, %3, %cst_47 {dimension_numbers = #tpu.dot_dimension_numbers<[1], [0], [0], [1], [0, 0, 1, 1], [], []>} : vector<4x64xf32>, vector<64x256xf32>, vector<4x256xf32> -> vector<4x256xf32>
    %180 = arith.addf %178, %179 : vector<4x256xf32>
    %181 = vector.extract_strided_slice %180 {offsets = [0, 0], sizes = [4, 64], strides = [1, 1]} : vector<4x256xf32> to vector<4x64xf32>
    %cst_48 = arith.constant 0.000000e+00 : f32
    %182 = vector.broadcast %cst_48 : f32 to vector<4x64xf32>
    %183 = arith.subf %182, %181 : vector<4x64xf32>
    %184 = math.exp %183 : vector<4x64xf32>
    %cst_49 = arith.constant 1.000000e+00 : f32
    %185 = vector.broadcast %cst_49 : f32 to vector<4x64xf32>
    %186 = arith.addf %185, %184 : vector<4x64xf32>
    %187 = tpu.reciprocal %186 {approx = true} : vector<4x64xf32> -> vector<4x64xf32>
    %188 = vector.extract_strided_slice %180 {offsets = [0, 64], sizes = [4, 64], strides = [1, 1]} : vector<4x256xf32> to vector<4x64xf32>
    %cst_50 = arith.constant 0.000000e+00 : f32
    %189 = vector.broadcast %cst_50 : f32 to vector<4x64xf32>
    %190 = arith.subf %189, %188 : vector<4x64xf32>
    %191 = math.exp %190 : vector<4x64xf32>
    %cst_51 = arith.constant 1.000000e+00 : f32
    %192 = vector.broadcast %cst_51 : f32 to vector<4x64xf32>
    %193 = arith.addf %192, %191 : vector<4x64xf32>
    %194 = tpu.reciprocal %193 {approx = true} : vector<4x64xf32> -> vector<4x64xf32>
    %195 = vector.extract_strided_slice %180 {offsets = [0, 128], sizes = [4, 64], strides = [1, 1]} : vector<4x256xf32> to vector<4x64xf32>
    %196 = math.tanh %195 : vector<4x64xf32>
    %197 = vector.extract_strided_slice %180 {offsets = [0, 192], sizes = [4, 64], strides = [1, 1]} : vector<4x256xf32> to vector<4x64xf32>
    %cst_52 = arith.constant 0.000000e+00 : f32
    %198 = vector.broadcast %cst_52 : f32 to vector<4x64xf32>
    %199 = arith.subf %198, %197 : vector<4x64xf32>
    %200 = math.exp %199 : vector<4x64xf32>
    %cst_53 = arith.constant 1.000000e+00 : f32
    %201 = vector.broadcast %cst_53 : f32 to vector<4x64xf32>
    %202 = arith.addf %201, %200 : vector<4x64xf32>
    %203 = tpu.reciprocal %202 {approx = true} : vector<4x64xf32> -> vector<4x64xf32>
    %204 = arith.mulf %194, %173 : vector<4x64xf32>
    %205 = arith.mulf %187, %196 : vector<4x64xf32>
    %206 = arith.addf %204, %205 : vector<4x64xf32>
    %207 = math.tanh %206 : vector<4x64xf32>
    %208 = arith.mulf %203, %207 : vector<4x64xf32>
    %209 = vector.extract_strided_slice %7 {offsets = [24, 0], sizes = [4, 256], strides = [1, 1]} : vector<32x256xf32> to vector<4x256xf32>
    %210 = vector.extract_strided_slice %8 {offsets = [4, 0], sizes = [4, 256], strides = [1, 1]} : vector<32x256xf32> to vector<4x256xf32>
    %211 = arith.addf %209, %210 : vector<4x256xf32>
    %cst_54 = arith.constant dense<0.000000e+00> : vector<4x256xf32>
    %212 = tpu.matmul %208, %3, %cst_54 {dimension_numbers = #tpu.dot_dimension_numbers<[1], [0], [0], [1], [0, 0, 1, 1], [], []>} : vector<4x64xf32>, vector<64x256xf32>, vector<4x256xf32> -> vector<4x256xf32>
    %213 = arith.addf %211, %212 : vector<4x256xf32>
    %214 = vector.extract_strided_slice %213 {offsets = [0, 0], sizes = [4, 64], strides = [1, 1]} : vector<4x256xf32> to vector<4x64xf32>
    %cst_55 = arith.constant 0.000000e+00 : f32
    %215 = vector.broadcast %cst_55 : f32 to vector<4x64xf32>
    %216 = arith.subf %215, %214 : vector<4x64xf32>
    %217 = math.exp %216 : vector<4x64xf32>
    %cst_56 = arith.constant 1.000000e+00 : f32
    %218 = vector.broadcast %cst_56 : f32 to vector<4x64xf32>
    %219 = arith.addf %218, %217 : vector<4x64xf32>
    %220 = tpu.reciprocal %219 {approx = true} : vector<4x64xf32> -> vector<4x64xf32>
    %221 = vector.extract_strided_slice %213 {offsets = [0, 64], sizes = [4, 64], strides = [1, 1]} : vector<4x256xf32> to vector<4x64xf32>
    %cst_57 = arith.constant 0.000000e+00 : f32
    %222 = vector.broadcast %cst_57 : f32 to vector<4x64xf32>
    %223 = arith.subf %222, %221 : vector<4x64xf32>
    %224 = math.exp %223 : vector<4x64xf32>
    %cst_58 = arith.constant 1.000000e+00 : f32
    %225 = vector.broadcast %cst_58 : f32 to vector<4x64xf32>
    %226 = arith.addf %225, %224 : vector<4x64xf32>
    %227 = tpu.reciprocal %226 {approx = true} : vector<4x64xf32> -> vector<4x64xf32>
    %228 = vector.extract_strided_slice %213 {offsets = [0, 128], sizes = [4, 64], strides = [1, 1]} : vector<4x256xf32> to vector<4x64xf32>
    %229 = math.tanh %228 : vector<4x64xf32>
    %230 = vector.extract_strided_slice %213 {offsets = [0, 192], sizes = [4, 64], strides = [1, 1]} : vector<4x256xf32> to vector<4x64xf32>
    %cst_59 = arith.constant 0.000000e+00 : f32
    %231 = vector.broadcast %cst_59 : f32 to vector<4x64xf32>
    %232 = arith.subf %231, %230 : vector<4x64xf32>
    %233 = math.exp %232 : vector<4x64xf32>
    %cst_60 = arith.constant 1.000000e+00 : f32
    %234 = vector.broadcast %cst_60 : f32 to vector<4x64xf32>
    %235 = arith.addf %234, %233 : vector<4x64xf32>
    %236 = tpu.reciprocal %235 {approx = true} : vector<4x64xf32> -> vector<4x64xf32>
    %237 = arith.mulf %227, %206 : vector<4x64xf32>
    %238 = arith.mulf %220, %229 : vector<4x64xf32>
    %239 = arith.addf %237, %238 : vector<4x64xf32>
    %240 = math.tanh %239 : vector<4x64xf32>
    %241 = arith.mulf %236, %240 : vector<4x64xf32>
    %242 = vector.extract_strided_slice %7 {offsets = [28, 0], sizes = [4, 256], strides = [1, 1]} : vector<32x256xf32> to vector<4x256xf32>
    %243 = vector.extract_strided_slice %8 {offsets = [0, 0], sizes = [4, 256], strides = [1, 1]} : vector<32x256xf32> to vector<4x256xf32>
    %244 = arith.addf %242, %243 : vector<4x256xf32>
    %cst_61 = arith.constant dense<0.000000e+00> : vector<4x256xf32>
    %245 = tpu.matmul %241, %3, %cst_61 {dimension_numbers = #tpu.dot_dimension_numbers<[1], [0], [0], [1], [0, 0, 1, 1], [], []>} : vector<4x64xf32>, vector<64x256xf32>, vector<4x256xf32> -> vector<4x256xf32>
    %246 = arith.addf %244, %245 : vector<4x256xf32>
    %247 = vector.extract_strided_slice %246 {offsets = [0, 0], sizes = [4, 64], strides = [1, 1]} : vector<4x256xf32> to vector<4x64xf32>
    %cst_62 = arith.constant 0.000000e+00 : f32
    %248 = vector.broadcast %cst_62 : f32 to vector<4x64xf32>
    %249 = arith.subf %248, %247 : vector<4x64xf32>
    %250 = math.exp %249 : vector<4x64xf32>
    %cst_63 = arith.constant 1.000000e+00 : f32
    %251 = vector.broadcast %cst_63 : f32 to vector<4x64xf32>
    %252 = arith.addf %251, %250 : vector<4x64xf32>
    %253 = tpu.reciprocal %252 {approx = true} : vector<4x64xf32> -> vector<4x64xf32>
    %254 = vector.extract_strided_slice %246 {offsets = [0, 64], sizes = [4, 64], strides = [1, 1]} : vector<4x256xf32> to vector<4x64xf32>
    %cst_64 = arith.constant 0.000000e+00 : f32
    %255 = vector.broadcast %cst_64 : f32 to vector<4x64xf32>
    %256 = arith.subf %255, %254 : vector<4x64xf32>
    %257 = math.exp %256 : vector<4x64xf32>
    %cst_65 = arith.constant 1.000000e+00 : f32
    %258 = vector.broadcast %cst_65 : f32 to vector<4x64xf32>
    %259 = arith.addf %258, %257 : vector<4x64xf32>
    %260 = tpu.reciprocal %259 {approx = true} : vector<4x64xf32> -> vector<4x64xf32>
    %261 = vector.extract_strided_slice %246 {offsets = [0, 128], sizes = [4, 64], strides = [1, 1]} : vector<4x256xf32> to vector<4x64xf32>
    %262 = math.tanh %261 : vector<4x64xf32>
    %263 = vector.extract_strided_slice %246 {offsets = [0, 192], sizes = [4, 64], strides = [1, 1]} : vector<4x256xf32> to vector<4x64xf32>
    %cst_66 = arith.constant 0.000000e+00 : f32
    %264 = vector.broadcast %cst_66 : f32 to vector<4x64xf32>
    %265 = arith.subf %264, %263 : vector<4x64xf32>
    %266 = math.exp %265 : vector<4x64xf32>
    %cst_67 = arith.constant 1.000000e+00 : f32
    %267 = vector.broadcast %cst_67 : f32 to vector<4x64xf32>
    %268 = arith.addf %267, %266 : vector<4x64xf32>
    %269 = tpu.reciprocal %268 {approx = true} : vector<4x64xf32> -> vector<4x64xf32>
    %270 = arith.mulf %260, %239 : vector<4x64xf32>
    %271 = arith.mulf %253, %262 : vector<4x64xf32>
    %272 = arith.addf %270, %271 : vector<4x64xf32>
    %273 = math.tanh %272 : vector<4x64xf32>
    %274 = arith.mulf %269, %273 : vector<4x64xf32>
    %275 = arith.addf %43, %76 : vector<4x64xf32>
    %276 = arith.maximumf %43, %76 : vector<4x64xf32>
    %277 = arith.addf %275, %109 : vector<4x64xf32>
    %278 = arith.maximumf %276, %109 : vector<4x64xf32>
    %279 = arith.addf %277, %142 : vector<4x64xf32>
    %280 = arith.maximumf %278, %142 : vector<4x64xf32>
    %281 = arith.addf %279, %175 : vector<4x64xf32>
    %282 = arith.maximumf %280, %175 : vector<4x64xf32>
    %283 = arith.addf %281, %208 : vector<4x64xf32>
    %284 = arith.maximumf %282, %208 : vector<4x64xf32>
    %285 = arith.addf %283, %241 : vector<4x64xf32>
    %286 = arith.maximumf %284, %241 : vector<4x64xf32>
    %287 = arith.addf %285, %274 : vector<4x64xf32>
    %288 = arith.maximumf %286, %274 : vector<4x64xf32>
    %cst_68 = arith.constant 1.250000e-01 : f32
    %289 = vector.broadcast %cst_68 : f32 to vector<4x64xf32>
    %290 = arith.mulf %287, %289 : vector<4x64xf32>
    %291 = tpu.concatenate %290, %288 in 1 : vector<4x64xf32>, vector<4x64xf32> -> vector<4x128xf32>
    %292 = vector.extract_strided_slice %291 {offsets = [0, 0], sizes = [2, 128], strides = [1, 1]} : vector<4x128xf32> to vector<2x128xf32>
    %293 = vector.extract_strided_slice %291 {offsets = [2, 0], sizes = [2, 128], strides = [1, 1]} : vector<4x128xf32> to vector<2x128xf32>
    %294 = tpu.concatenate %292, %293 in 1 : vector<2x128xf32>, vector<2x128xf32> -> vector<2x256xf32>
    %c0_69 = arith.constant 0 : index
    %c0_70 = arith.constant 0 : index
    %295 = vector.load %arg5[%c0_69, %c0_70] : memref<256x64xf32, #tpu.memory_space<vmem>>, vector<256x64xf32>
    %cst_71 = arith.constant dense<0.000000e+00> : vector<2x64xf32>
    %296 = tpu.matmul %294, %295, %cst_71 {dimension_numbers = #tpu.dot_dimension_numbers<[1], [0], [0], [1], [0, 0, 1, 1], [], []>} : vector<2x256xf32>, vector<256x64xf32>, vector<2x64xf32> -> vector<2x64xf32>
    %c0_72 = arith.constant 0 : index
    %c0_73 = arith.constant 0 : index
    %297 = vector.load %arg6[%c0_72, %c0_73] : memref<1x64xf32, #tpu.memory_space<vmem>>, vector<1x64xf32>
    %298 = vector.broadcast %297 : vector<1x64xf32> to vector<2x64xf32>
    %299 = arith.addf %296, %298 : vector<2x64xf32>
    %cst_74 = arith.constant 0.000000e+00 : f32
    %300 = vector.broadcast %cst_74 : f32 to vector<2x64xf32>
    %301 = arith.maximumf %299, %300 : vector<2x64xf32>
    %c0_75 = arith.constant 0 : index
    %c0_76 = arith.constant 0 : index
    %302 = vector.load %arg7[%c0_75, %c0_76] : memref<64x32xf32, #tpu.memory_space<vmem>>, vector<64x32xf32>
    %cst_77 = arith.constant dense<0.000000e+00> : vector<2x32xf32>
    %303 = tpu.matmul %301, %302, %cst_77 {dimension_numbers = #tpu.dot_dimension_numbers<[1], [0], [0], [1], [0, 0, 1, 1], [], []>} : vector<2x64xf32>, vector<64x32xf32>, vector<2x32xf32> -> vector<2x32xf32>
    %c0_78 = arith.constant 0 : index
    %c0_79 = arith.constant 0 : index
    %304 = vector.load %arg8[%c0_78, %c0_79] : memref<1x32xf32, #tpu.memory_space<vmem>>, vector<1x32xf32>
    %305 = vector.broadcast %304 : vector<1x32xf32> to vector<2x32xf32>
    %306 = arith.addf %303, %305 : vector<2x32xf32>
    %307 = math.tanh %306 : vector<2x32xf32>
    %c0_80 = arith.constant 0 : index
    %c0_81 = arith.constant 0 : index
    %308 = vector.load %arg9[%c0_80, %c0_81] : memref<32x4xf32, #tpu.memory_space<vmem>>, vector<32x4xf32>
    %cst_82 = arith.constant dense<0.000000e+00> : vector<2x4xf32>
    %309 = tpu.matmul %307, %308, %cst_82 {dimension_numbers = #tpu.dot_dimension_numbers<[1], [0], [0], [1], [0, 0, 1, 1], [], []>} : vector<2x32xf32>, vector<32x4xf32>, vector<2x4xf32> -> vector<2x4xf32>
    %c0_83 = arith.constant 0 : index
    %c0_84 = arith.constant 0 : index
    %310 = vector.load %arg10[%c0_83, %c0_84] : memref<1x4xf32, #tpu.memory_space<vmem>>, vector<1x4xf32>
    %311 = vector.broadcast %310 : vector<1x4xf32> to vector<2x4xf32>
    %312 = arith.addf %309, %311 : vector<2x4xf32>
    %cst_85 = arith.constant 0.000000e+00 : f32
    %313 = vector.broadcast %cst_85 : f32 to vector<2x4xf32>
    %314 = arith.maximumf %312, %313 : vector<2x4xf32>
    %c0_86 = arith.constant 0 : index
    %c0_87 = arith.constant 0 : index
    %315 = vector.load %arg11[%c0_86, %c0_87] : memref<4x3xf32, #tpu.memory_space<vmem>>, vector<4x3xf32>
    %cst_88 = arith.constant dense<0.000000e+00> : vector<2x3xf32>
    %316 = tpu.matmul %314, %315, %cst_88 {dimension_numbers = #tpu.dot_dimension_numbers<[1], [0], [0], [1], [0, 0, 1, 1], [], []>} : vector<2x4xf32>, vector<4x3xf32>, vector<2x3xf32> -> vector<2x3xf32>
    %c0_89 = arith.constant 0 : index
    %c0_90 = arith.constant 0 : index
    %317 = vector.load %arg12[%c0_89, %c0_90] : memref<1x3xf32, #tpu.memory_space<vmem>>, vector<1x3xf32>
    %318 = vector.broadcast %317 : vector<1x3xf32> to vector<2x3xf32>
    %319 = arith.addf %316, %318 : vector<2x3xf32>
    %c0_91 = arith.constant 0 : index
    %c0_92 = arith.constant 0 : index
    %320 = vector.load %arg13[%c0_91, %c0_92] : memref<2x3xf32, #tpu.memory_space<vmem>>, vector<2x3xf32>
    tpu.vector_store %arg13[%c0_91, %c0_92], %319 {strides = array<i32>} : memref<2x3xf32, #tpu.memory_space<vmem>>, vector<2x3xf32>,
    return
  }
}

</mosaic_0001>

<llo_original>
// kernel: esim_forward.4
$region0: #{esim_forward.4}
  #allocation0 [shape = 'u32[]', space=smem, size = 0x4, offset = 0x4, fixed_abs, tag = 'smem constant byte address 0x4 - core index']
  #allocation1 [shape = 'u32[144,128]{1,0:T(1,128)}', space=vmem, size = 0x12000, scoped, tag = 'internal scratch']
  %s0 = inlined_call_operand.vmem [shape: f32[4,8,64], index: 0, kind: input, shape index: {}]
  %s1 = inlined_call_operand.vmem [shape: f32[2,8], index: 1, kind: input, shape index: {}]
  %s2 = inlined_call_operand.vmem [shape: f32[2,8], index: 2, kind: input, shape index: {}]
  %s3 = inlined_call_operand.vmem [shape: f32[256,64], index: 3, kind: input, shape index: {}]
  %s4 = inlined_call_operand.vmem [shape: f32[1,64], index: 4, kind: input, shape index: {}]
  %s5 = inlined_call_operand.vmem [shape: f32[64,32], index: 5, kind: input, shape index: {}]
  %s6 = inlined_call_operand.vmem [shape: f32[1,32], index: 6, kind: input, shape index: {}]
  %s7 = inlined_call_operand.vmem [shape: f32[32,32], index: 7, kind: output, shape index: {}]
  %s8 = sld [smem:[#allocation0]]
  $region38: #{esim_forward.4} parent=0
    _
  %s10 = ssub.s32 1, %s8
  %s11 = scalar_select 0, %s10, %s8
  // Predicated region
  $region2: #{esim_forward.4} parent=0 // pred_check
    _
  $region3: #{esim_forward.4} parent=0 // pred_check_branch
    %13 = sbr.rel (0) target = $region5
  $region4: #{esim_forward.4} parent=0 // pred_region
    _
  $region5: #{esim_forward.4} parent=0 // pred_fallthru
    _
  // Predicated region
  $region6: #{esim_forward.4} parent=0 // pred_check
    _
  $region7: #{esim_forward.4} parent=0 // pred_check_branch
    %15 = sbr.rel (0) target = $region9
  $region8: #{esim_forward.4} parent=0 // pred_region
    _
  $region9: #{esim_forward.4} parent=0 // pred_fallthru
    _
  // Predicated region
  $region10: #{esim_forward.4} parent=0 // pred_check
    _
  $region11: #{esim_forward.4} parent=0 // pred_check_branch
    %17 = sbr.rel (0) target = $region13
  $region12: #{esim_forward.4} parent=0 // pred_region
    _
  $region13: #{esim_forward.4} parent=0 // pred_fallthru
    _
  // Predicated region
  $region14: #{esim_forward.4} parent=0 // pred_check
    _
  $region15: #{esim_forward.4} parent=0 // pred_check_branch
    %19 = sbr.rel (0) target = $region17
  $region16: #{esim_forward.4} parent=0 // pred_region
    _
  $region17: #{esim_forward.4} parent=0 // pred_fallthru
    _
  // Predicated region
  $region18: #{esim_forward.4} parent=0 // pred_check
    _
  $region19: #{esim_forward.4} parent=0 // pred_check_branch
    %21 = sbr.rel (0) target = $region21
  $region20: #{esim_forward.4} parent=0 // pred_region
    _
  $region21: #{esim_forward.4} parent=0 // pred_fallthru
    _
  // Predicated region
  $region22: #{esim_forward.4} parent=0 // pred_check
    _
  $region23: #{esim_forward.4} parent=0 // pred_check_branch
    %23 = sbr.rel (0) target = $region25
  $region24: #{esim_forward.4} parent=0 // pred_region
    _
  $region25: #{esim_forward.4} parent=0 // pred_fallthru
    _
  // Predicated region
  $region26: #{esim_forward.4} parent=0 // pred_check
    _
  $region27: #{esim_forward.4} parent=0 // pred_check_branch
    %25 = sbr.rel (0) target = $region29
  $region28: #{esim_forward.4} parent=0 // pred_region
    _
  $region29: #{esim_forward.4} parent=0 // pred_fallthru
    _
  %v26 = vld [vmem:[%s0] sm:$0xff]
  %v27 = vld [vmem:[%s0 + $0x8] sm:$0xff]
  %v28 = vld [vmem:[%s0 + $0x10] sm:$0xff]
  %v29 = vld [vmem:[%s0 + $0x18] sm:$0xff]
  %v30 = vld [vmem:[%s1] sm:$0x3]
  %v33 = vunpack.c.l.s4 1966171168
  %v34 = vunpack.c.0.s8 %v33
  %v35 = vlaneseq
  %v36 = vshrl.u32 %v35, 7
  %v37 = vsub.s32 %v34, %v36
  %v38 = vrot.slane %v30, %v37
  %v39 = vcombine.high %v38, %v38
  %v41 = vunpack.c.l.s4 1966171168
  %v42 = vunpack.c.0.s8 %v41
  %v43 = vlaneseq
  %v44 = vshrl.u32 %v43, 7
  %v45 = vsub.s32 %v42, %v44
  %v46 = vrot.slane %v38, %v45
  %v48 = vunpack.c.l.s4 1966171168
  %v49 = vunpack.c.0.s8 %v48
  %v50 = vlaneseq
  %v51 = vshrl.u32 %v50, 7
  %v52 = vsub.s32 %v49, %v51
  %v53 = vrot.slane %v39, %v52
  %v54 = vlaneseq
  %v55 = vshrl.u32 %v54, 7
  %v56 = vsub.s32 0, %v55
  %v57 = vrot.slane %v46, %v56
  %v58 = vlaneseq
  %v59 = vshrl.u32 %v58, 7
  %v60 = vsub.s32 0, %v59
  %v61 = vrot.slane %v53, %v60
  %vm64 = vcmask 523264
  %v66 = vsel %vm64, %v26, 0
  %v69 = vsel %vm64, %v28, 0
  %71 = vmatprep.subr.mxu0 0.0
  %72 = vmatpush1.xpose.msra.mxu0 %v69
  %73 = vmatprep.subr.mxu0 0.0
  %74 = vmatpush1.xpose.msra.mxu0 0.0
  %75 = vmatprep.subr.mxu0 0.0
  %76 = vmatpush1.xpose.msra.mxu0 0.0
  %77 = vmatprep.subr.mxu0 0.0
  %78 = vmatpush1.xpose.msra.mxu0 0.0
  %79 = vmatprep.subr.mxu0 0.0
  %80 = vmatpush1.xpose.msra.mxu0 0.0
  %81 = vmatprep.subr.mxu0 0.0
  %82 = vmatpush1.xpose.msra.mxu0 0.0
  %83 = vmatprep.subr.mxu0 0.0
  %84 = vmatpush1.xpose.msra.mxu0 0.0
  %85 = vmatprep.subr.mxu0 0.0
  %86 = vmatpush1.xpose.msra.mxu0 0.0
  %87 = vmatprep.subr.mxu0 0.0
  %88 = vmatpush1.xpose.msra.mxu0 0.0
  %89 = vmatprep.subr.mxu0 0.0
  %90 = vmatpush1.xpose.msra.mxu0 0.0
  %91 = vmatprep.subr.mxu0 0.0
  %92 = vmatpush1.xpose.msra.mxu0 0.0
  %93 = vmatprep.subr.mxu0 0.0
  %94 = vmatpush1.xpose.msra.mxu0 0.0
  %95 = vmatprep.subr.mxu0 0.0
  %96 = vmatpush1.xpose.msra.mxu0 0.0
  %97 = vmatprep.subr.mxu0 0.0
  %98 = vmatpush1.xpose.msra.mxu0 0.0
  %99 = vmatprep.subr.mxu0 0.0
  %100 = vmatpush1.xpose.msra.mxu0 0.0
  %101 = vmatprep.subr.mxu0 0.0
  %102 = vmatpush1.xpose.msra.mxu0 0.0
  %103 = vmatprep.subr.mxu0 0.0
  %104 = vmatpush1.xpose.msra.mxu0 0.0
  %105 = vmatprep.subr.mxu0 0.0
  %106 = vmatpush1.xpose.msra.mxu0 0.0
  %107 = vmatprep.subr.mxu0 0.0
  %108 = vmatpush1.xpose.msra.mxu0 0.0
  %109 = vmatprep.subr.mxu0 0.0
  %110 = vmatpush1.xpose.msra.mxu0 0.0
  %111 = vmatprep.subr.mxu0 0.0
  %112 = vmatpush1.xpose.msra.mxu0 0.0
  %113 = vmatprep.subr.mxu0 0.0
  %114 = vmatpush1.xpose.msra.mxu0 0.0
  %115 = vmatprep.subr.mxu0 0.0
  %116 = vmatpush1.xpose.msra.mxu0 0.0
  %117 = vmatprep.subr.mxu0 0.0
  %118 = vmatpush1.xpose.msra.mxu0 0.0
  %119 = vmatprep.subr.mxu0 0.0
  %120 = vmatpush1.xpose.msra.mxu0 0.0
  %121 = vmatprep.subr.mxu0 0.0
  %122 = vmatpush1.xpose.msra.mxu0 0.0
  %123 = vmatprep.subr.mxu0 0.0
  %124 = vmatpush1.xpose.msra.mxu0 0.0
  %125 = vmatprep.subr.mxu0 0.0
  %126 = vmatpush1.xpose.msra.mxu0 0.0
  %127 = vmatprep.subr.mxu0 0.0
  %128 = vmatpush1.xpose.msra.mxu0 0.0
  %129 = vmatprep.subr.mxu0 0.0
  %130 = vmatpush1.xpose.msra.mxu0 0.0
  %131 = vmatprep.subr.mxu0 0.0
  %132 = vmatpush1.xpose.msra.mxu0 0.0
  %133 = vmatprep.subr.mxu0 0.0
  %134 = vmatpush1.xpose.msra.mxu0 0.0
  %135 = vmatprep.mubr.f32.mxu0 0.0
  %136 = vmatmul.mubr.f32.gmra.mrb[0].mxu0 %v66
  %v137 = vpop.f32.mrb[0].mxu0
  %v138 = vadd.f32 %v57, %v137
  %v139 = vpop.f32.mrb[0].mxu0
  %140 = vdwg.mxu0
  %v142 = vsel %vm64, %v27, 0
  %v145 = vsel %vm64, %v29, 0
  %147 = vmatprep.subr.mxu0 0.0
  %148 = vmatpush1.xpose.msra.mxu0 %v145
  %149 = vmatprep.subr.mxu0 0.0
  %150 = vmatpush1.xpose.msra.mxu0 0.0
  %151 = vmatprep.subr.mxu0 0.0
  %152 = vmatpush1.xpose.msra.mxu0 0.0
  %153 = vmatprep.subr.mxu0 0.0
  %154 = vmatpush1.xpose.msra.mxu0 0.0
  %155 = vmatprep.subr.mxu0 0.0
  %156 = vmatpush1.xpose.msra.mxu0 0.0
  %157 = vmatprep.subr.mxu0 0.0
  %158 = vmatpush1.xpose.msra.mxu0 0.0
  %159 = vmatprep.subr.mxu0 0.0
  %160 = vmatpush1.xpose.msra.mxu0 0.0
  %161 = vmatprep.subr.mxu0 0.0
  %162 = vmatpush1.xpose.msra.mxu0 0.0
  %163 = vmatprep.subr.mxu0 0.0
  %164 = vmatpush1.xpose.msra.mxu0 0.0
  %165 = vmatprep.subr.mxu0 0.0
  %166 = vmatpush1.xpose.msra.mxu0 0.0
  %167 = vmatprep.subr.mxu0 0.0
  %168 = vmatpush1.xpose.msra.mxu0 0.0
  %169 = vmatprep.subr.mxu0 0.0
  %170 = vmatpush1.xpose.msra.mxu0 0.0
  %171 = vmatprep.subr.mxu0 0.0
  %172 = vmatpush1.xpose.msra.mxu0 0.0
  %173 = vmatprep.subr.mxu0 0.0
  %174 = vmatpush1.xpose.msra.mxu0 0.0
  %175 = vmatprep.subr.mxu0 0.0
  %176 = vmatpush1.xpose.msra.mxu0 0.0
  %177 = vmatprep.subr.mxu0 0.0
  %178 = vmatpush1.xpose.msra.mxu0 0.0
  %179 = vmatprep.subr.mxu0 0.0
  %180 = vmatpush1.xpose.msra.mxu0 0.0
  %181 = vmatprep.subr.mxu0 0.0
  %182 = vmatpush1.xpose.msra.mxu0 0.0
  %183 = vmatprep.subr.mxu0 0.0
  %184 = vmatpush1.xpose.msra.mxu0 0.0
  %185 = vmatprep.subr.mxu0 0.0
  %186 = vmatpush1.xpose.msra.mxu0 0.0
  %187 = vmatprep.subr.mxu0 0.0
  %188 = vmatpush1.xpose.msra.mxu0 0.0
  %189 = vmatprep.subr.mxu0 0.0
  %190 = vmatpush1.xpose.msra.mxu0 0.0
  %191 = vmatprep.subr.mxu0 0.0
  %192 = vmatpush1.xpose.msra.mxu0 0.0
  %193 = vmatprep.subr.mxu0 0.0
  %194 = vmatpush1.xpose.msra.mxu0 0.0
  %195 = vmatprep.subr.mxu0 0.0
  %196 = vmatpush1.xpose.msra.mxu0 0.0
  %197 = vmatprep.subr.mxu0 0.0
  %198 = vmatpush1.xpose.msra.mxu0 0.0
  %199 = vmatprep.subr.mxu0 0.0
  %200 = vmatpush1.xpose.msra.mxu0 0.0
  %201 = vmatprep.subr.mxu0 0.0
  %202 = vmatpush1.xpose.msra.mxu0 0.0
  %203 = vmatprep.subr.mxu0 0.0
  %204 = vmatpush1.xpose.msra.mxu0 0.0
  %205 = vmatprep.subr.mxu0 0.0
  %206 = vmatpush1.xpose.msra.mxu0 0.0
  %207 = vmatprep.subr.mxu0 0.0
  %208 = vmatpush1.xpose.msra.mxu0 0.0
  %209 = vmatprep.subr.mxu0 0.0
  %210 = vmatpush1.xpose.msra.mxu0 0.0
  %211 = vmatprep.mubr.f32.mxu0 0.0
  %212 = vmatmul.mubr.f32.gmra.mrb[0].mxu0 %v142
  %v213 = vpop.f32.mrb[0].mxu0
  %v214 = vadd.f32 %v61, %v213
  %v215 = vpop.f32.mrb[0].mxu0
  %216 = vdwg.mxu0
  %vm217 = vcmask 64512
  %v218 = vsel %vm217, %v138, -inf
  %219 = vmax.xlane.f32.xlu0 %v218
  %v220 = vpop.xlane.xlu0 %219
  %v221 = vsel %vm217, %v214, -inf
  %222 = vmax.xlane.f32.xlu0 %v221
  %v223 = vpop.xlane.xlu0 %222
  %v224 = vsub.f32 %v138, %v220
  %v225 = vsub.f32 %v214, %v223
  %v226 = vmul.f32 %v224, 1.442695
  %v227 = vpow.pop %v226
  %v228 = vmul.f32 %v225, 1.442695
  %v229 = vpow.pop %v228
  %v230 = vsel %vm217, %v227, 0.0
  %231 = vadd.xlane.f32.xlu0 %v230
  %v232 = vpop.xlane.xlu0 %231
  %v233 = vsel %vm217, %v229, 0.0
  %234 = vadd.xlane.f32.xlu0 %v233
  %v235 = vpop.xlane.xlu0 %234
  %v236 = vrcp.pop %v232
  %v237 = vrcp.pop %v235
  %v238 = vmul.f32 %v227, %v236
  %v239 = vmul.f32 %v229, %v237
  %v240 = vld [vmem:[%s2] sm:$0x3]
  %v243 = vunpack.c.l.s4 1966171168
  %v244 = vunpack.c.0.s8 %v243
  %v245 = vlaneseq
  %v246 = vshrl.u32 %v245, 7
  %v247 = vsub.s32 %v244, %v246
  %v248 = vrot.slane %v240, %v247
  %v249 = vcombine.high %v248, %v248
  %v251 = vunpack.c.l.s4 1966171168
  %v252 = vunpack.c.0.s8 %v251
  %v253 = vlaneseq
  %v254 = vshrl.u32 %v253, 7
  %v255 = vsub.s32 %v252, %v254
  %v256 = vrot.slane %v248, %v255
  %v258 = vunpack.c.l.s4 1966171168
  %v259 = vunpack.c.0.s8 %v258
  %v260 = vlaneseq
  %v261 = vshrl.u32 %v260, 7
  %v262 = vsub.s32 %v259, %v261
  %v263 = vrot.slane %v249, %v262
  %v264 = vlaneseq
  %v265 = vshrl.u32 %v264, 7
  %v266 = vsub.s32 0, %v265
  %v267 = vrot.slane %v256, %v266
  %v268 = vlaneseq
  %v269 = vshrl.u32 %v268, 7
  %v270 = vsub.s32 0, %v269
  %v271 = vrot.slane %v263, %v270
  %274 = vmatprep.subr.mxu0 0.0
  %275 = vmatpush1.xpose.msra.mxu0 %v66
  %276 = vmatprep.subr.mxu0 0.0
  %277 = vmatpush1.xpose.msra.mxu0 0.0
  %278 = vmatprep.subr.mxu0 0.0
  %279 = vmatpush1.xpose.msra.mxu0 0.0
  %280 = vmatprep.subr.mxu0 0.0
  %281 = vmatpush1.xpose.msra.mxu0 0.0
  %282 = vmatprep.subr.mxu0 0.0
  %283 = vmatpush1.xpose.msra.mxu0 0.0
  %284 = vmatprep.subr.mxu0 0.0
  %285 = vmatpush1.xpose.msra.mxu0 0.0
  %286 = vmatprep.subr.mxu0 0.0
  %287 = vmatpush1.xpose.msra.mxu0 0.0
  %288 = vmatprep.subr.mxu0 0.0
  %289 = vmatpush1.xpose.msra.mxu0 0.0
  %290 = vmatprep.subr.mxu0 0.0
  %291 = vmatpush1.xpose.msra.mxu0 0.0
  %292 = vmatprep.subr.mxu0 0.0
  %293 = vmatpush1.xpose.msra.mxu0 0.0
  %294 = vmatprep.subr.mxu0 0.0
  %295 = vmatpush1.xpose.msra.mxu0 0.0
  %296 = vmatprep.subr.mxu0 0.0
  %297 = vmatpush1.xpose.msra.mxu0 0.0
  %298 = vmatprep.subr.mxu0 0.0
  %299 = vmatpush1.xpose.msra.mxu0 0.0
  %300 = vmatprep.subr.mxu0 0.0
  %301 = vmatpush1.xpose.msra.mxu0 0.0
  %302 = vmatprep.subr.mxu0 0.0
  %303 = vmatpush1.xpose.msra.mxu0 0.0
  %304 = vmatprep.subr.mxu0 0.0
  %305 = vmatpush1.xpose.msra.mxu0 0.0
  %306 = vmatprep.subr.mxu0 0.0
  %307 = vmatpush1.xpose.msra.mxu0 0.0
  %308 = vmatprep.subr.mxu0 0.0
  %309 = vmatpush1.xpose.msra.mxu0 0.0
  %310 = vmatprep.subr.mxu0 0.0
  %311 = vmatpush1.xpose.msra.mxu0 0.0
  %312 = vmatprep.subr.mxu0 0.0
  %313 = vmatpush1.xpose.msra.mxu0 0.0
  %314 = vmatprep.subr.mxu0 0.0
  %315 = vmatpush1.xpose.msra.mxu0 0.0
  %316 = vmatprep.subr.mxu0 0.0
  %317 = vmatpush1.xpose.msra.mxu0 0.0
  %318 = vmatprep.subr.mxu0 0.0
  %319 = vmatpush1.xpose.msra.mxu0 0.0
  %320 = vmatprep.subr.mxu0 0.0
  %321 = vmatpush1.xpose.msra.mxu0 0.0
  %322 = vmatprep.subr.mxu0 0.0
  %323 = vmatpush1.xpose.msra.mxu0 0.0
  %324 = vmatprep.subr.mxu0 0.0
  %325 = vmatpush1.xpose.msra.mxu0 0.0
  %326 = vmatprep.subr.mxu0 0.0
  %327 = vmatpush1.xpose.msra.mxu0 0.0
  %328 = vmatprep.subr.mxu0 0.0
  %329 = vmatpush1.xpose.msra.mxu0 0.0
  %330 = vmatprep.subr.mxu0 0.0
  %331 = vmatpush1.xpose.msra.mxu0 0.0
  %332 = vmatprep.subr.mxu0 0.0
  %333 = vmatpush1.xpose.msra.mxu0 0.0
  %334 = vmatprep.subr.mxu0 0.0
  %335 = vmatpush1.xpose.msra.mxu0 0.0
  %336 = vmatprep.subr.mxu0 0.0
  %337 = vmatpush1.xpose.msra.mxu0 0.0
  %338 = vmatprep.mubr.f32.mxu0 0.0
  %339 = vmatmul.mubr.f32.gmra.mrb[0].mxu0 %v69
  %v340 = vpop.f32.mrb[0].mxu0
  %v341 = vadd.f32 %v267, %v340
  %v342 = vpop.f32.mrb[0].mxu0
  %343 = vdwg.mxu0
  %344 = vmatprep.subr.mxu0 0.0
  %345 = vmatpush1.xpose.msra.mxu0 %v142
  %346 = vmatprep.subr.mxu0 0.0
  %347 = vmatpush1.xpose.msra.mxu0 0.0
  %348 = vmatprep.subr.mxu0 0.0
  %349 = vmatpush1.xpose.msra.mxu0 0.0
  %350 = vmatprep.subr.mxu0 0.0
  %351 = vmatpush1.xpose.msra.mxu0 0.0
  %352 = vmatprep.subr.mxu0 0.0
  %353 = vmatpush1.xpose.msra.mxu0 0.0
  %354 = vmatprep.subr.mxu0 0.0
  %355 = vmatpush1.xpose.msra.mxu0 0.0
  %356 = vmatprep.subr.mxu0 0.0
  %357 = vmatpush1.xpose.msra.mxu0 0.0
  %358 = vmatprep.subr.mxu0 0.0
  %359 = vmatpush1.xpose.msra.mxu0 0.0
  %360 = vmatprep.subr.mxu0 0.0
  %361 = vmatpush1.xpose.msra.mxu0 0.0
  %362 = vmatprep.subr.mxu0 0.0
  %363 = vmatpush1.xpose.msra.mxu0 0.0
  %364 = vmatprep.subr.mxu0 0.0
  %365 = vmatpush1.xpose.msra.mxu0 0.0
  %366 = vmatprep.subr.mxu0 0.0
  %367 = vmatpush1.xpose.msra.mxu0 0.0
  %368 = vmatprep.subr.mxu0 0.0
  %369 = vmatpush1.xpose.msra.mxu0 0.0
  %370 = vmatprep.subr.mxu0 0.0
  %371 = vmatpush1.xpose.msra.mxu0 0.0
  %372 = vmatprep.subr.mxu0 0.0
  %373 = vmatpush1.xpose.msra.mxu0 0.0
  %374 = vmatprep.subr.mxu0 0.0
  %375 = vmatpush1.xpose.msra.mxu0 0.0
  %376 = vmatprep.subr.mxu0 0.0
  %377 = vmatpush1.xpose.msra.mxu0 0.0
  %378 = vmatprep.subr.mxu0 0.0
  %379 = vmatpush1.xpose.msra.mxu0 0.0
  %380 = vmatprep.subr.mxu0 0.0
  %381 = vmatpush1.xpose.msra.mxu0 0.0
  %382 = vmatprep.subr.mxu0 0.0
  %383 = vmatpush1.xpose.msra.mxu0 0.0
  %384 = vmatprep.subr.mxu0 0.0
  %385 = vmatpush1.xpose.msra.mxu0 0.0
  %386 = vmatprep.subr.mxu0 0.0
  %387 = vmatpush1.xpose.msra.mxu0 0.0
  %388 = vmatprep.subr.mxu0 0.0
  %389 = vmatpush1.xpose.msra.mxu0 0.0
  %390 = vmatprep.subr.mxu0 0.0
  %391 = vmatpush1.xpose.msra.mxu0 0.0
  %392 = vmatprep.subr.mxu0 0.0
  %393 = vmatpush1.xpose.msra.mxu0 0.0
  %394 = vmatprep.subr.mxu0 0.0
  %395 = vmatpush1.xpose.msra.mxu0 0.0
  %396 = vmatprep.subr.mxu0 0.0
  %397 = vmatpush1.xpose.msra.mxu0 0.0
  %398 = vmatprep.subr.mxu0 0.0
  %399 = vmatpush1.xpose.msra.mxu0 0.0
  %400 = vmatprep.subr.mxu0 0.0
  %401 = vmatpush1.xpose.msra.mxu0 0.0
  %402 = vmatprep.subr.mxu0 0.0
  %403 = vmatpush1.xpose.msra.mxu0 0.0
  %404 = vmatprep.subr.mxu0 0.0
  %405 = vmatpush1.xpose.msra.mxu0 0.0
  %406 = vmatprep.subr.mxu0 0.0
  %407 = vmatpush1.xpose.msra.mxu0 0.0
  %408 = vmatprep.mubr.f32.mxu0 0.0
  %409 = vmatmul.mubr.f32.gmra.mrb[0].mxu0 %v145
  %v410 = vpop.f32.mrb[0].mxu0
  %v411 = vadd.f32 %v271, %v410
  %v412 = vpop.f32.mrb[0].mxu0
  %413 = vdwg.mxu0
  %v414 = vsel %vm217, %v341, -inf
  %415 = vmax.xlane.f32.xlu0 %v414
  %v416 = vpop.xlane.xlu0 %415
  %v417 = vsel %vm217, %v411, -inf
  %418 = vmax.xlane.f32.xlu0 %v417
  %v419 = vpop.xlane.xlu0 %418
  %v420 = vsub.f32 %v341, %v416
  %v421 = vsub.f32 %v411, %v419
  %v422 = vmul.f32 %v420, 1.442695
  %v423 = vpow.pop %v422
  %v424 = vmul.f32 %v421, 1.442695
  %v425 = vpow.pop %v424
  %v426 = vsel %vm217, %v423, 0.0
  %427 = vadd.xlane.f32.xlu0 %v426
  %v428 = vpop.xlane.xlu0 %427
  %v429 = vsel %vm217, %v425, 0.0
  %430 = vadd.xlane.f32.xlu0 %v429
  %v431 = vpop.xlane.xlu0 %430
  %v432 = vrcp.pop %v428
  %v433 = vrcp.pop %v431
  %v434 = vmul.f32 %v423, %v432
  %v435 = vmul.f32 %v425, %v433
  %v437 = vsel %vm217, %v238, 0
  %439 = vmatprep.subr.mxu0 0.0
  %440 = vmatpush1.msra.mxu0 %v28
  %441 = vmatprep.subr.mxu0 0.0
  %442 = vmatpush1.msra.mxu0 0.0
  %443 = vmatprep.subr.mxu0 0.0
  %444 = vmatpush1.msra.mxu0 0.0
  %445 = vmatprep.subr.mxu0 0.0
  %446 = vmatpush1.msra.mxu0 0.0
  %447 = vmatprep.subr.mxu0 0.0
  %448 = vmatpush1.msra.mxu0 0.0
  %449 = vmatprep.subr.mxu0 0.0
  %450 = vmatpush1.msra.mxu0 0.0
  %451 = vmatprep.subr.mxu0 0.0
  %452 = vmatpush1.msra.mxu0 0.0
  %453 = vmatprep.subr.mxu0 0.0
  %454 = vmatpush1.msra.mxu0 0.0
  %455 = vmatprep.subr.mxu0 0.0
  %456 = vmatpush1.msra.mxu0 0.0
  %457 = vmatprep.subr.mxu0 0.0
  %458 = vmatpush1.msra.mxu0 0.0
  %459 = vmatprep.subr.mxu0 0.0
  %460 = vmatpush1.msra.mxu0 0.0
  %461 = vmatprep.subr.mxu0 0.0
  %462 = vmatpush1.msra.mxu0 0.0
  %463 = vmatprep.subr.mxu0 0.0
  %464 = vmatpush1.msra.mxu0 0.0
  %465 = vmatprep.subr.mxu0 0.0
  %466 = vmatpush1.msra.mxu0 0.0
  %467 = vmatprep.subr.mxu0 0.0
  %468 = vmatpush1.msra.mxu0 0.0
  %469 = vmatprep.subr.mxu0 0.0
  %470 = vmatpush1.msra.mxu0 0.0
  %471 = vmatprep.subr.mxu0 0.0
  %472 = vmatpush1.msra.mxu0 0.0
  %473 = vmatprep.subr.mxu0 0.0
  %474 = vmatpush1.msra.mxu0 0.0
  %475 = vmatprep.subr.mxu0 0.0
  %476 = vmatpush1.msra.mxu0 0.0
  %477 = vmatprep.subr.mxu0 0.0
  %478 = vmatpush1.msra.mxu0 0.0
  %479 = vmatprep.subr.mxu0 0.0
  %480 = vmatpush1.msra.mxu0 0.0
  %481 = vmatprep.subr.mxu0 0.0
  %482 = vmatpush1.msra.mxu0 0.0
  %483 = vmatprep.subr.mxu0 0.0
  %484 = vmatpush1.msra.mxu0 0.0
  %485 = vmatprep.subr.mxu0 0.0
  %486 = vmatpush1.msra.mxu0 0.0
  %487 = vmatprep.subr.mxu0 0.0
  %488 = vmatpush1.msra.mxu0 0.0
  %489 = vmatprep.subr.mxu0 0.0
  %490 = vmatpush1.msra.mxu0 0.0
  %491 = vmatprep.subr.mxu0 0.0
  %492 = vmatpush1.msra.mxu0 0.0
  %493 = vmatprep.subr.mxu0 0.0
  %494 = vmatpush1.msra.mxu0 0.0
  %495 = vmatprep.subr.mxu0 0.0
  %496 = vmatpush1.msra.mxu0 0.0
  %497 = vmatprep.subr.mxu0 0.0
  %498 = vmatpush1.msra.mxu0 0.0
  %499 = vmatprep.subr.mxu0 0.0
  %500 = vmatpush1.msra.mxu0 0.0
  %501 = vmatprep.subr.mxu0 0.0
  %502 = vmatpush1.msra.mxu0 0.0
  %503 = vmatprep.mubr.f32.mxu0 0.0
  %504 = vmatmul.mubr.f32.gmra.mrb[0].mxu0 %v437
  %v505 = vpop.f32.mrb[0].mxu0
  %v506 = vadd.f32 0.0, %v505
  %v507 = vpop.f32.mrb[0].mxu0
  %508 = vdwg.mxu0
  %v510 = vsel %vm217, %v239, 0
  %512 = vmatprep.subr.mxu0 0.0
  %513 = vmatpush1.msra.mxu0 %v29
  %514 = vmatprep.subr.mxu0 0.0
  %515 = vmatpush1.msra.mxu0 0.0
  %516 = vmatprep.subr.mxu0 0.0
  %517 = vmatpush1.msra.mxu0 0.0
  %518 = vmatprep.subr.mxu0 0.0
  %519 = vmatpush1.msra.mxu0 0.0
  %520 = vmatprep.subr.mxu0 0.0
  %521 = vmatpush1.msra.mxu0 0.0
  %522 = vmatprep.subr.mxu0 0.0
  %523 = vmatpush1.msra.mxu0 0.0
  %524 = vmatprep.subr.mxu0 0.0
  %525 = vmatpush1.msra.mxu0 0.0
  %526 = vmatprep.subr.mxu0 0.0
  %527 = vmatpush1.msra.mxu0 0.0
  %528 = vmatprep.subr.mxu0 0.0
  %529 = vmatpush1.msra.mxu0 0.0
  %530 = vmatprep.subr.mxu0 0.0
  %531 = vmatpush1.msra.mxu0 0.0
  %532 = vmatprep.subr.mxu0 0.0
  %533 = vmatpush1.msra.mxu0 0.0
  %534 = vmatprep.subr.mxu0 0.0
  %535 = vmatpush1.msra.mxu0 0.0
  %536 = vmatprep.subr.mxu0 0.0
  %537 = vmatpush1.msra.mxu0 0.0
  %538 = vmatprep.subr.mxu0 0.0
  %539 = vmatpush1.msra.mxu0 0.0
  %540 = vmatprep.subr.mxu0 0.0
  %541 = vmatpush1.msra.mxu0 0.0
  %542 = vmatprep.subr.mxu0 0.0
  %543 = vmatpush1.msra.mxu0 0.0
  %544 = vmatprep.subr.mxu0 0.0
  %545 = vmatpush1.msra.mxu0 0.0
  %546 = vmatprep.subr.mxu0 0.0
  %547 = vmatpush1.msra.mxu0 0.0
  %548 = vmatprep.subr.mxu0 0.0
  %549 = vmatpush1.msra.mxu0 0.0
  %550 = vmatprep.subr.mxu0 0.0
  %551 = vmatpush1.msra.mxu0 0.0
  %552 = vmatprep.subr.mxu0 0.0
  %553 = vmatpush1.msra.mxu0 0.0
  %554 = vmatprep.subr.mxu0 0.0
  %555 = vmatpush1.msra.mxu0 0.0
  %556 = vmatprep.subr.mxu0 0.0
  %557 = vmatpush1.msra.mxu0 0.0
  %558 = vmatprep.subr.mxu0 0.0
  %559 = vmatpush1.msra.mxu0 0.0
  %560 = vmatprep.subr.mxu0 0.0
  %561 = vmatpush1.msra.mxu0 0.0
  %562 = vmatprep.subr.mxu0 0.0
  %563 = vmatpush1.msra.mxu0 0.0
  %564 = vmatprep.subr.mxu0 0.0
  %565 = vmatpush1.msra.mxu0 0.0
  %566 = vmatprep.subr.mxu0 0.0
  %567 = vmatpush1.msra.mxu0 0.0
  %568 = vmatprep.subr.mxu0 0.0
  %569 = vmatpush1.msra.mxu0 0.0
  %570 = vmatprep.subr.mxu0 0.0
  %571 = vmatpush1.msra.mxu0 0.0
  %572 = vmatprep.subr.mxu0 0.0
  %573 = vmatpush1.msra.mxu0 0.0
  %574 = vmatprep.subr.mxu0 0.0
  %575 = vmatpush1.msra.mxu0 0.0
  %576 = vmatprep.mubr.f32.mxu0 0.0
  %577 = vmatmul.mubr.f32.gmra.mrb[0].mxu0 %v510
  %v578 = vpop.f32.mrb[0].mxu0
  %v579 = vadd.f32 0.0, %v578
  %v580 = vpop.f32.mrb[0].mxu0
  %581 = vdwg.mxu0
  %v583 = vsel %vm217, %v434, 0
  %585 = vmatprep.subr.mxu0 0.0
  %586 = vmatpush1.msra.mxu0 %v26
  %587 = vmatprep.subr.mxu0 0.0
  %588 = vmatpush1.msra.mxu0 0.0
  %589 = vmatprep.subr.mxu0 0.0
  %590 = vmatpush1.msra.mxu0 0.0
  %591 = vmatprep.subr.mxu0 0.0
  %592 = vmatpush1.msra.mxu0 0.0
  %593 = vmatprep.subr.mxu0 0.0
  %594 = vmatpush1.msra.mxu0 0.0
  %595 = vmatprep.subr.mxu0 0.0
  %596 = vmatpush1.msra.mxu0 0.0
  %597 = vmatprep.subr.mxu0 0.0
  %598 = vmatpush1.msra.mxu0 0.0
  %599 = vmatprep.subr.mxu0 0.0
  %600 = vmatpush1.msra.mxu0 0.0
  %601 = vmatprep.subr.mxu0 0.0
  %602 = vmatpush1.msra.mxu0 0.0
  %603 = vmatprep.subr.mxu0 0.0
  %604 = vmatpush1.msra.mxu0 0.0
  %605 = vmatprep.subr.mxu0 0.0
  %606 = vmatpush1.msra.mxu0 0.0
  %607 = vmatprep.subr.mxu0 0.0
  %608 = vmatpush1.msra.mxu0 0.0
  %609 = vmatprep.subr.mxu0 0.0
  %610 = vmatpush1.msra.mxu0 0.0
  %611 = vmatprep.subr.mxu0 0.0
  %612 = vmatpush1.msra.mxu0 0.0
  %613 = vmatprep.subr.mxu0 0.0
  %614 = vmatpush1.msra.mxu0 0.0
  %615 = vmatprep.subr.mxu0 0.0
  %616 = vmatpush1.msra.mxu0 0.0
  %617 = vmatprep.subr.mxu0 0.0
  %618 = vmatpush1.msra.mxu0 0.0
  %619 = vmatprep.subr.mxu0 0.0
  %620 = vmatpush1.msra.mxu0 0.0
  %621 = vmatprep.subr.mxu0 0.0
  %622 = vmatpush1.msra.mxu0 0.0
  %623 = vmatprep.subr.mxu0 0.0
  %624 = vmatpush1.msra.mxu0 0.0
  %625 = vmatprep.subr.mxu0 0.0
  %626 = vmatpush1.msra.mxu0 0.0
  %627 = vmatprep.subr.mxu0 0.0
  %628 = vmatpush1.msra.mxu0 0.0
  %629 = vmatprep.subr.mxu0 0.0
  %630 = vmatpush1.msra.mxu0 0.0
  %631 = vmatprep.subr.mxu0 0.0
  %632 = vmatpush1.msra.mxu0 0.0
  %633 = vmatprep.subr.mxu0 0.0
  %634 = vmatpush1.msra.mxu0 0.0
  %635 = vmatprep.subr.mxu0 0.0
  %636 = vmatpush1.msra.mxu0 0.0
  %637 = vmatprep.subr.mxu0 0.0
  %638 = vmatpush1.msra.mxu0 0.0
  %639 = vmatprep.subr.mxu0 0.0
  %640 = vmatpush1.msra.mxu0 0.0
  %641 = vmatprep.subr.mxu0 0.0
  %642 = vmatpush1.msra.mxu0 0.0
  %643 = vmatprep.subr.mxu0 0.0
  %644 = vmatpush1.msra.mxu0 0.0
  %645 = vmatprep.subr.mxu0 0.0
  %646 = vmatpush1.msra.mxu0 0.0
  %647 = vmatprep.subr.mxu0 0.0
  %648 = vmatpush1.msra.mxu0 0.0
  %649 = vmatprep.mubr.f32.mxu0 0.0
  %650 = vmatmul.mubr.f32.gmra.mrb[0].mxu0 %v583
  %v651 = vpop.f32.mrb[0].mxu0
  %v652 = vadd.f32 0.0, %v651
  %v653 = vpop.f32.mrb[0].mxu0
  %654 = vdwg.mxu0
  %v656 = vsel %vm217, %v435, 0
  %658 = vmatprep.subr.mxu0 0.0
  %659 = vmatpush1.msra.mxu0 %v27
  %660 = vmatprep.subr.mxu0 0.0
  %661 = vmatpush1.msra.mxu0 0.0
  %662 = vmatprep.subr.mxu0 0.0
  %663 = vmatpush1.msra.mxu0 0.0
  %664 = vmatprep.subr.mxu0 0.0
  %665 = vmatpush1.msra.mxu0 0.0
  %666 = vmatprep.subr.mxu0 0.0
  %667 = vmatpush1.msra.mxu0 0.0
  %668 = vmatprep.subr.mxu0 0.0
  %669 = vmatpush1.msra.mxu0 0.0
  %670 = vmatprep.subr.mxu0 0.0
  %671 = vmatpush1.msra.mxu0 0.0
  %672 = vmatprep.subr.mxu0 0.0
  %673 = vmatpush1.msra.mxu0 0.0
  %674 = vmatprep.subr.mxu0 0.0
  %675 = vmatpush1.msra.mxu0 0.0
  %676 = vmatprep.subr.mxu0 0.0
  %677 = vmatpush1.msra.mxu0 0.0
  %678 = vmatprep.subr.mxu0 0.0
  %679 = vmatpush1.msra.mxu0 0.0
  %680 = vmatprep.subr.mxu0 0.0
  %681 = vmatpush1.msra.mxu0 0.0
  %682 = vmatprep.subr.mxu0 0.0
  %683 = vmatpush1.msra.mxu0 0.0
  %684 = vmatprep.subr.mxu0 0.0
  %685 = vmatpush1.msra.mxu0 0.0
  %686 = vmatprep.subr.mxu0 0.0
  %687 = vmatpush1.msra.mxu0 0.0
  %688 = vmatprep.subr.mxu0 0.0
  %689 = vmatpush1.msra.mxu0 0.0
  %690 = vmatprep.subr.mxu0 0.0
  %691 = vmatpush1.msra.mxu0 0.0
  %692 = vmatprep.subr.mxu0 0.0
  %693 = vmatpush1.msra.mxu0 0.0
  %694 = vmatprep.subr.mxu0 0.0
  %695 = vmatpush1.msra.mxu0 0.0
  %696 = vmatprep.subr.mxu0 0.0
  %697 = vmatpush1.msra.mxu0 0.0
  %698 = vmatprep.subr.mxu0 0.0
  %699 = vmatpush1.msra.mxu0 0.0
  %700 = vmatprep.subr.mxu0 0.0
  %701 = vmatpush1.msra.mxu0 0.0
  %702 = vmatprep.subr.mxu0 0.0
  %703 = vmatpush1.msra.mxu0 0.0
  %704 = vmatprep.subr.mxu0 0.0
  %705 = vmatpush1.msra.mxu0 0.0
  %706 = vmatprep.subr.mxu0 0.0
  %707 = vmatpush1.msra.mxu0 0.0
  %708 = vmatprep.subr.mxu0 0.0
  %709 = vmatpush1.msra.mxu0 0.0
  %710 = vmatprep.subr.mxu0 0.0
  %711 = vmatpush1.msra.mxu0 0.0
  %712 = vmatprep.subr.mxu0 0.0
  %713 = vmatpush1.msra.mxu0 0.0
  %714 = vmatprep.subr.mxu0 0.0
  %715 = vmatpush1.msra.mxu0 0.0
  %716 = vmatprep.subr.mxu0 0.0
  %717 = vmatpush1.msra.mxu0 0.0
  %718 = vmatprep.subr.mxu0 0.0
  %719 = vmatpush1.msra.mxu0 0.0
  %720 = vmatprep.subr.mxu0 0.0
  %721 = vmatpush1.msra.mxu0 0.0
  %722 = vmatprep.mubr.f32.mxu0 0.0
  %723 = vmatmul.mubr.f32.gmra.mrb[0].mxu0 %v656
  %v724 = vpop.f32.mrb[0].mxu0
  %v725 = vadd.f32 0.0, %v724
  %v726 = vpop.f32.mrb[0].mxu0
  %727 = vdwg.mxu0
  %v728 = vsub.f32 %v26, %v506
  %v729 = vsub.f32 %v27, %v579
  %v730 = vsub.f32 %v28, %v652
  %v731 = vsub.f32 %v29, %v725
  %v732 = vmul.f32 %v26, %v506
  %v733 = vmul.f32 %v27, %v579
  %v734 = vmul.f32 %v28, %v652
  %v735 = vmul.f32 %v29, %v725
  %740 = vrot.lane.b32.xlu0 %v506, 64
  %v741 = vpop.permute.xlu0 %740
  %742 = vrot.lane.b32.xlu0 %v579, 64
  %v743 = vpop.permute.xlu0 %742
  %744 = vrot.lane.b32.xlu0 %v652, 64
  %v745 = vpop.permute.xlu0 %744
  %746 = vrot.lane.b32.xlu0 %v725, 64
  %v747 = vpop.permute.xlu0 %746
  %756 = vrot.lane.b32.xlu0 %v732, 64
  %v757 = vpop.permute.xlu0 %756
  %758 = vrot.lane.b32.xlu0 %v733, 64
  %v759 = vpop.permute.xlu0 %758
  %760 = vrot.lane.b32.xlu0 %v734, 64
  %v761 = vpop.permute.xlu0 %760
  %762 = vrot.lane.b32.xlu0 %v735, 64
  %v763 = vpop.permute.xlu0 %762
  %v768 = vsel %vm64, %v26, %v741
  %v769 = vsel %vm64, %v27, %v743
  %v770 = vsel %vm64, %v28, %v745
  %v771 = vsel %vm64, %v29, %v747
  %v772 = vsel %vm64, %v728, %v757
  %v773 = vsel %vm64, %v729, %v759
  %v774 = vsel %vm64, %v730, %v761
  %v775 = vsel %vm64, %v731, %v763
  %v776 = vld [vmem:[%s3] sm:$0xff]
  %v777 = vld [vmem:[%s3 + $0x8] sm:$0xff]
  %v778 = vld [vmem:[%s3 + $0x10] sm:$0xff]
  %v779 = vld [vmem:[%s3 + $0x18] sm:$0xff]
  %v780 = vld [vmem:[%s3 + $0x20] sm:$0xff]
  %v781 = vld [vmem:[%s3 + $0x28] sm:$0xff]
  %v782 = vld [vmem:[%s3 + $0x30] sm:$0xff]
  %v783 = vld [vmem:[%s3 + $0x38] sm:$0xff]
  %v784 = vld [vmem:[%s3 + $0x40] sm:$0xff]
  %v785 = vld [vmem:[%s3 + $0x48] sm:$0xff]
  %v786 = vld [vmem:[%s3 + $0x50] sm:$0xff]
  %v787 = vld [vmem:[%s3 + $0x58] sm:$0xff]
  %v788 = vld [vmem:[%s3 + $0x60] sm:$0xff]
  %v789 = vld [vmem:[%s3 + $0x68] sm:$0xff]
  %v790 = vld [vmem:[%s3 + $0x70] sm:$0xff]
  %v791 = vld [vmem:[%s3 + $0x78] sm:$0xff]
  %v792 = vld [vmem:[%s3 + $0x80] sm:$0xff]
  %v793 = vld [vmem:[%s3 + $0x88] sm:$0xff]
  %v794 = vld [vmem:[%s3 + $0x90] sm:$0xff]
  %v795 = vld [vmem:[%s3 + $0x98] sm:$0xff]
  %v796 = vld [vmem:[%s3 + $0xa0] sm:$0xff]
  %v797 = vld [vmem:[%s3 + $0xa8] sm:$0xff]
  %v798 = vld [vmem:[%s3 + $0xb0] sm:$0xff]
  %v799 = vld [vmem:[%s3 + $0xb8] sm:$0xff]
  %v800 = vld [vmem:[%s3 + $0xc0] sm:$0xff]
  %v801 = vld [vmem:[%s3 + $0xc8] sm:$0xff]
  %v802 = vld [vmem:[%s3 + $0xd0] sm:$0xff]
  %v803 = vld [vmem:[%s3 + $0xd8] sm:$0xff]
  %v804 = vld [vmem:[%s3 + $0xe0] sm:$0xff]
  %v805 = vld [vmem:[%s3 + $0xe8] sm:$0xff]
  %v806 = vld [vmem:[%s3 + $0xf0] sm:$0xff]
  %v807 = vld [vmem:[%s3 + $0xf8] sm:$0xff]
  %v808 = vld [vmem:[%s4] sm:$0x1]
  %v810 = vlaneseq
  %v811 = vshrl.u32 %v810, 7
  %v812 = vsub.s32 0, %v811
  %v813 = vrot.slane %v808, %v812
  %815 = vmatprep.subr.mxu0 0.0
  %816 = vmatpush1.msra.mxu0 %v776
  %817 = vmatprep.subr.mxu0 0.0
  %818 = vmatpush1.msra.mxu0 %v777
  %819 = vmatprep.subr.mxu0 0.0
  %820 = vmatpush1.msra.mxu0 %v778
  %821 = vmatprep.subr.mxu0 0.0
  %822 = vmatpush1.msra.mxu0 %v779
  %823 = vmatprep.subr.mxu0 0.0
  %824 = vmatpush1.msra.mxu0 %v780
  %825 = vmatprep.subr.mxu0 0.0
  %826 = vmatpush1.msra.mxu0 %v781
  %827 = vmatprep.subr.mxu0 0.0
  %828 = vmatpush1.msra.mxu0 %v782
  %829 = vmatprep.subr.mxu0 0.0
  %830 = vmatpush1.msra.mxu0 %v783
  %831 = vmatprep.subr.mxu0 0.0
  %832 = vmatpush1.msra.mxu0 %v784
  %833 = vmatprep.subr.mxu0 0.0
  %834 = vmatpush1.msra.mxu0 %v785
  %835 = vmatprep.subr.mxu0 0.0
  %836 = vmatpush1.msra.mxu0 %v786
  %837 = vmatprep.subr.mxu0 0.0
  %838 = vmatpush1.msra.mxu0 %v787
  %839 = vmatprep.subr.mxu0 0.0
  %840 = vmatpush1.msra.mxu0 %v788
  %841 = vmatprep.subr.mxu0 0.0
  %842 = vmatpush1.msra.mxu0 %v789
  %843 = vmatprep.subr.mxu0 0.0
  %844 = vmatpush1.msra.mxu0 %v790
  %845 = vmatprep.subr.mxu0 0.0
  %846 = vmatpush1.msra.mxu0 %v791
  %847 = vmatprep.subr.mxu0 0.0
  %848 = vmatpush1.msra.mxu0 %v792
  %849 = vmatprep.subr.mxu0 0.0
  %850 = vmatpush1.msra.mxu0 %v793
  %851 = vmatprep.subr.mxu0 0.0
  %852 = vmatpush1.msra.mxu0 %v794
  %853 = vmatprep.subr.mxu0 0.0
  %854 = vmatpush1.msra.mxu0 %v795
  %855 = vmatprep.subr.mxu0 0.0
  %856 = vmatpush1.msra.mxu0 %v796
  %857 = vmatprep.subr.mxu0 0.0
  %858 = vmatpush1.msra.mxu0 %v797
  %859 = vmatprep.subr.mxu0 0.0
  %860 = vmatpush1.msra.mxu0 %v798
  %861 = vmatprep.subr.mxu0 0.0
  %862 = vmatpush1.msra.mxu0 %v799
  %863 = vmatprep.subr.mxu0 0.0
  %864 = vmatpush1.msra.mxu0 %v800
  %865 = vmatprep.subr.mxu0 0.0
  %866 = vmatpush1.msra.mxu0 %v801
  %867 = vmatprep.subr.mxu0 0.0
  %868 = vmatpush1.msra.mxu0 %v802
  %869 = vmatprep.subr.mxu0 0.0
  %870 = vmatpush1.msra.mxu0 %v803
  %871 = vmatprep.subr.mxu0 0.0
  %872 = vmatpush1.msra.mxu0 %v804
  %873 = vmatprep.subr.mxu0 0.0
  %874 = vmatpush1.msra.mxu0 %v805
  %875 = vmatprep.subr.mxu0 0.0
  %876 = vmatpush1.msra.mxu0 %v806
  %877 = vmatprep.subr.mxu0 0.0
  %878 = vmatpush1.msra.mxu0 %v807
  %879 = vmatprep.mubr.f32.mxu0 %v772
  %880 = vmatmul.mubr.f32.gmra.mrb[0].mxu0 %v768
  %v881 = vpop.f32.mrb[0].mxu0
  %v882 = vadd.f32 %v813, %v881
  %v883 = vpop.f32.mrb[0].mxu0
  %884 = vmatprep.mubr.f32.mxu0 %v773
  %885 = vmatmul.mubr.f32.gmra.mrb[0].mxu0 %v769
  %v886 = vpop.f32.mrb[0].mxu0
  %v887 = vadd.f32 %v813, %v886
  %v888 = vpop.f32.mrb[0].mxu0
  %889 = vmatprep.mubr.f32.mxu0 %v774
  %890 = vmatmul.mubr.f32.gmra.mrb[0].mxu0 %v770
  %v891 = vpop.f32.mrb[0].mxu0
  %v892 = vadd.f32 %v813, %v891
  %v893 = vpop.f32.mrb[0].mxu0
  %894 = vmatprep.mubr.f32.mxu0 %v775
  %895 = vmatmul.mubr.f32.gmra.mrb[0].mxu0 %v771
  %v896 = vpop.f32.mrb[0].mxu0
  %v897 = vadd.f32 %v813, %v896
  %v898 = vpop.f32.mrb[0].mxu0
  %899 = vdwg.mxu0
  %v900 = vmax.f32 %v882, 0.0
  %v901 = vmax.f32 %v887, 0.0
  %v902 = vmax.f32 %v892, 0.0
  %v903 = vmax.f32 %v897, 0.0
  %v904 = vld [vmem:[%s5] sm:$0xff]
  %v905 = vld [vmem:[%s5 + $0x8] sm:$0xff]
  %v906 = vld [vmem:[%s5 + $0x10] sm:$0xff]
  %v907 = vld [vmem:[%s5 + $0x18] sm:$0xff]
  %v908 = vld [vmem:[%s5 + $0x20] sm:$0xff]
  %v909 = vld [vmem:[%s5 + $0x28] sm:$0xff]
  %v910 = vld [vmem:[%s5 + $0x30] sm:$0xff]
  %v911 = vld [vmem:[%s5 + $0x38] sm:$0xff]
  %v912 = vld [vmem:[%s6] sm:$0x1]
  %v914 = vlaneseq
  %v915 = vshrl.u32 %v914, 7
  %v916 = vsub.s32 0, %v915
  %v917 = vrot.slane %v912, %v916
  %v920 = vsel %vm64, %v900, 0
  %v923 = vsel %vm64, %v901, 0
  %v926 = vsel %vm64, %v902, 0
  %v929 = vsel %vm64, %v903, 0
  %931 = vmatprep.subr.mxu0 0.0
  %932 = vmatpush1.msra.mxu0 %v904
  %933 = vmatprep.subr.mxu0 0.0
  %934 = vmatpush1.msra.mxu0 %v905
  %935 = vmatprep.subr.mxu0 0.0
  %936 = vmatpush1.msra.mxu0 %v906
  %937 = vmatprep.subr.mxu0 0.0
  %938 = vmatpush1.msra.mxu0 %v907
  %939 = vmatprep.subr.mxu0 0.0
  %940 = vmatpush1.msra.mxu0 %v908
  %941 = vmatprep.subr.mxu0 0.0
  %942 = vmatpush1.msra.mxu0 %v909
  %943 = vmatprep.subr.mxu0 0.0
  %944 = vmatpush1.msra.mxu0 %v910
  %945 = vmatprep.subr.mxu0 0.0
  %946 = vmatpush1.msra.mxu0 %v911
  %947 = vmatprep.subr.mxu0 0.0
  %948 = vmatpush1.msra.mxu0 0.0
  %949 = vmatprep.subr.mxu0 0.0
  %950 = vmatpush1.msra.mxu0 0.0
  %951 = vmatprep.subr.mxu0 0.0
  %952 = vmatpush1.msra.mxu0 0.0
  %953 = vmatprep.subr.mxu0 0.0
  %954 = vmatpush1.msra.mxu0 0.0
  %955 = vmatprep.subr.mxu0 0.0
  %956 = vmatpush1.msra.mxu0 0.0
  %957 = vmatprep.subr.mxu0 0.0
  %958 = vmatpush1.msra.mxu0 0.0
  %959 = vmatprep.subr.mxu0 0.0
  %960 = vmatpush1.msra.mxu0 0.0
  %961 = vmatprep.subr.mxu0 0.0
  %962 = vmatpush1.msra.mxu0 0.0
  %963 = vmatprep.subr.mxu0 0.0
  %964 = vmatpush1.msra.mxu0 0.0
  %965 = vmatprep.subr.mxu0 0.0
  %966 = vmatpush1.msra.mxu0 0.0
  %967 = vmatprep.subr.mxu0 0.0
  %968 = vmatpush1.msra.mxu0 0.0
  %969 = vmatprep.subr.mxu0 0.0
  %970 = vmatpush1.msra.mxu0 0.0
  %971 = vmatprep.subr.mxu0 0.0
  %972 = vmatpush1.msra.mxu0 0.0
  %973 = vmatprep.subr.mxu0 0.0
  %974 = vmatpush1.msra.mxu0 0.0
  %975 = vmatprep.subr.mxu0 0.0
  %976 = vmatpush1.msra.mxu0 0.0
  %977 = vmatprep.subr.mxu0 0.0
  %978 = vmatpush1.msra.mxu0 0.0
  %979 = vmatprep.subr.mxu0 0.0
  %980 = vmatpush1.msra.mxu0 0.0
  %981 = vmatprep.subr.mxu0 0.0
  %982 = vmatpush1.msra.mxu0 0.0
  %983 = vmatprep.subr.mxu0 0.0
  %984 = vmatpush1.msra.mxu0 0.0
  %985 = vmatprep.subr.mxu0 0.0
  %986 = vmatpush1.msra.mxu0 0.0
  %987 = vmatprep.subr.mxu0 0.0
  %988 = vmatpush1.msra.mxu0 0.0
  %989 = vmatprep.subr.mxu0 0.0
  %990 = vmatpush1.msra.mxu0 0.0
  %991 = vmatprep.subr.mxu0 0.0
  %992 = vmatpush1.msra.mxu0 0.0
  %993 = vmatprep.subr.mxu0 0.0
  %994 = vmatpush1.msra.mxu0 0.0
  %995 = vmatprep.mubr.f32.mxu0 0.0
  %996 = vmatmul.mubr.f32.gmra.mrb[0].mxu0 %v920
  %v997 = vpop.f32.mrb[0].mxu0
  %v998 = vadd.f32 %v917, %v997
  %v999 = vpop.f32.mrb[0].mxu0
  %1000 = vmatprep.mubr.f32.mxu0 0.0
  %1001 = vmatmul.mubr.f32.gmra.mrb[0].mxu0 %v923
  %v1002 = vpop.f32.mrb[0].mxu0
  %v1003 = vadd.f32 %v917, %v1002
  %v1004 = vpop.f32.mrb[0].mxu0
  %1005 = vmatprep.mubr.f32.mxu0 0.0
  %1006 = vmatmul.mubr.f32.gmra.mrb[0].mxu0 %v926
  %v1007 = vpop.f32.mrb[0].mxu0
  %v1008 = vadd.f32 %v917, %v1007
  %v1009 = vpop.f32.mrb[0].mxu0
  %1010 = vmatprep.mubr.f32.mxu0 0.0
  %1011 = vmatmul.mubr.f32.gmra.mrb[0].mxu0 %v929
  %v1012 = vpop.f32.mrb[0].mxu0
  %v1013 = vadd.f32 %v917, %v1012
  %v1014 = vpop.f32.mrb[0].mxu0
  %1015 = vdwg.mxu0
  %vm1016 = vcmask 261120
  %1017 = vst.msk [vmem:[%s7] sm:$0xff] %vm1016, %v998
  %1018 = vst.msk [vmem:[%s7 + $0x8] sm:$0xff] %vm1016, %v1003
  %1019 = vst.msk [vmem:[%s7 + $0x10] sm:$0xff] %vm1016, %v1008
  %1020 = vst.msk [vmem:[%s7 + $0x18] sm:$0xff] %vm1016, %v1013
  // Predicated region
  $region30: #{esim_forward.4} parent=0 // pred_check
    _
  $region31: #{esim_forward.4} parent=0 // pred_check_branch
    %1022 = sbr.rel (0) target = $region33
  $region32: #{esim_forward.4} parent=0 // pred_region
    _
  $region33: #{esim_forward.4} parent=0 // pred_fallthru
    _
  // Predicated region
  $region34: #{esim_forward.4} parent=0 // pred_check
    _
  $region35: #{esim_forward.4} parent=0 // pred_check_branch
    %1024 = sbr.rel (0) target = $region37
  $region36: #{esim_forward.4} parent=0 // pred_region
    _
  $region37: #{esim_forward.4} parent=0 // pred_fallthru
    _

// kernel: esim_forward.3
$region0: #{esim_forward.3}
  #allocation0 [shape = 'u32[]', space=smem, size = 0x4, offset = 0x4, fixed_abs, tag = 'smem constant byte address 0x4 - core index']
  #allocation1 [shape = 'u32[144,128]{1,0:T(1,128)}', space=vmem, size = 0x12000, scoped, tag = 'internal scratch']
  %s0 = inlined_call_operand.vmem [shape: f32[32,32], index: 0, kind: input, shape index: {}]
  %s1 = inlined_call_operand.vmem [shape: f32[32,256], index: 1, kind: input, shape index: {}]
  %s2 = inlined_call_operand.vmem [shape: f32[32,256], index: 2, kind: input, shape index: {}]
  %s3 = inlined_call_operand.vmem [shape: f32[64,256], index: 3, kind: input, shape index: {}]
  %s4 = inlined_call_operand.vmem [shape: f32[1,256], index: 4, kind: input, shape index: {}]
  %s5 = inlined_call_operand.vmem [shape: f32[32,64], index: 5, kind: output, shape index: {}]
  %s6 = sld [smem:[#allocation0]]
  $region30: #{esim_forward.3} parent=0
    _
  %s8 = ssub.s32 1, %s6
  %s9 = scalar_select 0, %s8, %s6
  // Predicated region
  $region2: #{esim_forward.3} parent=0 // pred_check
    _
  $region3: #{esim_forward.3} parent=0 // pred_check_branch
    %11 = sbr.rel (0) target = $region5
  $region4: #{esim_forward.3} parent=0 // pred_region
    _
  $region5: #{esim_forward.3} parent=0 // pred_fallthru
    _
  // Predicated region
  $region6: #{esim_forward.3} parent=0 // pred_check
    _
  $region7: #{esim_forward.3} parent=0 // pred_check_branch
    %13 = sbr.rel (0) target = $region9
  $region8: #{esim_forward.3} parent=0 // pred_region
    _
  $region9: #{esim_forward.3} parent=0 // pred_fallthru
    _
  // Predicated region
  $region10: #{esim_forward.3} parent=0 // pred_check
    _
  $region11: #{esim_forward.3} parent=0 // pred_check_branch
    %15 = sbr.rel (0) target = $region13
  $region12: #{esim_forward.3} parent=0 // pred_region
    _
  $region13: #{esim_forward.3} parent=0 // pred_fallthru
    _
  // Predicated region
  $region14: #{esim_forward.3} parent=0 // pred_check
    _
  $region15: #{esim_forward.3} parent=0 // pred_check_branch
    %17 = sbr.rel (0) target = $region17
  $region16: #{esim_forward.3} parent=0 // pred_region
    _
  $region17: #{esim_forward.3} parent=0 // pred_fallthru
    _
  // Predicated region
  $region18: #{esim_forward.3} parent=0 // pred_check
    _
  $region19: #{esim_forward.3} parent=0 // pred_check_branch
    %19 = sbr.rel (0) target = $region21
  $region20: #{esim_forward.3} parent=0 // pred_region
    _
  $region21: #{esim_forward.3} parent=0 // pred_fallthru
    _
  %v20 = vld [vmem:[%s0] sm:$0xff]
  %v21 = vld [vmem:[%s0 + $0x8] sm:$0xff]
  %v22 = vld [vmem:[%s0 + $0x10] sm:$0xff]
  %v23 = vld [vmem:[%s0 + $0x18] sm:$0xff]
  %v24 = vld [vmem:[%s1] sm:$0xff]
  %v25 = vld [vmem:[%s1 + $0x8] sm:$0xff]
  %v26 = vld [vmem:[%s1 + $0x10] sm:$0xff]
  %v27 = vld [vmem:[%s1 + $0x18] sm:$0xff]
  %v28 = vld [vmem:[%s1 + $0x20] sm:$0xff]
  %v29 = vld [vmem:[%s1 + $0x28] sm:$0xff]
  %v30 = vld [vmem:[%s1 + $0x30] sm:$0xff]
  %v31 = vld [vmem:[%s1 + $0x38] sm:$0xff]
  %v32 = vld [vmem:[%s2] sm:$0xff]
  %v33 = vld [vmem:[%s2 + $0x8] sm:$0xff]
  %v34 = vld [vmem:[%s2 + $0x10] sm:$0xff]
  %v35 = vld [vmem:[%s2 + $0x18] sm:$0xff]
  %v36 = vld [vmem:[%s2 + $0x20] sm:$0xff]
  %v37 = vld [vmem:[%s2 + $0x28] sm:$0xff]
  %v38 = vld [vmem:[%s2 + $0x30] sm:$0xff]
  %v39 = vld [vmem:[%s2 + $0x38] sm:$0xff]
  %v40 = vld [vmem:[%s3] sm:$0xff]
  %v41 = vld [vmem:[%s3 + $0x8] sm:$0xff]
  %v42 = vld [vmem:[%s3 + $0x10] sm:$0xff]
  %v43 = vld [vmem:[%s3 + $0x18] sm:$0xff]
  %v44 = vld [vmem:[%s3 + $0x20] sm:$0xff]
  %v45 = vld [vmem:[%s3 + $0x28] sm:$0xff]
  %v46 = vld [vmem:[%s3 + $0x30] sm:$0xff]
  %v47 = vld [vmem:[%s3 + $0x38] sm:$0xff]
  %v48 = vld [vmem:[%s3 + $0x40] sm:$0xff]
  %v49 = vld [vmem:[%s3 + $0x48] sm:$0xff]
  %v50 = vld [vmem:[%s3 + $0x50] sm:$0xff]
  %v51 = vld [vmem:[%s3 + $0x58] sm:$0xff]
  %v52 = vld [vmem:[%s3 + $0x60] sm:$0xff]
  %v53 = vld [vmem:[%s3 + $0x68] sm:$0xff]
  %v54 = vld [vmem:[%s3 + $0x70] sm:$0xff]
  %v55 = vld [vmem:[%s3 + $0x78] sm:$0xff]
  %v56 = vld [vmem:[%s4] sm:$0x3]
  %v58 = vlaneseq
  %v59 = vshrl.u32 %v58, 7
  %v60 = vsub.s32 0, %v59
  %v61 = vrot.slane %v56, %v60
  %v62 = vlaneseq
  %v63 = vshrl.u32 %v62, 7
  %v64 = vsub.s32 1, %v63
  %v65 = vrot.slane %v56, %v64
  %vm68 = vcmask 261120
  %v70 = vsel %vm68, %v20, 0
  %v73 = vsel %vm68, %v21, 0
  %v76 = vsel %vm68, %v22, 0
  %v79 = vsel %vm68, %v23, 0
  %81 = vmatprep.subr.mxu0 %v25
  %82 = vmatpush1.msra.mxu0 %v24
  %83 = vmatprep.subr.mxu0 %v27
  %84 = vmatpush1.msra.mxu0 %v26
  %85 = vmatprep.subr.mxu0 %v29
  %86 = vmatpush1.msra.mxu0 %v28
  %87 = vmatprep.subr.mxu0 %v31
  %88 = vmatpush1.msra.mxu0 %v30
  %89 = vmatprep.subr.mxu0 0.0
  %90 = vmatpush1.msra.mxu0 0.0
  %91 = vmatprep.subr.mxu0 0.0
  %92 = vmatpush1.msra.mxu0 0.0
  %93 = vmatprep.subr.mxu0 0.0
  %94 = vmatpush1.msra.mxu0 0.0
  %95 = vmatprep.subr.mxu0 0.0
  %96 = vmatpush1.msra.mxu0 0.0
  %97 = vmatprep.subr.mxu0 0.0
  %98 = vmatpush1.msra.mxu0 0.0
  %99 = vmatprep.subr.mxu0 0.0
  %100 = vmatpush1.msra.mxu0 0.0
  %101 = vmatprep.subr.mxu0 0.0
  %102 = vmatpush1.msra.mxu0 0.0
  %103 = vmatprep.subr.mxu0 0.0
  %104 = vmatpush1.msra.mxu0 0.0
  %105 = vmatprep.subr.mxu0 0.0
  %106 = vmatpush1.msra.mxu0 0.0
  %107 = vmatprep.subr.mxu0 0.0
  %108 = vmatpush1.msra.mxu0 0.0
  %109 = vmatprep.subr.mxu0 0.0
  %110 = vmatpush1.msra.mxu0 0.0
  %111 = vmatprep.subr.mxu0 0.0
  %112 = vmatpush1.msra.mxu0 0.0
  %113 = vmatprep.subr.mxu0 0.0
  %114 = vmatpush1.msra.mxu0 0.0
  %115 = vmatprep.subr.mxu0 0.0
  %116 = vmatpush1.msra.mxu0 0.0
  %117 = vmatprep.subr.mxu0 0.0
  %118 = vmatpush1.msra.mxu0 0.0
  %119 = vmatprep.subr.mxu0 0.0
  %120 = vmatpush1.msra.mxu0 0.0
  %121 = vmatprep.subr.mxu0 0.0
  %122 = vmatpush1.msra.mxu0 0.0
  %123 = vmatprep.subr.mxu0 0.0
  %124 = vmatpush1.msra.mxu0 0.0
  %125 = vmatprep.subr.mxu0 0.0
  %126 = vmatpush1.msra.mxu0 0.0
  %127 = vmatprep.subr.mxu0 0.0
  %128 = vmatpush1.msra.mxu0 0.0
  %129 = vmatprep.subr.mxu0 0.0
  %130 = vmatpush1.msra.mxu0 0.0
  %131 = vmatprep.subr.mxu0 0.0
  %132 = vmatpush1.msra.mxu0 0.0
  %133 = vmatprep.subr.mxu0 0.0
  %134 = vmatpush1.msra.mxu0 0.0
  %135 = vmatprep.subr.mxu0 0.0
  %136 = vmatpush1.msra.mxu0 0.0
  %137 = vmatprep.subr.mxu0 0.0
  %138 = vmatpush1.msra.mxu0 0.0
  %139 = vmatprep.subr.mxu0 0.0
  %140 = vmatpush1.msra.mxu0 0.0
  %141 = vmatprep.subr.mxu0 0.0
  %142 = vmatpush1.msra.mxu0 0.0
  %143 = vmatprep.subr.mxu0 0.0
  %144 = vmatpush1.msra.mxu0 0.0
  %145 = vmatprep.mubr.f32.mxu0 0.0
  %146 = vmatmul.mubr.f32.gmra.mrb[0].mxu0 %v70
  %v147 = vpop.f32.mrb[0].mxu0
  %v148 = vadd.f32 %v61, %v147
  %v149 = vpop.f32.mrb[0].mxu0
  %v150 = vadd.f32 %v65, %v149
  %151 = vmatprep.mubr.f32.mxu0 0.0
  %152 = vmatmul.mubr.f32.gmra.mrb[0].mxu0 %v73
  %v153 = vpop.f32.mrb[0].mxu0
  %v154 = vadd.f32 %v61, %v153
  %v155 = vpop.f32.mrb[0].mxu0
  %v156 = vadd.f32 %v65, %v155
  %157 = vmatprep.mubr.f32.mxu0 0.0
  %158 = vmatmul.mubr.f32.gmra.mrb[0].mxu0 %v76
  %v159 = vpop.f32.mrb[0].mxu0
  %v160 = vadd.f32 %v61, %v159
  %v161 = vpop.f32.mrb[0].mxu0
  %v162 = vadd.f32 %v65, %v161
  %163 = vmatprep.mubr.f32.mxu0 0.0
  %164 = vmatmul.mubr.f32.gmra.mrb[0].mxu0 %v79
  %v165 = vpop.f32.mrb[0].mxu0
  %v166 = vadd.f32 %v61, %v165
  %v167 = vpop.f32.mrb[0].mxu0
  %v168 = vadd.f32 %v65, %v167
  %169 = vdwg.mxu0
  %170 = vmatprep.subr.mxu0 %v33
  %171 = vmatpush1.msra.mxu0 %v32
  %172 = vmatprep.subr.mxu0 %v35
  %173 = vmatpush1.msra.mxu0 %v34
  %174 = vmatprep.subr.mxu0 %v37
  %175 = vmatpush1.msra.mxu0 %v36
  %176 = vmatprep.subr.mxu0 %v39
  %177 = vmatpush1.msra.mxu0 %v38
  %178 = vmatprep.subr.mxu0 0.0
  %179 = vmatpush1.msra.mxu0 0.0
  %180 = vmatprep.subr.mxu0 0.0
  %181 = vmatpush1.msra.mxu0 0.0
  %182 = vmatprep.subr.mxu0 0.0
  %183 = vmatpush1.msra.mxu0 0.0
  %184 = vmatprep.subr.mxu0 0.0
  %185 = vmatpush1.msra.mxu0 0.0
  %186 = vmatprep.subr.mxu0 0.0
  %187 = vmatpush1.msra.mxu0 0.0
  %188 = vmatprep.subr.mxu0 0.0
  %189 = vmatpush1.msra.mxu0 0.0
  %190 = vmatprep.subr.mxu0 0.0
  %191 = vmatpush1.msra.mxu0 0.0
  %192 = vmatprep.subr.mxu0 0.0
  %193 = vmatpush1.msra.mxu0 0.0
  %194 = vmatprep.subr.mxu0 0.0
  %195 = vmatpush1.msra.mxu0 0.0
  %196 = vmatprep.subr.mxu0 0.0
  %197 = vmatpush1.msra.mxu0 0.0
  %198 = vmatprep.subr.mxu0 0.0
  %199 = vmatpush1.msra.mxu0 0.0
  %200 = vmatprep.subr.mxu0 0.0
  %201 = vmatpush1.msra.mxu0 0.0
  %202 = vmatprep.subr.mxu0 0.0
  %203 = vmatpush1.msra.mxu0 0.0
  %204 = vmatprep.subr.mxu0 0.0
  %205 = vmatpush1.msra.mxu0 0.0
  %206 = vmatprep.subr.mxu0 0.0
  %207 = vmatpush1.msra.mxu0 0.0
  %208 = vmatprep.subr.mxu0 0.0
  %209 = vmatpush1.msra.mxu0 0.0
  %210 = vmatprep.subr.mxu0 0.0
  %211 = vmatpush1.msra.mxu0 0.0
  %212 = vmatprep.subr.mxu0 0.0
  %213 = vmatpush1.msra.mxu0 0.0
  %214 = vmatprep.subr.mxu0 0.0
  %215 = vmatpush1.msra.mxu0 0.0
  %216 = vmatprep.subr.mxu0 0.0
  %217 = vmatpush1.msra.mxu0 0.0
  %218 = vmatprep.subr.mxu0 0.0
  %219 = vmatpush1.msra.mxu0 0.0
  %220 = vmatprep.subr.mxu0 0.0
  %221 = vmatpush1.msra.mxu0 0.0
  %222 = vmatprep.subr.mxu0 0.0
  %223 = vmatpush1.msra.mxu0 0.0
  %224 = vmatprep.subr.mxu0 0.0
  %225 = vmatpush1.msra.mxu0 0.0
  %226 = vmatprep.subr.mxu0 0.0
  %227 = vmatpush1.msra.mxu0 0.0
  %228 = vmatprep.subr.mxu0 0.0
  %229 = vmatpush1.msra.mxu0 0.0
  %230 = vmatprep.subr.mxu0 0.0
  %231 = vmatpush1.msra.mxu0 0.0
  %232 = vmatprep.subr.mxu0 0.0
  %233 = vmatpush1.msra.mxu0 0.0
  %234 = vmatprep.mubr.f32.mxu0 0.0
  %235 = vmatmul.mubr.f32.gmra.mrb[0].mxu0 %v70
  %v236 = vpop.f32.mrb[0].mxu0
  %v237 = vadd.f32 0.0, %v236
  %v238 = vpop.f32.mrb[0].mxu0
  %v239 = vadd.f32 0.0, %v238
  %240 = vmatprep.mubr.f32.mxu0 0.0
  %241 = vmatmul.mubr.f32.gmra.mrb[0].mxu0 %v73
  %v242 = vpop.f32.mrb[0].mxu0
  %v243 = vadd.f32 0.0, %v242
  %v244 = vpop.f32.mrb[0].mxu0
  %v245 = vadd.f32 0.0, %v244
  %246 = vmatprep.mubr.f32.mxu0 0.0
  %247 = vmatmul.mubr.f32.gmra.mrb[0].mxu0 %v76
  %v248 = vpop.f32.mrb[0].mxu0
  %v249 = vadd.f32 0.0, %v248
  %v250 = vpop.f32.mrb[0].mxu0
  %v251 = vadd.f32 0.0, %v250
  %252 = vmatprep.mubr.f32.mxu0 0.0
  %253 = vmatmul.mubr.f32.gmra.mrb[0].mxu0 %v79
  %v254 = vpop.f32.mrb[0].mxu0
  %v255 = vadd.f32 0.0, %v254
  %v256 = vpop.f32.mrb[0].mxu0
  %v257 = vadd.f32 0.0, %v256
  %258 = vdwg.mxu0
  %v261 = vrot.slane %v255, 4
  %v262 = vrot.slane %v257, 4
  %v265 = vadd.f32 %v148, %v261
  %v266 = vadd.f32 %v150, %v262
  %vm267 = vcmask 523264
  %v269 = vsel %vm267, 0.0, 0
  %271 = vmatprep.subr.mxu0 %v41
  %272 = vmatpush1.msra.mxu0 %v40
  %273 = vmatprep.subr.mxu0 %v43
  %274 = vmatpush1.msra.mxu0 %v42
  %275 = vmatprep.subr.mxu0 %v45
  %276 = vmatpush1.msra.mxu0 %v44
  %277 = vmatprep.subr.mxu0 %v47
  %278 = vmatpush1.msra.mxu0 %v46
  %279 = vmatprep.subr.mxu0 %v49
  %280 = vmatpush1.msra.mxu0 %v48
  %281 = vmatprep.subr.mxu0 %v51
  %282 = vmatpush1.msra.mxu0 %v50
  %283 = vmatprep.subr.mxu0 %v53
  %284 = vmatpush1.msra.mxu0 %v52
  %285 = vmatprep.subr.mxu0 %v55
  %286 = vmatpush1.msra.mxu0 %v54
  %287 = vmatprep.subr.mxu0 0.0
  %288 = vmatpush1.msra.mxu0 0.0
  %289 = vmatprep.subr.mxu0 0.0
  %290 = vmatpush1.msra.mxu0 0.0
  %291 = vmatprep.subr.mxu0 0.0
  %292 = vmatpush1.msra.mxu0 0.0
  %293 = vmatprep.subr.mxu0 0.0
  %294 = vmatpush1.msra.mxu0 0.0
  %295 = vmatprep.subr.mxu0 0.0
  %296 = vmatpush1.msra.mxu0 0.0
  %297 = vmatprep.subr.mxu0 0.0
  %298 = vmatpush1.msra.mxu0 0.0
  %299 = vmatprep.subr.mxu0 0.0
  %300 = vmatpush1.msra.mxu0 0.0
  %301 = vmatprep.subr.mxu0 0.0
  %302 = vmatpush1.msra.mxu0 0.0
  %303 = vmatprep.subr.mxu0 0.0
  %304 = vmatpush1.msra.mxu0 0.0
  %305 = vmatprep.subr.mxu0 0.0
  %306 = vmatpush1.msra.mxu0 0.0
  %307 = vmatprep.subr.mxu0 0.0
  %308 = vmatpush1.msra.mxu0 0.0
  %309 = vmatprep.subr.mxu0 0.0
  %310 = vmatpush1.msra.mxu0 0.0
  %311 = vmatprep.subr.mxu0 0.0
  %312 = vmatpush1.msra.mxu0 0.0
  %313 = vmatprep.subr.mxu0 0.0
  %314 = vmatpush1.msra.mxu0 0.0
  %315 = vmatprep.subr.mxu0 0.0
  %316 = vmatpush1.msra.mxu0 0.0
  %317 = vmatprep.subr.mxu0 0.0
  %318 = vmatpush1.msra.mxu0 0.0
  %319 = vmatprep.subr.mxu0 0.0
  %320 = vmatpush1.msra.mxu0 0.0
  %321 = vmatprep.subr.mxu0 0.0
  %322 = vmatpush1.msra.mxu0 0.0
  %323 = vmatprep.subr.mxu0 0.0
  %324 = vmatpush1.msra.mxu0 0.0
  %325 = vmatprep.subr.mxu0 0.0
  %326 = vmatpush1.msra.mxu0 0.0
  %327 = vmatprep.subr.mxu0 0.0
  %328 = vmatpush1.msra.mxu0 0.0
  %329 = vmatprep.subr.mxu0 0.0
  %330 = vmatpush1.msra.mxu0 0.0
  %331 = vmatprep.subr.mxu0 0.0
  %332 = vmatpush1.msra.mxu0 0.0
  %333 = vmatprep.subr.mxu0 0.0
  %334 = vmatpush1.msra.mxu0 0.0
  %335 = vmatprep.mubr.f32.mxu0 0.0
  %336 = vmatmul.mubr.f32.gmra.mrb[0].mxu0 %v269
  %v337 = vpop.f32.mrb[0].mxu0
  %v338 = vadd.f32 0.0, %v337
  %v339 = vpop.f32.mrb[0].mxu0
  %v340 = vadd.f32 0.0, %v339
  %341 = vdwg.mxu0
  %v342 = vadd.f32 %v265, %v338
  %v343 = vadd.f32 %v266, %v340
  %v344 = vsub.f32 0.0, %v342
  %v345 = vmul.f32 %v344, 1.442695
  %v346 = vpow.pop %v345
  %v347 = vadd.f32 %v346, 1.0
  %v348 = vrcp.pop %v347
  %v349 = vtanh.pop %v343
  %v350 = vsub.f32 0.0, %v343
  %v351 = vmul.f32 %v350, 1.442695
  %v352 = vpow.pop %v351
  %v353 = vadd.f32 %v352, 1.0
  %v354 = vrcp.pop %v353
  %v355 = vmul.f32 %v348, 0.0
  %v356 = vmul.f32 %v348, %v349
  %358 = vrot.lane.b32.xlu0 %v356, 64
  %v359 = vpop.permute.xlu0 %358
  %v361 = vadd.f32 %v355, %v359
  %v362 = vtanh.pop %v361
  %v363 = vmul.f32 %v354, %v362
  %365 = vrot.lane.b32.xlu0 %v363, 64
  %v366 = vpop.permute.xlu0 %365
  %v367 = vsel %vm267, %v366, 0
  %369 = vmatprep.subr.mxu0 %v41
  %370 = vmatpush1.msra.mxu0 %v40
  %371 = vmatprep.subr.mxu0 %v43
  %372 = vmatpush1.msra.mxu0 %v42
  %373 = vmatprep.subr.mxu0 %v45
  %374 = vmatpush1.msra.mxu0 %v44
  %375 = vmatprep.subr.mxu0 %v47
  %376 = vmatpush1.msra.mxu0 %v46
  %377 = vmatprep.subr.mxu0 %v49
  %378 = vmatpush1.msra.mxu0 %v48
  %379 = vmatprep.subr.mxu0 %v51
  %380 = vmatpush1.msra.mxu0 %v50
  %381 = vmatprep.subr.mxu0 %v53
  %382 = vmatpush1.msra.mxu0 %v52
  %383 = vmatprep.subr.mxu0 %v55
  %384 = vmatpush1.msra.mxu0 %v54
  %385 = vmatprep.subr.mxu0 0.0
  %386 = vmatpush1.msra.mxu0 0.0
  %387 = vmatprep.subr.mxu0 0.0
  %388 = vmatpush1.msra.mxu0 0.0
  %389 = vmatprep.subr.mxu0 0.0
  %390 = vmatpush1.msra.mxu0 0.0
  %391 = vmatprep.subr.mxu0 0.0
  %392 = vmatpush1.msra.mxu0 0.0
  %393 = vmatprep.subr.mxu0 0.0
  %394 = vmatpush1.msra.mxu0 0.0
  %395 = vmatprep.subr.mxu0 0.0
  %396 = vmatpush1.msra.mxu0 0.0
  %397 = vmatprep.subr.mxu0 0.0
  %398 = vmatpush1.msra.mxu0 0.0
  %399 = vmatprep.subr.mxu0 0.0
  %400 = vmatpush1.msra.mxu0 0.0
  %401 = vmatprep.subr.mxu0 0.0
  %402 = vmatpush1.msra.mxu0 0.0
  %403 = vmatprep.subr.mxu0 0.0
  %404 = vmatpush1.msra.mxu0 0.0
  %405 = vmatprep.subr.mxu0 0.0
  %406 = vmatpush1.msra.mxu0 0.0
  %407 = vmatprep.subr.mxu0 0.0
  %408 = vmatpush1.msra.mxu0 0.0
  %409 = vmatprep.subr.mxu0 0.0
  %410 = vmatpush1.msra.mxu0 0.0
  %411 = vmatprep.subr.mxu0 0.0
  %412 = vmatpush1.msra.mxu0 0.0
  %413 = vmatprep.subr.mxu0 0.0
  %414 = vmatpush1.msra.mxu0 0.0
  %415 = vmatprep.subr.mxu0 0.0
  %416 = vmatpush1.msra.mxu0 0.0
  %417 = vmatprep.subr.mxu0 0.0
  %418 = vmatpush1.msra.mxu0 0.0
  %419 = vmatprep.subr.mxu0 0.0
  %420 = vmatpush1.msra.mxu0 0.0
  %421 = vmatprep.subr.mxu0 0.0
  %422 = vmatpush1.msra.mxu0 0.0
  %423 = vmatprep.subr.mxu0 0.0
  %424 = vmatpush1.msra.mxu0 0.0
  %425 = vmatprep.subr.mxu0 0.0
  %426 = vmatpush1.msra.mxu0 0.0
  %427 = vmatprep.subr.mxu0 0.0
  %428 = vmatpush1.msra.mxu0 0.0
  %429 = vmatprep.subr.mxu0 0.0
  %430 = vmatpush1.msra.mxu0 0.0
  %431 = vmatprep.subr.mxu0 0.0
  %432 = vmatpush1.msra.mxu0 0.0
  %433 = vmatprep.mubr.f32.mxu0 0.0
  %434 = vmatmul.mubr.f32.gmra.mrb[0].mxu0 %v367
  %v435 = vpop.f32.mrb[0].mxu0
  %v436 = vadd.f32 0.0, %v435
  %v437 = vpop.f32.mrb[0].mxu0
  %v438 = vadd.f32 0.0, %v437
  %439 = vdwg.mxu0
  %v442 = vrot.slane %v436, 4
  %v443 = vrot.slane %v438, 4
  %v446 = vadd.f32 %v265, %v442
  %v447 = vadd.f32 %v266, %v443
  %v448 = vsub.f32 0.0, %v446
  %v449 = vmul.f32 %v448, 1.442695
  %v450 = vpow.pop %v449
  %v451 = vadd.f32 %v450, 1.0
  %v452 = vrcp.pop %v451
  %v453 = vtanh.pop %v447
  %v454 = vsub.f32 0.0, %v447
  %v455 = vmul.f32 %v454, 1.442695
  %v456 = vpow.pop %v455
  %v457 = vadd.f32 %v456, 1.0
  %v458 = vrcp.pop %v457
  %v460 = vrot.slane %v361, 4
  %v462 = vmul.f32 %v452, %v460
  %v463 = vmul.f32 %v452, %v453
  %465 = vrot.lane.b32.xlu0 %v463, 64
  %v466 = vpop.permute.xlu0 %465
  %v468 = vadd.f32 %v462, %v466
  %v469 = vtanh.pop %v468
  %v470 = vmul.f32 %v458, %v469
  %v473 = vrot.slane %v249, 4
  %v474 = vrot.slane %v251, 4
  %v477 = vadd.f32 %v154, %v473
  %v478 = vadd.f32 %v156, %v474
  %v480 = vrot.slane %v470, 4
  %481 = vrot.lane.b32.xlu0 %v480, 64
  %v482 = vpop.permute.xlu0 %481
  %v483 = vsel %vm267, %v482, 0
  %485 = vmatprep.subr.mxu0 %v41
  %486 = vmatpush1.msra.mxu0 %v40
  %487 = vmatprep.subr.mxu0 %v43
  %488 = vmatpush1.msra.mxu0 %v42
  %489 = vmatprep.subr.mxu0 %v45
  %490 = vmatpush1.msra.mxu0 %v44
  %491 = vmatprep.subr.mxu0 %v47
  %492 = vmatpush1.msra.mxu0 %v46
  %493 = vmatprep.subr.mxu0 %v49
  %494 = vmatpush1.msra.mxu0 %v48
  %495 = vmatprep.subr.mxu0 %v51
  %496 = vmatpush1.msra.mxu0 %v50
  %497 = vmatprep.subr.mxu0 %v53
  %498 = vmatpush1.msra.mxu0 %v52
  %499 = vmatprep.subr.mxu0 %v55
  %500 = vmatpush1.msra.mxu0 %v54
  %501 = vmatprep.subr.mxu0 0.0
  %502 = vmatpush1.msra.mxu0 0.0
  %503 = vmatprep.subr.mxu0 0.0
  %504 = vmatpush1.msra.mxu0 0.0
  %505 = vmatprep.subr.mxu0 0.0
  %506 = vmatpush1.msra.mxu0 0.0
  %507 = vmatprep.subr.mxu0 0.0
  %508 = vmatpush1.msra.mxu0 0.0
  %509 = vmatprep.subr.mxu0 0.0
  %510 = vmatpush1.msra.mxu0 0.0
  %511 = vmatprep.subr.mxu0 0.0
  %512 = vmatpush1.msra.mxu0 0.0
  %513 = vmatprep.subr.mxu0 0.0
  %514 = vmatpush1.msra.mxu0 0.0
  %515 = vmatprep.subr.mxu0 0.0
  %516 = vmatpush1.msra.mxu0 0.0
  %517 = vmatprep.subr.mxu0 0.0
  %518 = vmatpush1.msra.mxu0 0.0
  %519 = vmatprep.subr.mxu0 0.0
  %520 = vmatpush1.msra.mxu0 0.0
  %521 = vmatprep.subr.mxu0 0.0
  %522 = vmatpush1.msra.mxu0 0.0
  %523 = vmatprep.subr.mxu0 0.0
  %524 = vmatpush1.msra.mxu0 0.0
  %525 = vmatprep.subr.mxu0 0.0
  %526 = vmatpush1.msra.mxu0 0.0
  %527 = vmatprep.subr.mxu0 0.0
  %528 = vmatpush1.msra.mxu0 0.0
  %529 = vmatprep.subr.mxu0 0.0
  %530 = vmatpush1.msra.mxu0 0.0
  %531 = vmatprep.subr.mxu0 0.0
  %532 = vmatpush1.msra.mxu0 0.0
  %533 = vmatprep.subr.mxu0 0.0
  %534 = vmatpush1.msra.mxu0 0.0
  %535 = vmatprep.subr.mxu0 0.0
  %536 = vmatpush1.msra.mxu0 0.0
  %537 = vmatprep.subr.mxu0 0.0
  %538 = vmatpush1.msra.mxu0 0.0
  %539 = vmatprep.subr.mxu0 0.0
  %540 = vmatpush1.msra.mxu0 0.0
  %541 = vmatprep.subr.mxu0 0.0
  %542 = vmatpush1.msra.mxu0 0.0
  %543 = vmatprep.subr.mxu0 0.0
  %544 = vmatpush1.msra.mxu0 0.0
  %545 = vmatprep.subr.mxu0 0.0
  %546 = vmatpush1.msra.mxu0 0.0
  %547 = vmatprep.subr.mxu0 0.0
  %548 = vmatpush1.msra.mxu0 0.0
  %549 = vmatprep.mubr.f32.mxu0 0.0
  %550 = vmatmul.mubr.f32.gmra.mrb[0].mxu0 %v483
  %v551 = vpop.f32.mrb[0].mxu0
  %v552 = vadd.f32 0.0, %v551
  %v553 = vpop.f32.mrb[0].mxu0
  %v554 = vadd.f32 0.0, %v553
  %555 = vdwg.mxu0
  %v556 = vadd.f32 %v477, %v552
  %v557 = vadd.f32 %v478, %v554
  %v558 = vsub.f32 0.0, %v556
  %v559 = vmul.f32 %v558, 1.442695
  %v560 = vpow.pop %v559
  %v561 = vadd.f32 %v560, 1.0
  %v562 = vrcp.pop %v561
  %v563 = vtanh.pop %v557
  %v564 = vsub.f32 0.0, %v557
  %v565 = vmul.f32 %v564, 1.442695
  %v566 = vpow.pop %v565
  %v567 = vadd.f32 %v566, 1.0
  %v568 = vrcp.pop %v567
  %v570 = vrot.slane %v468, 4
  %v572 = vmul.f32 %v562, %v570
  %v573 = vmul.f32 %v562, %v563
  %575 = vrot.lane.b32.xlu0 %v573, 64
  %v576 = vpop.permute.xlu0 %575
  %v578 = vadd.f32 %v572, %v576
  %v579 = vtanh.pop %v578
  %v580 = vmul.f32 %v568, %v579
  %582 = vrot.lane.b32.xlu0 %v580, 64
  %v583 = vpop.permute.xlu0 %582
  %v584 = vsel %vm267, %v583, 0
  %586 = vmatprep.subr.mxu0 %v41
  %587 = vmatpush1.msra.mxu0 %v40
  %588 = vmatprep.subr.mxu0 %v43
  %589 = vmatpush1.msra.mxu0 %v42
  %590 = vmatprep.subr.mxu0 %v45
  %591 = vmatpush1.msra.mxu0 %v44
  %592 = vmatprep.subr.mxu0 %v47
  %593 = vmatpush1.msra.mxu0 %v46
  %594 = vmatprep.subr.mxu0 %v49
  %595 = vmatpush1.msra.mxu0 %v48
  %596 = vmatprep.subr.mxu0 %v51
  %597 = vmatpush1.msra.mxu0 %v50
  %598 = vmatprep.subr.mxu0 %v53
  %599 = vmatpush1.msra.mxu0 %v52
  %600 = vmatprep.subr.mxu0 %v55
  %601 = vmatpush1.msra.mxu0 %v54
  %602 = vmatprep.subr.mxu0 0.0
  %603 = vmatpush1.msra.mxu0 0.0
  %604 = vmatprep.subr.mxu0 0.0
  %605 = vmatpush1.msra.mxu0 0.0
  %606 = vmatprep.subr.mxu0 0.0
  %607 = vmatpush1.msra.mxu0 0.0
  %608 = vmatprep.subr.mxu0 0.0
  %609 = vmatpush1.msra.mxu0 0.0
  %610 = vmatprep.subr.mxu0 0.0
  %611 = vmatpush1.msra.mxu0 0.0
  %612 = vmatprep.subr.mxu0 0.0
  %613 = vmatpush1.msra.mxu0 0.0
  %614 = vmatprep.subr.mxu0 0.0
  %615 = vmatpush1.msra.mxu0 0.0
  %616 = vmatprep.subr.mxu0 0.0
  %617 = vmatpush1.msra.mxu0 0.0
  %618 = vmatprep.subr.mxu0 0.0
  %619 = vmatpush1.msra.mxu0 0.0
  %620 = vmatprep.subr.mxu0 0.0
  %621 = vmatpush1.msra.mxu0 0.0
  %622 = vmatprep.subr.mxu0 0.0
  %623 = vmatpush1.msra.mxu0 0.0
  %624 = vmatprep.subr.mxu0 0.0
  %625 = vmatpush1.msra.mxu0 0.0
  %626 = vmatprep.subr.mxu0 0.0
  %627 = vmatpush1.msra.mxu0 0.0
  %628 = vmatprep.subr.mxu0 0.0
  %629 = vmatpush1.msra.mxu0 0.0
  %630 = vmatprep.subr.mxu0 0.0
  %631 = vmatpush1.msra.mxu0 0.0
  %632 = vmatprep.subr.mxu0 0.0
  %633 = vmatpush1.msra.mxu0 0.0
  %634 = vmatprep.subr.mxu0 0.0
  %635 = vmatpush1.msra.mxu0 0.0
  %636 = vmatprep.subr.mxu0 0.0
  %637 = vmatpush1.msra.mxu0 0.0
  %638 = vmatprep.subr.mxu0 0.0
  %639 = vmatpush1.msra.mxu0 0.0
  %640 = vmatprep.subr.mxu0 0.0
  %641 = vmatpush1.msra.mxu0 0.0
  %642 = vmatprep.subr.mxu0 0.0
  %643 = vmatpush1.msra.mxu0 0.0
  %644 = vmatprep.subr.mxu0 0.0
  %645 = vmatpush1.msra.mxu0 0.0
  %646 = vmatprep.subr.mxu0 0.0
  %647 = vmatpush1.msra.mxu0 0.0
  %648 = vmatprep.subr.mxu0 0.0
  %649 = vmatpush1.msra.mxu0 0.0
  %650 = vmatprep.mubr.f32.mxu0 0.0
  %651 = vmatmul.mubr.f32.gmra.mrb[0].mxu0 %v584
  %v652 = vpop.f32.mrb[0].mxu0
  %v653 = vadd.f32 0.0, %v652
  %v654 = vpop.f32.mrb[0].mxu0
  %v655 = vadd.f32 0.0, %v654
  %656 = vdwg.mxu0
  %v659 = vrot.slane %v653, 4
  %v660 = vrot.slane %v655, 4
  %v663 = vadd.f32 %v477, %v659
  %v664 = vadd.f32 %v478, %v660
  %v665 = vsub.f32 0.0, %v663
  %v666 = vmul.f32 %v665, 1.442695
  %v667 = vpow.pop %v666
  %v668 = vadd.f32 %v667, 1.0
  %v669 = vrcp.pop %v668
  %v670 = vtanh.pop %v664
  %v671 = vsub.f32 0.0, %v664
  %v672 = vmul.f32 %v671, 1.442695
  %v673 = vpow.pop %v672
  %v674 = vadd.f32 %v673, 1.0
  %v675 = vrcp.pop %v674
  %v677 = vrot.slane %v578, 4
  %v679 = vmul.f32 %v669, %v677
  %v680 = vmul.f32 %v669, %v670
  %682 = vrot.lane.b32.xlu0 %v680, 64
  %v683 = vpop.permute.xlu0 %682
  %v685 = vadd.f32 %v679, %v683
  %v686 = vtanh.pop %v685
  %v687 = vmul.f32 %v675, %v686
  %v690 = vrot.slane %v243, 4
  %v691 = vrot.slane %v245, 4
  %v694 = vadd.f32 %v160, %v690
  %v695 = vadd.f32 %v162, %v691
  %v697 = vrot.slane %v687, 4
  %698 = vrot.lane.b32.xlu0 %v697, 64
  %v699 = vpop.permute.xlu0 %698
  %v700 = vsel %vm267, %v699, 0
  %702 = vmatprep.subr.mxu0 %v41
  %703 = vmatpush1.msra.mxu0 %v40
  %704 = vmatprep.subr.mxu0 %v43
  %705 = vmatpush1.msra.mxu0 %v42
  %706 = vmatprep.subr.mxu0 %v45
  %707 = vmatpush1.msra.mxu0 %v44
  %708 = vmatprep.subr.mxu0 %v47
  %709 = vmatpush1.msra.mxu0 %v46
  %710 = vmatprep.subr.mxu0 %v49
  %711 = vmatpush1.msra.mxu0 %v48
  %712 = vmatprep.subr.mxu0 %v51
  %713 = vmatpush1.msra.mxu0 %v50
  %714 = vmatprep.subr.mxu0 %v53
  %715 = vmatpush1.msra.mxu0 %v52
  %716 = vmatprep.subr.mxu0 %v55
  %717 = vmatpush1.msra.mxu0 %v54
  %718 = vmatprep.subr.mxu0 0.0
  %719 = vmatpush1.msra.mxu0 0.0
  %720 = vmatprep.subr.mxu0 0.0
  %721 = vmatpush1.msra.mxu0 0.0
  %722 = vmatprep.subr.mxu0 0.0
  %723 = vmatpush1.msra.mxu0 0.0
  %724 = vmatprep.subr.mxu0 0.0
  %725 = vmatpush1.msra.mxu0 0.0
  %726 = vmatprep.subr.mxu0 0.0
  %727 = vmatpush1.msra.mxu0 0.0
  %728 = vmatprep.subr.mxu0 0.0
  %729 = vmatpush1.msra.mxu0 0.0
  %730 = vmatprep.subr.mxu0 0.0
  %731 = vmatpush1.msra.mxu0 0.0
  %732 = vmatprep.subr.mxu0 0.0
  %733 = vmatpush1.msra.mxu0 0.0
  %734 = vmatprep.subr.mxu0 0.0
  %735 = vmatpush1.msra.mxu0 0.0
  %736 = vmatprep.subr.mxu0 0.0
  %737 = vmatpush1.msra.mxu0 0.0
  %738 = vmatprep.subr.mxu0 0.0
  %739 = vmatpush1.msra.mxu0 0.0
  %740 = vmatprep.subr.mxu0 0.0
  %741 = vmatpush1.msra.mxu0 0.0
  %742 = vmatprep.subr.mxu0 0.0
  %743 = vmatpush1.msra.mxu0 0.0
  %744 = vmatprep.subr.mxu0 0.0
  %745 = vmatpush1.msra.mxu0 0.0
  %746 = vmatprep.subr.mxu0 0.0
  %747 = vmatpush1.msra.mxu0 0.0
  %748 = vmatprep.subr.mxu0 0.0
  %749 = vmatpush1.msra.mxu0 0.0
  %750 = vmatprep.subr.mxu0 0.0
  %751 = vmatpush1.msra.mxu0 0.0
  %752 = vmatprep.subr.mxu0 0.0
  %753 = vmatpush1.msra.mxu0 0.0
  %754 = vmatprep.subr.mxu0 0.0
  %755 = vmatpush1.msra.mxu0 0.0
  %756 = vmatprep.subr.mxu0 0.0
  %757 = vmatpush1.msra.mxu0 0.0
  %758 = vmatprep.subr.mxu0 0.0
  %759 = vmatpush1.msra.mxu0 0.0
  %760 = vmatprep.subr.mxu0 0.0
  %761 = vmatpush1.msra.mxu0 0.0
  %762 = vmatprep.subr.mxu0 0.0
  %763 = vmatpush1.msra.mxu0 0.0
  %764 = vmatprep.subr.mxu0 0.0
  %765 = vmatpush1.msra.mxu0 0.0
  %766 = vmatprep.mubr.f32.mxu0 0.0
  %767 = vmatmul.mubr.f32.gmra.mrb[0].mxu0 %v700
  %v768 = vpop.f32.mrb[0].mxu0
  %v769 = vadd.f32 0.0, %v768
  %v770 = vpop.f32.mrb[0].mxu0
  %v771 = vadd.f32 0.0, %v770
  %772 = vdwg.mxu0
  %v773 = vadd.f32 %v694, %v769
  %v774 = vadd.f32 %v695, %v771
  %v775 = vsub.f32 0.0, %v773
  %v776 = vmul.f32 %v775, 1.442695
  %v777 = vpow.pop %v776
  %v778 = vadd.f32 %v777, 1.0
  %v779 = vrcp.pop %v778
  %v780 = vtanh.pop %v774
  %v781 = vsub.f32 0.0, %v774
  %v782 = vmul.f32 %v781, 1.442695
  %v783 = vpow.pop %v782
  %v784 = vadd.f32 %v783, 1.0
  %v785 = vrcp.pop %v784
  %v787 = vrot.slane %v685, 4
  %v789 = vmul.f32 %v779, %v787
  %v790 = vmul.f32 %v779, %v780
  %792 = vrot.lane.b32.xlu0 %v790, 64
  %v793 = vpop.permute.xlu0 %792
  %v795 = vadd.f32 %v789, %v793
  %v796 = vtanh.pop %v795
  %v797 = vmul.f32 %v785, %v796
  %799 = vrot.lane.b32.xlu0 %v797, 64
  %v800 = vpop.permute.xlu0 %799
  %v801 = vsel %vm267, %v800, 0
  %803 = vmatprep.subr.mxu0 %v41
  %804 = vmatpush1.msra.mxu0 %v40
  %805 = vmatprep.subr.mxu0 %v43
  %806 = vmatpush1.msra.mxu0 %v42
  %807 = vmatprep.subr.mxu0 %v45
  %808 = vmatpush1.msra.mxu0 %v44
  %809 = vmatprep.subr.mxu0 %v47
  %810 = vmatpush1.msra.mxu0 %v46
  %811 = vmatprep.subr.mxu0 %v49
  %812 = vmatpush1.msra.mxu0 %v48
  %813 = vmatprep.subr.mxu0 %v51
  %814 = vmatpush1.msra.mxu0 %v50
  %815 = vmatprep.subr.mxu0 %v53
  %816 = vmatpush1.msra.mxu0 %v52
  %817 = vmatprep.subr.mxu0 %v55
  %818 = vmatpush1.msra.mxu0 %v54
  %819 = vmatprep.subr.mxu0 0.0
  %820 = vmatpush1.msra.mxu0 0.0
  %821 = vmatprep.subr.mxu0 0.0
  %822 = vmatpush1.msra.mxu0 0.0
  %823 = vmatprep.subr.mxu0 0.0
  %824 = vmatpush1.msra.mxu0 0.0
  %825 = vmatprep.subr.mxu0 0.0
  %826 = vmatpush1.msra.mxu0 0.0
  %827 = vmatprep.subr.mxu0 0.0
  %828 = vmatpush1.msra.mxu0 0.0
  %829 = vmatprep.subr.mxu0 0.0
  %830 = vmatpush1.msra.mxu0 0.0
  %831 = vmatprep.subr.mxu0 0.0
  %832 = vmatpush1.msra.mxu0 0.0
  %833 = vmatprep.subr.mxu0 0.0
  %834 = vmatpush1.msra.mxu0 0.0
  %835 = vmatprep.subr.mxu0 0.0
  %836 = vmatpush1.msra.mxu0 0.0
  %837 = vmatprep.subr.mxu0 0.0
  %838 = vmatpush1.msra.mxu0 0.0
  %839 = vmatprep.subr.mxu0 0.0
  %840 = vmatpush1.msra.mxu0 0.0
  %841 = vmatprep.subr.mxu0 0.0
  %842 = vmatpush1.msra.mxu0 0.0
  %843 = vmatprep.subr.mxu0 0.0
  %844 = vmatpush1.msra.mxu0 0.0
  %845 = vmatprep.subr.mxu0 0.0
  %846 = vmatpush1.msra.mxu0 0.0
  %847 = vmatprep.subr.mxu0 0.0
  %848 = vmatpush1.msra.mxu0 0.0
  %849 = vmatprep.subr.mxu0 0.0
  %850 = vmatpush1.msra.mxu0 0.0
  %851 = vmatprep.subr.mxu0 0.0
  %852 = vmatpush1.msra.mxu0 0.0
  %853 = vmatprep.subr.mxu0 0.0
  %854 = vmatpush1.msra.mxu0 0.0
  %855 = vmatprep.subr.mxu0 0.0
  %856 = vmatpush1.msra.mxu0 0.0
  %857 = vmatprep.subr.mxu0 0.0
  %858 = vmatpush1.msra.mxu0 0.0
  %859 = vmatprep.subr.mxu0 0.0
  %860 = vmatpush1.msra.mxu0 0.0
  %861 = vmatprep.subr.mxu0 0.0
  %862 = vmatpush1.msra.mxu0 0.0
  %863 = vmatprep.subr.mxu0 0.0
  %864 = vmatpush1.msra.mxu0 0.0
  %865 = vmatprep.subr.mxu0 0.0
  %866 = vmatpush1.msra.mxu0 0.0
  %867 = vmatprep.mubr.f32.mxu0 0.0
  %868 = vmatmul.mubr.f32.gmra.mrb[0].mxu0 %v801
  %v869 = vpop.f32.mrb[0].mxu0
  %v870 = vadd.f32 0.0, %v869
  %v871 = vpop.f32.mrb[0].mxu0
  %v872 = vadd.f32 0.0, %v871
  %873 = vdwg.mxu0
  %v876 = vrot.slane %v870, 4
  %v877 = vrot.slane %v872, 4
  %v880 = vadd.f32 %v694, %v876
  %v881 = vadd.f32 %v695, %v877
  %v882 = vsub.f32 0.0, %v880
  %v883 = vmul.f32 %v882, 1.442695
  %v884 = vpow.pop %v883
  %v885 = vadd.f32 %v884, 1.0
  %v886 = vrcp.pop %v885
  %v887 = vtanh.pop %v881
  %v888 = vsub.f32 0.0, %v881
  %v889 = vmul.f32 %v888, 1.442695
  %v890 = vpow.pop %v889
  %v891 = vadd.f32 %v890, 1.0
  %v892 = vrcp.pop %v891
  %v894 = vrot.slane %v795, 4
  %v896 = vmul.f32 %v886, %v894
  %v897 = vmul.f32 %v886, %v887
  %899 = vrot.lane.b32.xlu0 %v897, 64
  %v900 = vpop.permute.xlu0 %899
  %v902 = vadd.f32 %v896, %v900
  %v903 = vtanh.pop %v902
  %v904 = vmul.f32 %v892, %v903
  %v907 = vrot.slane %v237, 4
  %v908 = vrot.slane %v239, 4
  %v911 = vadd.f32 %v166, %v907
  %v912 = vadd.f32 %v168, %v908
  %v914 = vrot.slane %v904, 4
  %915 = vrot.lane.b32.xlu0 %v914, 64
  %v916 = vpop.permute.xlu0 %915
  %v917 = vsel %vm267, %v916, 0
  %919 = vmatprep.subr.mxu0 %v41
  %920 = vmatpush1.msra.mxu0 %v40
  %921 = vmatprep.subr.mxu0 %v43
  %922 = vmatpush1.msra.mxu0 %v42
  %923 = vmatprep.subr.mxu0 %v45
  %924 = vmatpush1.msra.mxu0 %v44
  %925 = vmatprep.subr.mxu0 %v47
  %926 = vmatpush1.msra.mxu0 %v46
  %927 = vmatprep.subr.mxu0 %v49
  %928 = vmatpush1.msra.mxu0 %v48
  %929 = vmatprep.subr.mxu0 %v51
  %930 = vmatpush1.msra.mxu0 %v50
  %931 = vmatprep.subr.mxu0 %v53
  %932 = vmatpush1.msra.mxu0 %v52
  %933 = vmatprep.subr.mxu0 %v55
  %934 = vmatpush1.msra.mxu0 %v54
  %935 = vmatprep.subr.mxu0 0.0
  %936 = vmatpush1.msra.mxu0 0.0
  %937 = vmatprep.subr.mxu0 0.0
  %938 = vmatpush1.msra.mxu0 0.0
  %939 = vmatprep.subr.mxu0 0.0
  %940 = vmatpush1.msra.mxu0 0.0
  %941 = vmatprep.subr.mxu0 0.0
  %942 = vmatpush1.msra.mxu0 0.0
  %943 = vmatprep.subr.mxu0 0.0
  %944 = vmatpush1.msra.mxu0 0.0
  %945 = vmatprep.subr.mxu0 0.0
  %946 = vmatpush1.msra.mxu0 0.0
  %947 = vmatprep.subr.mxu0 0.0
  %948 = vmatpush1.msra.mxu0 0.0
  %949 = vmatprep.subr.mxu0 0.0
  %950 = vmatpush1.msra.mxu0 0.0
  %951 = vmatprep.subr.mxu0 0.0
  %952 = vmatpush1.msra.mxu0 0.0
  %953 = vmatprep.subr.mxu0 0.0
  %954 = vmatpush1.msra.mxu0 0.0
  %955 = vmatprep.subr.mxu0 0.0
  %956 = vmatpush1.msra.mxu0 0.0
  %957 = vmatprep.subr.mxu0 0.0
  %958 = vmatpush1.msra.mxu0 0.0
  %959 = vmatprep.subr.mxu0 0.0
  %960 = vmatpush1.msra.mxu0 0.0
  %961 = vmatprep.subr.mxu0 0.0
  %962 = vmatpush1.msra.mxu0 0.0
  %963 = vmatprep.subr.mxu0 0.0
  %964 = vmatpush1.msra.mxu0 0.0
  %965 = vmatprep.subr.mxu0 0.0
  %966 = vmatpush1.msra.mxu0 0.0
  %967 = vmatprep.subr.mxu0 0.0
  %968 = vmatpush1.msra.mxu0 0.0
  %969 = vmatprep.subr.mxu0 0.0
  %970 = vmatpush1.msra.mxu0 0.0
  %971 = vmatprep.subr.mxu0 0.0
  %972 = vmatpush1.msra.mxu0 0.0
  %973 = vmatprep.subr.mxu0 0.0
  %974 = vmatpush1.msra.mxu0 0.0
  %975 = vmatprep.subr.mxu0 0.0
  %976 = vmatpush1.msra.mxu0 0.0
  %977 = vmatprep.subr.mxu0 0.0
  %978 = vmatpush1.msra.mxu0 0.0
  %979 = vmatprep.subr.mxu0 0.0
  %980 = vmatpush1.msra.mxu0 0.0
  %981 = vmatprep.subr.mxu0 0.0
  %982 = vmatpush1.msra.mxu0 0.0
  %983 = vmatprep.mubr.f32.mxu0 0.0
  %984 = vmatmul.mubr.f32.gmra.mrb[0].mxu0 %v917
  %v985 = vpop.f32.mrb[0].mxu0
  %v986 = vadd.f32 0.0, %v985
  %v987 = vpop.f32.mrb[0].mxu0
  %v988 = vadd.f32 0.0, %v987
  %989 = vdwg.mxu0
  %v990 = vadd.f32 %v911, %v986
  %v991 = vadd.f32 %v912, %v988
  %v992 = vsub.f32 0.0, %v990
  %v993 = vmul.f32 %v992, 1.442695
  %v994 = vpow.pop %v993
  %v995 = vadd.f32 %v994, 1.0
  %v996 = vrcp.pop %v995
  %v997 = vtanh.pop %v991
  %v998 = vsub.f32 0.0, %v991
  %v999 = vmul.f32 %v998, 1.442695
  %v1000 = vpow.pop %v999
  %v1001 = vadd.f32 %v1000, 1.0
  %v1002 = vrcp.pop %v1001
  %v1004 = vrot.slane %v902, 4
  %v1006 = vmul.f32 %v996, %v1004
  %v1007 = vmul.f32 %v996, %v997
  %1009 = vrot.lane.b32.xlu0 %v1007, 64
  %v1010 = vpop.permute.xlu0 %1009
  %v1012 = vadd.f32 %v1006, %v1010
  %v1013 = vtanh.pop %v1012
  %v1014 = vmul.f32 %v1002, %v1013
  %1016 = vrot.lane.b32.xlu0 %v1014, 64
  %v1017 = vpop.permute.xlu0 %1016
  %v1018 = vsel %vm267, %v1017, 0
  %1020 = vmatprep.subr.mxu0 %v41
  %1021 = vmatpush1.msra.mxu0 %v40
  %1022 = vmatprep.subr.mxu0 %v43
  %1023 = vmatpush1.msra.mxu0 %v42
  %1024 = vmatprep.subr.mxu0 %v45
  %1025 = vmatpush1.msra.mxu0 %v44
  %1026 = vmatprep.subr.mxu0 %v47
  %1027 = vmatpush1.msra.mxu0 %v46
  %1028 = vmatprep.subr.mxu0 %v49
  %1029 = vmatpush1.msra.mxu0 %v48
  %1030 = vmatprep.subr.mxu0 %v51
  %1031 = vmatpush1.msra.mxu0 %v50
  %1032 = vmatprep.subr.mxu0 %v53
  %1033 = vmatpush1.msra.mxu0 %v52
  %1034 = vmatprep.subr.mxu0 %v55
  %1035 = vmatpush1.msra.mxu0 %v54
  %1036 = vmatprep.subr.mxu0 0.0
  %1037 = vmatpush1.msra.mxu0 0.0
  %1038 = vmatprep.subr.mxu0 0.0
  %1039 = vmatpush1.msra.mxu0 0.0
  %1040 = vmatprep.subr.mxu0 0.0
  %1041 = vmatpush1.msra.mxu0 0.0
  %1042 = vmatprep.subr.mxu0 0.0
  %1043 = vmatpush1.msra.mxu0 0.0
  %1044 = vmatprep.subr.mxu0 0.0
  %1045 = vmatpush1.msra.mxu0 0.0
  %1046 = vmatprep.subr.mxu0 0.0
  %1047 = vmatpush1.msra.mxu0 0.0
  %1048 = vmatprep.subr.mxu0 0.0
  %1049 = vmatpush1.msra.mxu0 0.0
  %1050 = vmatprep.subr.mxu0 0.0
  %1051 = vmatpush1.msra.mxu0 0.0
  %1052 = vmatprep.subr.mxu0 0.0
  %1053 = vmatpush1.msra.mxu0 0.0
  %1054 = vmatprep.subr.mxu0 0.0
  %1055 = vmatpush1.msra.mxu0 0.0
  %1056 = vmatprep.subr.mxu0 0.0
  %1057 = vmatpush1.msra.mxu0 0.0
  %1058 = vmatprep.subr.mxu0 0.0
  %1059 = vmatpush1.msra.mxu0 0.0
  %1060 = vmatprep.subr.mxu0 0.0
  %1061 = vmatpush1.msra.mxu0 0.0
  %1062 = vmatprep.subr.mxu0 0.0
  %1063 = vmatpush1.msra.mxu0 0.0
  %1064 = vmatprep.subr.mxu0 0.0
  %1065 = vmatpush1.msra.mxu0 0.0
  %1066 = vmatprep.subr.mxu0 0.0
  %1067 = vmatpush1.msra.mxu0 0.0
  %1068 = vmatprep.subr.mxu0 0.0
  %1069 = vmatpush1.msra.mxu0 0.0
  %1070 = vmatprep.subr.mxu0 0.0
  %1071 = vmatpush1.msra.mxu0 0.0
  %1072 = vmatprep.subr.mxu0 0.0
  %1073 = vmatpush1.msra.mxu0 0.0
  %1074 = vmatprep.subr.mxu0 0.0
  %1075 = vmatpush1.msra.mxu0 0.0
  %1076 = vmatprep.subr.mxu0 0.0
  %1077 = vmatpush1.msra.mxu0 0.0
  %1078 = vmatprep.subr.mxu0 0.0
  %1079 = vmatpush1.msra.mxu0 0.0
  %1080 = vmatprep.subr.mxu0 0.0
  %1081 = vmatpush1.msra.mxu0 0.0
  %1082 = vmatprep.subr.mxu0 0.0
  %1083 = vmatpush1.msra.mxu0 0.0
  %1084 = vmatprep.mubr.f32.mxu0 0.0
  %1085 = vmatmul.mubr.f32.gmra.mrb[0].mxu0 %v1018
  %v1086 = vpop.f32.mrb[0].mxu0
  %v1087 = vadd.f32 0.0, %v1086
  %v1088 = vpop.f32.mrb[0].mxu0
  %v1089 = vadd.f32 0.0, %v1088
  %1090 = vdwg.mxu0
  %v1093 = vrot.slane %v1087, 4
  %v1094 = vrot.slane %v1089, 4
  %v1097 = vadd.f32 %v911, %v1093
  %v1098 = vadd.f32 %v912, %v1094
  %v1099 = vsub.f32 0.0, %v1097
  %v1100 = vmul.f32 %v1099, 1.442695
  %v1101 = vpow.pop %v1100
  %v1102 = vadd.f32 %v1101, 1.0
  %v1103 = vrcp.pop %v1102
  %v1104 = vtanh.pop %v1098
  %v1105 = vsub.f32 0.0, %v1098
  %v1106 = vmul.f32 %v1105, 1.442695
  %v1107 = vpow.pop %v1106
  %v1108 = vadd.f32 %v1107, 1.0
  %v1109 = vrcp.pop %v1108
  %v1111 = vrot.slane %v1012, 4
  %v1113 = vmul.f32 %v1103, %v1111
  %v1114 = vmul.f32 %v1103, %v1104
  %1116 = vrot.lane.b32.xlu0 %v1114, 64
  %v1117 = vpop.permute.xlu0 %1116
  %v1119 = vadd.f32 %v1113, %v1117
  %v1120 = vtanh.pop %v1119
  %v1121 = vmul.f32 %v1109, %v1120
  %vm1123 = vcmask 257024
  %1124 = vst.msk [vmem:[%s5] sm:$0xf] %vm1123, %v366
  %vm1125 = vcmask 519424
  %1126 = vst.msk [vmem:[%s5 + $0x1c] sm:$0xf] %vm1125, %v366
  %1127 = vrot.lane.b32.xlu0 %v470, 64
  %v1128 = vpop.permute.xlu0 %1127
  %vm1130 = vcmask 261124
  %1131 = vst.msk [vmem:[%s5] sm:$0xf0] %vm1130, %v1128
  %vm1132 = vcmask 523524
  %1133 = vst.msk [vmem:[%s5 + $0x14] sm:$0xf0] %vm1132, %v1128
  %1135 = vst.msk [vmem:[%s5 + $0x8] sm:$0xf] %vm1123, %v583
  %1136 = vst.msk [vmem:[%s5 + $0x14] sm:$0xf] %vm1125, %v583
  %1137 = vrot.lane.b32.xlu0 %v687, 64
  %v1138 = vpop.permute.xlu0 %1137
  %1140 = vst.msk [vmem:[%s5 + $0x8] sm:$0xf0] %vm1130, %v1138
  %1141 = vst.msk [vmem:[%s5 + $0xc] sm:$0xf0] %vm1132, %v1138
  %1143 = vst.msk [vmem:[%s5 + $0x10] sm:$0xf] %vm1123, %v800
  %1144 = vst.msk [vmem:[%s5 + $0xc] sm:$0xf] %vm1125, %v800
  %1145 = vrot.lane.b32.xlu0 %v904, 64
  %v1146 = vpop.permute.xlu0 %1145
  %1148 = vst.msk [vmem:[%s5 + $0x10] sm:$0xf0] %vm1130, %v1146
  %1149 = vst.msk [vmem:[%s5 + $0x4] sm:$0xf0] %vm1132, %v1146
  %1151 = vst.msk [vmem:[%s5 + $0x18] sm:$0xf] %vm1123, %v1017
  %1152 = vst.msk [vmem:[%s5 + $0x4] sm:$0xf] %vm1125, %v1017
  %1154 = vrot.lane.b32.xlu0 %v1121, 64
  %v1155 = vpop.permute.xlu0 %1154
  %1157 = vst.msk [vmem:[%s5 + $0x18] sm:$0xf0] %vm1130, %v1155
  %1158 = vst.msk [vmem:[%s5 - $0x4] sm:$0xf0] %vm1132, %v1155
  // Predicated region
  $region22: #{esim_forward.3} parent=0 // pred_check
    _
  $region23: #{esim_forward.3} parent=0 // pred_check_branch
    %1160 = sbr.rel (0) target = $region25
  $region24: #{esim_forward.3} parent=0 // pred_region
    _
  $region25: #{esim_forward.3} parent=0 // pred_fallthru
    _
  // Predicated region
  $region26: #{esim_forward.3} parent=0 // pred_check
    _
  $region27: #{esim_forward.3} parent=0 // pred_check_branch
    %1162 = sbr.rel (0) target = $region29
  $region28: #{esim_forward.3} parent=0 // pred_region
    _
  $region29: #{esim_forward.3} parent=0 // pred_fallthru
    _

// kernel: esim_forward.5
$region0: #{esim_forward.5}
  #allocation0 [shape = 'u32[]', space=smem, size = 0x4, offset = 0x4, fixed_abs, tag = 'smem constant byte address 0x4 - core index']
  #allocation1 [shape = 'u32[144,128]{1,0:T(1,128)}', space=vmem, size = 0x12000, scoped, tag = 'internal scratch']
  %s0 = inlined_call_operand.vmem [shape: f32[32,32], index: 0, kind: input, shape index: {}]
  %s1 = inlined_call_operand.vmem [shape: f32[32,256], index: 1, kind: input, shape index: {}]
  %s2 = inlined_call_operand.vmem [shape: f32[32,256], index: 2, kind: input, shape index: {}]
  %s3 = inlined_call_operand.vmem [shape: f32[64,256], index: 3, kind: input, shape index: {}]
  %s4 = inlined_call_operand.vmem [shape: f32[1,256], index: 4, kind: input, shape index: {}]
  %s5 = inlined_call_operand.vmem [shape: f32[256,64], index: 5, kind: input, shape index: {}]
  %s6 = inlined_call_operand.vmem [shape: f32[1,64], index: 6, kind: input, shape index: {}]
  %s7 = inlined_call_operand.vmem [shape: f32[64,32], index: 7, kind: input, shape index: {}]
  %s8 = inlined_call_operand.vmem [shape: f32[1,32], index: 8, kind: input, shape index: {}]
  %s9 = inlined_call_operand.vmem [shape: f32[32,4], index: 9, kind: input, shape index: {}]
  %s10 = inlined_call_operand.vmem [shape: f32[1,4], index: 10, kind: input, shape index: {}]
  %s11 = inlined_call_operand.vmem [shape: f32[4,3], index: 11, kind: input, shape index: {}]
  %s12 = inlined_call_operand.vmem [shape: f32[1,3], index: 12, kind: input, shape index: {}]
  %s13 = inlined_call_operand.hbm [shape: f32[2,3], index: 13, kind: output, shape index: {}]
  %s14 = sld [smem:[#allocation0]]
  $region62: #{esim_forward.5} parent=0
    _
  %s16 = ssub.s32 1, %s14
  %s17 = scalar_select 0, %s16, %s14
  $region1: #{esim_forward.5} parent=0
    #allocation2 [shape = 'u8[1024]{0}', space=vmem, size = 0x400, scoped, tag = 'output window, operand 0, single buffered']
    #allocation3 [shape = 's32[1]{0}', space=sflag, size = 0x4, scoped, tag = 'scoped memory for esim_forward.5']
    %18 = vsyncpa [#allocation3], 0
    // Predicated region
    $region2: #{esim_forward.5} parent=1 // pred_check
      _
    $region3: #{esim_forward.5} parent=1 // pred_check_branch
      %20 = sbr.rel (0) target = $region5
    $region4: #{esim_forward.5} parent=1 // pred_region
      _
    $region5: #{esim_forward.5} parent=1 // pred_fallthru
      _
    // Predicated region
    $region6: #{esim_forward.5} parent=1 // pred_check
      _
    $region7: #{esim_forward.5} parent=1 // pred_check_branch
      %22 = sbr.rel (0) target = $region9
    $region8: #{esim_forward.5} parent=1 // pred_region
      _
    $region9: #{esim_forward.5} parent=1 // pred_fallthru
      _
    // Predicated region
    $region10: #{esim_forward.5} parent=1 // pred_check
      _
    $region11: #{esim_forward.5} parent=1 // pred_check_branch
      %24 = sbr.rel (0) target = $region13
    $region12: #{esim_forward.5} parent=1 // pred_region
      _
    $region13: #{esim_forward.5} parent=1 // pred_fallthru
      _
    // Predicated region
    $region14: #{esim_forward.5} parent=1 // pred_check
      _
    $region15: #{esim_forward.5} parent=1 // pred_check_branch
      %26 = sbr.rel (0) target = $region17
    $region16: #{esim_forward.5} parent=1 // pred_region
      _
    $region17: #{esim_forward.5} parent=1 // pred_fallthru
      _
    // Predicated region
    $region18: #{esim_forward.5} parent=1 // pred_check
      _
    $region19: #{esim_forward.5} parent=1 // pred_check_branch
      %28 = sbr.rel (0) target = $region21
    $region20: #{esim_forward.5} parent=1 // pred_region
      _
    $region21: #{esim_forward.5} parent=1 // pred_fallthru
      _
    // Predicated region
    $region22: #{esim_forward.5} parent=1 // pred_check
      _
    $region23: #{esim_forward.5} parent=1 // pred_check_branch
      %30 = sbr.rel (0) target = $region25
    $region24: #{esim_forward.5} parent=1 // pred_region
      _
    $region25: #{esim_forward.5} parent=1 // pred_fallthru
      _
    // Predicated region
    $region26: #{esim_forward.5} parent=1 // pred_check
      _
    $region27: #{esim_forward.5} parent=1 // pred_check_branch
      %32 = sbr.rel (0) target = $region29
    $region28: #{esim_forward.5} parent=1 // pred_region
      _
    $region29: #{esim_forward.5} parent=1 // pred_fallthru
      _
    // Predicated region
    $region30: #{esim_forward.5} parent=1 // pred_check
      _
    $region31: #{esim_forward.5} parent=1 // pred_check_branch
      %34 = sbr.rel (0) target = $region33
    $region32: #{esim_forward.5} parent=1 // pred_region
      _
    $region33: #{esim_forward.5} parent=1 // pred_fallthru
      _
    // Predicated region
    $region34: #{esim_forward.5} parent=1 // pred_check
      _
    $region35: #{esim_forward.5} parent=1 // pred_check_branch
      %36 = sbr.rel (0) target = $region37
    $region36: #{esim_forward.5} parent=1 // pred_region
      _
    $region37: #{esim_forward.5} parent=1 // pred_fallthru
      _
    // Predicated region
    $region38: #{esim_forward.5} parent=1 // pred_check
      _
    $region39: #{esim_forward.5} parent=1 // pred_check_branch
      %38 = sbr.rel (0) target = $region41
    $region40: #{esim_forward.5} parent=1 // pred_region
      _
    $region41: #{esim_forward.5} parent=1 // pred_fallthru
      _
    // Predicated region
    $region42: #{esim_forward.5} parent=1 // pred_check
      _
    $region43: #{esim_forward.5} parent=1 // pred_check_branch
      %40 = sbr.rel (0) target = $region45
    $region44: #{esim_forward.5} parent=1 // pred_region
      _
    $region45: #{esim_forward.5} parent=1 // pred_fallthru
      _
    // Predicated region
    $region46: #{esim_forward.5} parent=1 // pred_check
      _
    $region47: #{esim_forward.5} parent=1 // pred_check_branch
      %42 = sbr.rel (0) target = $region49
    $region48: #{esim_forward.5} parent=1 // pred_region
      _
    $region49: #{esim_forward.5} parent=1 // pred_fallthru
      _
    // Predicated region
    $region50: #{esim_forward.5} parent=1 // pred_check
      _
    $region51: #{esim_forward.5} parent=1 // pred_check_branch
      %44 = sbr.rel (0) target = $region53
    $region52: #{esim_forward.5} parent=1 // pred_region
      _
    $region53: #{esim_forward.5} parent=1 // pred_fallthru
      _
    %v45 = vld [vmem:[%s0] sm:$0xff]
    %v46 = vld [vmem:[%s0 + $0x8] sm:$0xff]
    %v47 = vld [vmem:[%s0 + $0x10] sm:$0xff]
    %v48 = vld [vmem:[%s0 + $0x18] sm:$0xff]
    %v49 = vld [vmem:[%s1] sm:$0xff]
    %v50 = vld [vmem:[%s1 + $0x8] sm:$0xff]
    %v51 = vld [vmem:[%s1 + $0x10] sm:$0xff]
    %v52 = vld [vmem:[%s1 + $0x18] sm:$0xff]
    %v53 = vld [vmem:[%s1 + $0x20] sm:$0xff]
    %v54 = vld [vmem:[%s1 + $0x28] sm:$0xff]
    %v55 = vld [vmem:[%s1 + $0x30] sm:$0xff]
    %v56 = vld [vmem:[%s1 + $0x38] sm:$0xff]
    %v57 = vld [vmem:[%s2] sm:$0xff]
    %v58 = vld [vmem:[%s2 + $0x8] sm:$0xff]
    %v59 = vld [vmem:[%s2 + $0x10] sm:$0xff]
    %v60 = vld [vmem:[%s2 + $0x18] sm:$0xff]
    %v61 = vld [vmem:[%s2 + $0x20] sm:$0xff]
    %v62 = vld [vmem:[%s2 + $0x28] sm:$0xff]
    %v63 = vld [vmem:[%s2 + $0x30] sm:$0xff]
    %v64 = vld [vmem:[%s2 + $0x38] sm:$0xff]
    %v65 = vld [vmem:[%s3] sm:$0xff]
    %v66 = vld [vmem:[%s3 + $0x8] sm:$0xff]
    %v67 = vld [vmem:[%s3 + $0x10] sm:$0xff]
    %v68 = vld [vmem:[%s3 + $0x18] sm:$0xff]
    %v69 = vld [vmem:[%s3 + $0x20] sm:$0xff]
    %v70 = vld [vmem:[%s3 + $0x28] sm:$0xff]
    %v71 = vld [vmem:[%s3 + $0x30] sm:$0xff]
    %v72 = vld [vmem:[%s3 + $0x38] sm:$0xff]
    %v73 = vld [vmem:[%s3 + $0x40] sm:$0xff]
    %v74 = vld [vmem:[%s3 + $0x48] sm:$0xff]
    %v75 = vld [vmem:[%s3 + $0x50] sm:$0xff]
    %v76 = vld [vmem:[%s3 + $0x58] sm:$0xff]
    %v77 = vld [vmem:[%s3 + $0x60] sm:$0xff]
    %v78 = vld [vmem:[%s3 + $0x68] sm:$0xff]
    %v79 = vld [vmem:[%s3 + $0x70] sm:$0xff]
    %v80 = vld [vmem:[%s3 + $0x78] sm:$0xff]
    %v81 = vld [vmem:[%s4] sm:$0x3]
    %v83 = vlaneseq
    %v84 = vshrl.u32 %v83, 7
    %v85 = vsub.s32 0, %v84
    %v86 = vrot.slane %v81, %v85
    %v87 = vlaneseq
    %v88 = vshrl.u32 %v87, 7
    %v89 = vsub.s32 1, %v88
    %v90 = vrot.slane %v81, %v89
    %vm93 = vcmask 261120
    %v95 = vsel %vm93, %v45, 0
    %v98 = vsel %vm93, %v46, 0
    %v101 = vsel %vm93, %v47, 0
    %v104 = vsel %vm93, %v48, 0
    %106 = vmatprep.subr.mxu0 %v50
    %107 = vmatpush1.msra.mxu0 %v49
    %108 = vmatprep.subr.mxu0 %v52
    %109 = vmatpush1.msra.mxu0 %v51
    %110 = vmatprep.subr.mxu0 %v54
    %111 = vmatpush1.msra.mxu0 %v53
    %112 = vmatprep.subr.mxu0 %v56
    %113 = vmatpush1.msra.mxu0 %v55
    %114 = vmatprep.subr.mxu0 0.0
    %115 = vmatpush1.msra.mxu0 0.0
    %116 = vmatprep.subr.mxu0 0.0
    %117 = vmatpush1.msra.mxu0 0.0
    %118 = vmatprep.subr.mxu0 0.0
    %119 = vmatpush1.msra.mxu0 0.0
    %120 = vmatprep.subr.mxu0 0.0
    %121 = vmatpush1.msra.mxu0 0.0
    %122 = vmatprep.subr.mxu0 0.0
    %123 = vmatpush1.msra.mxu0 0.0
    %124 = vmatprep.subr.mxu0 0.0
    %125 = vmatpush1.msra.mxu0 0.0
    %126 = vmatprep.subr.mxu0 0.0
    %127 = vmatpush1.msra.mxu0 0.0
    %128 = vmatprep.subr.mxu0 0.0
    %129 = vmatpush1.msra.mxu0 0.0
    %130 = vmatprep.subr.mxu0 0.0
    %131 = vmatpush1.msra.mxu0 0.0
    %132 = vmatprep.subr.mxu0 0.0
    %133 = vmatpush1.msra.mxu0 0.0
    %134 = vmatprep.subr.mxu0 0.0
    %135 = vmatpush1.msra.mxu0 0.0
    %136 = vmatprep.subr.mxu0 0.0
    %137 = vmatpush1.msra.mxu0 0.0
    %138 = vmatprep.subr.mxu0 0.0
    %139 = vmatpush1.msra.mxu0 0.0
    %140 = vmatprep.subr.mxu0 0.0
    %141 = vmatpush1.msra.mxu0 0.0
    %142 = vmatprep.subr.mxu0 0.0
    %143 = vmatpush1.msra.mxu0 0.0
    %144 = vmatprep.subr.mxu0 0.0
    %145 = vmatpush1.msra.mxu0 0.0
    %146 = vmatprep.subr.mxu0 0.0
    %147 = vmatpush1.msra.mxu0 0.0
    %148 = vmatprep.subr.mxu0 0.0
    %149 = vmatpush1.msra.mxu0 0.0
    %150 = vmatprep.subr.mxu0 0.0
    %151 = vmatpush1.msra.mxu0 0.0
    %152 = vmatprep.subr.mxu0 0.0
    %153 = vmatpush1.msra.mxu0 0.0
    %154 = vmatprep.subr.mxu0 0.0
    %155 = vmatpush1.msra.mxu0 0.0
    %156 = vmatprep.subr.mxu0 0.0
    %157 = vmatpush1.msra.mxu0 0.0
    %158 = vmatprep.subr.mxu0 0.0
    %159 = vmatpush1.msra.mxu0 0.0
    %160 = vmatprep.subr.mxu0 0.0
    %161 = vmatpush1.msra.mxu0 0.0
    %162 = vmatprep.subr.mxu0 0.0
    %163 = vmatpush1.msra.mxu0 0.0
    %164 = vmatprep.subr.mxu0 0.0
    %165 = vmatpush1.msra.mxu0 0.0
    %166 = vmatprep.subr.mxu0 0.0
    %167 = vmatpush1.msra.mxu0 0.0
    %168 = vmatprep.subr.mxu0 0.0
    %169 = vmatpush1.msra.mxu0 0.0
    %170 = vmatprep.mubr.f32.mxu0 0.0
    %171 = vmatmul.mubr.f32.gmra.mrb[0].mxu0 %v95
    %v172 = vpop.f32.mrb[0].mxu0
    %v173 = vadd.f32 %v86, %v172
    %v174 = vpop.f32.mrb[0].mxu0
    %v175 = vadd.f32 %v90, %v174
    %176 = vmatprep.mubr.f32.mxu0 0.0
    %177 = vmatmul.mubr.f32.gmra.mrb[0].mxu0 %v98
    %v178 = vpop.f32.mrb[0].mxu0
    %v179 = vadd.f32 %v86, %v178
    %v180 = vpop.f32.mrb[0].mxu0
    %v181 = vadd.f32 %v90, %v180
    %182 = vmatprep.mubr.f32.mxu0 0.0
    %183 = vmatmul.mubr.f32.gmra.mrb[0].mxu0 %v101
    %v184 = vpop.f32.mrb[0].mxu0
    %v185 = vadd.f32 %v86, %v184
    %v186 = vpop.f32.mrb[0].mxu0
    %v187 = vadd.f32 %v90, %v186
    %188 = vmatprep.mubr.f32.mxu0 0.0
    %189 = vmatmul.mubr.f32.gmra.mrb[0].mxu0 %v104
    %v190 = vpop.f32.mrb[0].mxu0
    %v191 = vadd.f32 %v86, %v190
    %v192 = vpop.f32.mrb[0].mxu0
    %v193 = vadd.f32 %v90, %v192
    %194 = vdwg.mxu0
    %195 = vmatprep.subr.mxu0 %v58
    %196 = vmatpush1.msra.mxu0 %v57
    %197 = vmatprep.subr.mxu0 %v60
    %198 = vmatpush1.msra.mxu0 %v59
    %199 = vmatprep.subr.mxu0 %v62
    %200 = vmatpush1.msra.mxu0 %v61
    %201 = vmatprep.subr.mxu0 %v64
    %202 = vmatpush1.msra.mxu0 %v63
    %203 = vmatprep.subr.mxu0 0.0
    %204 = vmatpush1.msra.mxu0 0.0
    %205 = vmatprep.subr.mxu0 0.0
    %206 = vmatpush1.msra.mxu0 0.0
    %207 = vmatprep.subr.mxu0 0.0
    %208 = vmatpush1.msra.mxu0 0.0
    %209 = vmatprep.subr.mxu0 0.0
    %210 = vmatpush1.msra.mxu0 0.0
    %211 = vmatprep.subr.mxu0 0.0
    %212 = vmatpush1.msra.mxu0 0.0
    %213 = vmatprep.subr.mxu0 0.0
    %214 = vmatpush1.msra.mxu0 0.0
    %215 = vmatprep.subr.mxu0 0.0
    %216 = vmatpush1.msra.mxu0 0.0
    %217 = vmatprep.subr.mxu0 0.0
    %218 = vmatpush1.msra.mxu0 0.0
    %219 = vmatprep.subr.mxu0 0.0
    %220 = vmatpush1.msra.mxu0 0.0
    %221 = vmatprep.subr.mxu0 0.0
    %222 = vmatpush1.msra.mxu0 0.0
    %223 = vmatprep.subr.mxu0 0.0
    %224 = vmatpush1.msra.mxu0 0.0
    %225 = vmatprep.subr.mxu0 0.0
    %226 = vmatpush1.msra.mxu0 0.0
    %227 = vmatprep.subr.mxu0 0.0
    %228 = vmatpush1.msra.mxu0 0.0
    %229 = vmatprep.subr.mxu0 0.0
    %230 = vmatpush1.msra.mxu0 0.0
    %231 = vmatprep.subr.mxu0 0.0
    %232 = vmatpush1.msra.mxu0 0.0
    %233 = vmatprep.subr.mxu0 0.0
    %234 = vmatpush1.msra.mxu0 0.0
    %235 = vmatprep.subr.mxu0 0.0
    %236 = vmatpush1.msra.mxu0 0.0
    %237 = vmatprep.subr.mxu0 0.0
    %238 = vmatpush1.msra.mxu0 0.0
    %239 = vmatprep.subr.mxu0 0.0
    %240 = vmatpush1.msra.mxu0 0.0
    %241 = vmatprep.subr.mxu0 0.0
    %242 = vmatpush1.msra.mxu0 0.0
    %243 = vmatprep.subr.mxu0 0.0
    %244 = vmatpush1.msra.mxu0 0.0
    %245 = vmatprep.subr.mxu0 0.0
    %246 = vmatpush1.msra.mxu0 0.0
    %247 = vmatprep.subr.mxu0 0.0
    %248 = vmatpush1.msra.mxu0 0.0
    %249 = vmatprep.subr.mxu0 0.0
    %250 = vmatpush1.msra.mxu0 0.0
    %251 = vmatprep.subr.mxu0 0.0
    %252 = vmatpush1.msra.mxu0 0.0
    %253 = vmatprep.subr.mxu0 0.0
    %254 = vmatpush1.msra.mxu0 0.0
    %255 = vmatprep.subr.mxu0 0.0
    %256 = vmatpush1.msra.mxu0 0.0
    %257 = vmatprep.subr.mxu0 0.0
    %258 = vmatpush1.msra.mxu0 0.0
    %259 = vmatprep.mubr.f32.mxu0 0.0
    %260 = vmatmul.mubr.f32.gmra.mrb[0].mxu0 %v95
    %v261 = vpop.f32.mrb[0].mxu0
    %v262 = vadd.f32 0.0, %v261
    %v263 = vpop.f32.mrb[0].mxu0
    %v264 = vadd.f32 0.0, %v263
    %265 = vmatprep.mubr.f32.mxu0 0.0
    %266 = vmatmul.mubr.f32.gmra.mrb[0].mxu0 %v98
    %v267 = vpop.f32.mrb[0].mxu0
    %v268 = vadd.f32 0.0, %v267
    %v269 = vpop.f32.mrb[0].mxu0
    %v270 = vadd.f32 0.0, %v269
    %271 = vmatprep.mubr.f32.mxu0 0.0
    %272 = vmatmul.mubr.f32.gmra.mrb[0].mxu0 %v101
    %v273 = vpop.f32.mrb[0].mxu0
    %v274 = vadd.f32 0.0, %v273
    %v275 = vpop.f32.mrb[0].mxu0
    %v276 = vadd.f32 0.0, %v275
    %277 = vmatprep.mubr.f32.mxu0 0.0
    %278 = vmatmul.mubr.f32.gmra.mrb[0].mxu0 %v104
    %v279 = vpop.f32.mrb[0].mxu0
    %v280 = vadd.f32 0.0, %v279
    %v281 = vpop.f32.mrb[0].mxu0
    %v282 = vadd.f32 0.0, %v281
    %283 = vdwg.mxu0
    %v286 = vrot.slane %v280, 4
    %v287 = vrot.slane %v282, 4
    %v290 = vadd.f32 %v173, %v286
    %v291 = vadd.f32 %v175, %v287
    %vm292 = vcmask 523264
    %v294 = vsel %vm292, 0.0, 0
    %296 = vmatprep.subr.mxu0 %v66
    %297 = vmatpush1.msra.mxu0 %v65
    %298 = vmatprep.subr.mxu0 %v68
    %299 = vmatpush1.msra.mxu0 %v67
    %300 = vmatprep.subr.mxu0 %v70
    %301 = vmatpush1.msra.mxu0 %v69
    %302 = vmatprep.subr.mxu0 %v72
    %303 = vmatpush1.msra.mxu0 %v71
    %304 = vmatprep.subr.mxu0 %v74
    %305 = vmatpush1.msra.mxu0 %v73
    %306 = vmatprep.subr.mxu0 %v76
    %307 = vmatpush1.msra.mxu0 %v75
    %308 = vmatprep.subr.mxu0 %v78
    %309 = vmatpush1.msra.mxu0 %v77
    %310 = vmatprep.subr.mxu0 %v80
    %311 = vmatpush1.msra.mxu0 %v79
    %312 = vmatprep.subr.mxu0 0.0
    %313 = vmatpush1.msra.mxu0 0.0
    %314 = vmatprep.subr.mxu0 0.0
    %315 = vmatpush1.msra.mxu0 0.0
    %316 = vmatprep.subr.mxu0 0.0
    %317 = vmatpush1.msra.mxu0 0.0
    %318 = vmatprep.subr.mxu0 0.0
    %319 = vmatpush1.msra.mxu0 0.0
    %320 = vmatprep.subr.mxu0 0.0
    %321 = vmatpush1.msra.mxu0 0.0
    %322 = vmatprep.subr.mxu0 0.0
    %323 = vmatpush1.msra.mxu0 0.0
    %324 = vmatprep.subr.mxu0 0.0
    %325 = vmatpush1.msra.mxu0 0.0
    %326 = vmatprep.subr.mxu0 0.0
    %327 = vmatpush1.msra.mxu0 0.0
    %328 = vmatprep.subr.mxu0 0.0
    %329 = vmatpush1.msra.mxu0 0.0
    %330 = vmatprep.subr.mxu0 0.0
    %331 = vmatpush1.msra.mxu0 0.0
    %332 = vmatprep.subr.mxu0 0.0
    %333 = vmatpush1.msra.mxu0 0.0
    %334 = vmatprep.subr.mxu0 0.0
    %335 = vmatpush1.msra.mxu0 0.0
    %336 = vmatprep.subr.mxu0 0.0
    %337 = vmatpush1.msra.mxu0 0.0
    %338 = vmatprep.subr.mxu0 0.0
    %339 = vmatpush1.msra.mxu0 0.0
    %340 = vmatprep.subr.mxu0 0.0
    %341 = vmatpush1.msra.mxu0 0.0
    %342 = vmatprep.subr.mxu0 0.0
    %343 = vmatpush1.msra.mxu0 0.0
    %344 = vmatprep.subr.mxu0 0.0
    %345 = vmatpush1.msra.mxu0 0.0
    %346 = vmatprep.subr.mxu0 0.0
    %347 = vmatpush1.msra.mxu0 0.0
    %348 = vmatprep.subr.mxu0 0.0
    %349 = vmatpush1.msra.mxu0 0.0
    %350 = vmatprep.subr.mxu0 0.0
    %351 = vmatpush1.msra.mxu0 0.0
    %352 = vmatprep.subr.mxu0 0.0
    %353 = vmatpush1.msra.mxu0 0.0
    %354 = vmatprep.subr.mxu0 0.0
    %355 = vmatpush1.msra.mxu0 0.0
    %356 = vmatprep.subr.mxu0 0.0
    %357 = vmatpush1.msra.mxu0 0.0
    %358 = vmatprep.subr.mxu0 0.0
    %359 = vmatpush1.msra.mxu0 0.0
    %360 = vmatprep.mubr.f32.mxu0 0.0
    %361 = vmatmul.mubr.f32.gmra.mrb[0].mxu0 %v294
    %v362 = vpop.f32.mrb[0].mxu0
    %v363 = vadd.f32 0.0, %v362
    %v364 = vpop.f32.mrb[0].mxu0
    %v365 = vadd.f32 0.0, %v364
    %366 = vdwg.mxu0
    %v367 = vadd.f32 %v290, %v363
    %v368 = vadd.f32 %v291, %v365
    %v369 = vsub.f32 0.0, %v367
    %v370 = vmul.f32 %v369, 1.442695
    %v371 = vpow.pop %v370
    %v372 = vadd.f32 %v371, 1.0
    %v373 = vrcp.pop %v372
    %v374 = vtanh.pop %v368
    %v375 = vsub.f32 0.0, %v368
    %v376 = vmul.f32 %v375, 1.442695
    %v377 = vpow.pop %v376
    %v378 = vadd.f32 %v377, 1.0
    %v379 = vrcp.pop %v378
    %v380 = vmul.f32 %v373, 0.0
    %v381 = vmul.f32 %v373, %v374
    %383 = vrot.lane.b32.xlu0 %v381, 64
    %v384 = vpop.permute.xlu0 %383
    %v386 = vadd.f32 %v380, %v384
    %v387 = vtanh.pop %v386
    %v388 = vmul.f32 %v379, %v387
    %390 = vrot.lane.b32.xlu0 %v388, 64
    %v391 = vpop.permute.xlu0 %390
    %v392 = vsel %vm292, %v391, 0
    %394 = vmatprep.subr.mxu0 %v66
    %395 = vmatpush1.msra.mxu0 %v65
    %396 = vmatprep.subr.mxu0 %v68
    %397 = vmatpush1.msra.mxu0 %v67
    %398 = vmatprep.subr.mxu0 %v70
    %399 = vmatpush1.msra.mxu0 %v69
    %400 = vmatprep.subr.mxu0 %v72
    %401 = vmatpush1.msra.mxu0 %v71
    %402 = vmatprep.subr.mxu0 %v74
    %403 = vmatpush1.msra.mxu0 %v73
    %404 = vmatprep.subr.mxu0 %v76
    %405 = vmatpush1.msra.mxu0 %v75
    %406 = vmatprep.subr.mxu0 %v78
    %407 = vmatpush1.msra.mxu0 %v77
    %408 = vmatprep.subr.mxu0 %v80
    %409 = vmatpush1.msra.mxu0 %v79
    %410 = vmatprep.subr.mxu0 0.0
    %411 = vmatpush1.msra.mxu0 0.0
    %412 = vmatprep.subr.mxu0 0.0
    %413 = vmatpush1.msra.mxu0 0.0
    %414 = vmatprep.subr.mxu0 0.0
    %415 = vmatpush1.msra.mxu0 0.0
    %416 = vmatprep.subr.mxu0 0.0
    %417 = vmatpush1.msra.mxu0 0.0
    %418 = vmatprep.subr.mxu0 0.0
    %419 = vmatpush1.msra.mxu0 0.0
    %420 = vmatprep.subr.mxu0 0.0
    %421 = vmatpush1.msra.mxu0 0.0
    %422 = vmatprep.subr.mxu0 0.0
    %423 = vmatpush1.msra.mxu0 0.0
    %424 = vmatprep.subr.mxu0 0.0
    %425 = vmatpush1.msra.mxu0 0.0
    %426 = vmatprep.subr.mxu0 0.0
    %427 = vmatpush1.msra.mxu0 0.0
    %428 = vmatprep.subr.mxu0 0.0
    %429 = vmatpush1.msra.mxu0 0.0
    %430 = vmatprep.subr.mxu0 0.0
    %431 = vmatpush1.msra.mxu0 0.0
    %432 = vmatprep.subr.mxu0 0.0
    %433 = vmatpush1.msra.mxu0 0.0
    %434 = vmatprep.subr.mxu0 0.0
    %435 = vmatpush1.msra.mxu0 0.0
    %436 = vmatprep.subr.mxu0 0.0
    %437 = vmatpush1.msra.mxu0 0.0
    %438 = vmatprep.subr.mxu0 0.0
    %439 = vmatpush1.msra.mxu0 0.0
    %440 = vmatprep.subr.mxu0 0.0
    %441 = vmatpush1.msra.mxu0 0.0
    %442 = vmatprep.subr.mxu0 0.0
    %443 = vmatpush1.msra.mxu0 0.0
    %444 = vmatprep.subr.mxu0 0.0
    %445 = vmatpush1.msra.mxu0 0.0
    %446 = vmatprep.subr.mxu0 0.0
    %447 = vmatpush1.msra.mxu0 0.0
    %448 = vmatprep.subr.mxu0 0.0
    %449 = vmatpush1.msra.mxu0 0.0
    %450 = vmatprep.subr.mxu0 0.0
    %451 = vmatpush1.msra.mxu0 0.0
    %452 = vmatprep.subr.mxu0 0.0
    %453 = vmatpush1.msra.mxu0 0.0
    %454 = vmatprep.subr.mxu0 0.0
    %455 = vmatpush1.msra.mxu0 0.0
    %456 = vmatprep.subr.mxu0 0.0
    %457 = vmatpush1.msra.mxu0 0.0
    %458 = vmatprep.mubr.f32.mxu0 0.0
    %459 = vmatmul.mubr.f32.gmra.mrb[0].mxu0 %v392
    %v460 = vpop.f32.mrb[0].mxu0
    %v461 = vadd.f32 0.0, %v460
    %v462 = vpop.f32.mrb[0].mxu0
    %v463 = vadd.f32 0.0, %v462
    %464 = vdwg.mxu0
    %v467 = vrot.slane %v461, 4
    %v468 = vrot.slane %v463, 4
    %v471 = vadd.f32 %v290, %v467
    %v472 = vadd.f32 %v291, %v468
    %v473 = vsub.f32 0.0, %v471
    %v474 = vmul.f32 %v473, 1.442695
    %v475 = vpow.pop %v474
    %v476 = vadd.f32 %v475, 1.0
    %v477 = vrcp.pop %v476
    %v478 = vtanh.pop %v472
    %v479 = vsub.f32 0.0, %v472
    %v480 = vmul.f32 %v479, 1.442695
    %v481 = vpow.pop %v480
    %v482 = vadd.f32 %v481, 1.0
    %v483 = vrcp.pop %v482
    %v485 = vrot.slane %v386, 4
    %v487 = vmul.f32 %v477, %v485
    %v488 = vmul.f32 %v477, %v478
    %490 = vrot.lane.b32.xlu0 %v488, 64
    %v491 = vpop.permute.xlu0 %490
    %v493 = vadd.f32 %v487, %v491
    %v494 = vtanh.pop %v493
    %v495 = vmul.f32 %v483, %v494
    %v498 = vrot.slane %v274, 4
    %v499 = vrot.slane %v276, 4
    %v502 = vadd.f32 %v179, %v498
    %v503 = vadd.f32 %v181, %v499
    %v505 = vrot.slane %v495, 4
    %506 = vrot.lane.b32.xlu0 %v505, 64
    %v507 = vpop.permute.xlu0 %506
    %v508 = vsel %vm292, %v507, 0
    %510 = vmatprep.subr.mxu0 %v66
    %511 = vmatpush1.msra.mxu0 %v65
    %512 = vmatprep.subr.mxu0 %v68
    %513 = vmatpush1.msra.mxu0 %v67
    %514 = vmatprep.subr.mxu0 %v70
    %515 = vmatpush1.msra.mxu0 %v69
    %516 = vmatprep.subr.mxu0 %v72
    %517 = vmatpush1.msra.mxu0 %v71
    %518 = vmatprep.subr.mxu0 %v74
    %519 = vmatpush1.msra.mxu0 %v73
    %520 = vmatprep.subr.mxu0 %v76
    %521 = vmatpush1.msra.mxu0 %v75
    %522 = vmatprep.subr.mxu0 %v78
    %523 = vmatpush1.msra.mxu0 %v77
    %524 = vmatprep.subr.mxu0 %v80
    %525 = vmatpush1.msra.mxu0 %v79
    %526 = vmatprep.subr.mxu0 0.0
    %527 = vmatpush1.msra.mxu0 0.0
    %528 = vmatprep.subr.mxu0 0.0
    %529 = vmatpush1.msra.mxu0 0.0
    %530 = vmatprep.subr.mxu0 0.0
    %531 = vmatpush1.msra.mxu0 0.0
    %532 = vmatprep.subr.mxu0 0.0
    %533 = vmatpush1.msra.mxu0 0.0
    %534 = vmatprep.subr.mxu0 0.0
    %535 = vmatpush1.msra.mxu0 0.0
    %536 = vmatprep.subr.mxu0 0.0
    %537 = vmatpush1.msra.mxu0 0.0
    %538 = vmatprep.subr.mxu0 0.0
    %539 = vmatpush1.msra.mxu0 0.0
    %540 = vmatprep.subr.mxu0 0.0
    %541 = vmatpush1.msra.mxu0 0.0
    %542 = vmatprep.subr.mxu0 0.0
    %543 = vmatpush1.msra.mxu0 0.0
    %544 = vmatprep.subr.mxu0 0.0
    %545 = vmatpush1.msra.mxu0 0.0
    %546 = vmatprep.subr.mxu0 0.0
    %547 = vmatpush1.msra.mxu0 0.0
    %548 = vmatprep.subr.mxu0 0.0
    %549 = vmatpush1.msra.mxu0 0.0
    %550 = vmatprep.subr.mxu0 0.0
    %551 = vmatpush1.msra.mxu0 0.0
    %552 = vmatprep.subr.mxu0 0.0
    %553 = vmatpush1.msra.mxu0 0.0
    %554 = vmatprep.subr.mxu0 0.0
    %555 = vmatpush1.msra.mxu0 0.0
    %556 = vmatprep.subr.mxu0 0.0
    %557 = vmatpush1.msra.mxu0 0.0
    %558 = vmatprep.subr.mxu0 0.0
    %559 = vmatpush1.msra.mxu0 0.0
    %560 = vmatprep.subr.mxu0 0.0
    %561 = vmatpush1.msra.mxu0 0.0
    %562 = vmatprep.subr.mxu0 0.0
    %563 = vmatpush1.msra.mxu0 0.0
    %564 = vmatprep.subr.mxu0 0.0
    %565 = vmatpush1.msra.mxu0 0.0
    %566 = vmatprep.subr.mxu0 0.0
    %567 = vmatpush1.msra.mxu0 0.0
    %568 = vmatprep.subr.mxu0 0.0
    %569 = vmatpush1.msra.mxu0 0.0
    %570 = vmatprep.subr.mxu0 0.0
    %571 = vmatpush1.msra.mxu0 0.0
    %572 = vmatprep.subr.mxu0 0.0
    %573 = vmatpush1.msra.mxu0 0.0
    %574 = vmatprep.mubr.f32.mxu0 0.0
    %575 = vmatmul.mubr.f32.gmra.mrb[0].mxu0 %v508
    %v576 = vpop.f32.mrb[0].mxu0
    %v577 = vadd.f32 0.0, %v576
    %v578 = vpop.f32.mrb[0].mxu0
    %v579 = vadd.f32 0.0, %v578
    %580 = vdwg.mxu0
    %v581 = vadd.f32 %v502, %v577
    %v582 = vadd.f32 %v503, %v579
    %v583 = vsub.f32 0.0, %v581
    %v584 = vmul.f32 %v583, 1.442695
    %v585 = vpow.pop %v584
    %v586 = vadd.f32 %v585, 1.0
    %v587 = vrcp.pop %v586
    %v588 = vtanh.pop %v582
    %v589 = vsub.f32 0.0, %v582
    %v590 = vmul.f32 %v589, 1.442695
    %v591 = vpow.pop %v590
    %v592 = vadd.f32 %v591, 1.0
    %v593 = vrcp.pop %v592
    %v595 = vrot.slane %v493, 4
    %v597 = vmul.f32 %v587, %v595
    %v598 = vmul.f32 %v587, %v588
    %600 = vrot.lane.b32.xlu0 %v598, 64
    %v601 = vpop.permute.xlu0 %600
    %v603 = vadd.f32 %v597, %v601
    %v604 = vtanh.pop %v603
    %v605 = vmul.f32 %v593, %v604
    %607 = vrot.lane.b32.xlu0 %v605, 64
    %v608 = vpop.permute.xlu0 %607
    %v609 = vsel %vm292, %v608, 0
    %611 = vmatprep.subr.mxu0 %v66
    %612 = vmatpush1.msra.mxu0 %v65
    %613 = vmatprep.subr.mxu0 %v68
    %614 = vmatpush1.msra.mxu0 %v67
    %615 = vmatprep.subr.mxu0 %v70
    %616 = vmatpush1.msra.mxu0 %v69
    %617 = vmatprep.subr.mxu0 %v72
    %618 = vmatpush1.msra.mxu0 %v71
    %619 = vmatprep.subr.mxu0 %v74
    %620 = vmatpush1.msra.mxu0 %v73
    %621 = vmatprep.subr.mxu0 %v76
    %622 = vmatpush1.msra.mxu0 %v75
    %623 = vmatprep.subr.mxu0 %v78
    %624 = vmatpush1.msra.mxu0 %v77
    %625 = vmatprep.subr.mxu0 %v80
    %626 = vmatpush1.msra.mxu0 %v79
    %627 = vmatprep.subr.mxu0 0.0
    %628 = vmatpush1.msra.mxu0 0.0
    %629 = vmatprep.subr.mxu0 0.0
    %630 = vmatpush1.msra.mxu0 0.0
    %631 = vmatprep.subr.mxu0 0.0
    %632 = vmatpush1.msra.mxu0 0.0
    %633 = vmatprep.subr.mxu0 0.0
    %634 = vmatpush1.msra.mxu0 0.0
    %635 = vmatprep.subr.mxu0 0.0
    %636 = vmatpush1.msra.mxu0 0.0
    %637 = vmatprep.subr.mxu0 0.0
    %638 = vmatpush1.msra.mxu0 0.0
    %639 = vmatprep.subr.mxu0 0.0
    %640 = vmatpush1.msra.mxu0 0.0
    %641 = vmatprep.subr.mxu0 0.0
    %642 = vmatpush1.msra.mxu0 0.0
    %643 = vmatprep.subr.mxu0 0.0
    %644 = vmatpush1.msra.mxu0 0.0
    %645 = vmatprep.subr.mxu0 0.0
    %646 = vmatpush1.msra.mxu0 0.0
    %647 = vmatprep.subr.mxu0 0.0
    %648 = vmatpush1.msra.mxu0 0.0
    %649 = vmatprep.subr.mxu0 0.0
    %650 = vmatpush1.msra.mxu0 0.0
    %651 = vmatprep.subr.mxu0 0.0
    %652 = vmatpush1.msra.mxu0 0.0
    %653 = vmatprep.subr.mxu0 0.0
    %654 = vmatpush1.msra.mxu0 0.0
    %655 = vmatprep.subr.mxu0 0.0
    %656 = vmatpush1.msra.mxu0 0.0
    %657 = vmatprep.subr.mxu0 0.0
    %658 = vmatpush1.msra.mxu0 0.0
    %659 = vmatprep.subr.mxu0 0.0
    %660 = vmatpush1.msra.mxu0 0.0
    %661 = vmatprep.subr.mxu0 0.0
    %662 = vmatpush1.msra.mxu0 0.0
    %663 = vmatprep.subr.mxu0 0.0
    %664 = vmatpush1.msra.mxu0 0.0
    %665 = vmatprep.subr.mxu0 0.0
    %666 = vmatpush1.msra.mxu0 0.0
    %667 = vmatprep.subr.mxu0 0.0
    %668 = vmatpush1.msra.mxu0 0.0
    %669 = vmatprep.subr.mxu0 0.0
    %670 = vmatpush1.msra.mxu0 0.0
    %671 = vmatprep.subr.mxu0 0.0
    %672 = vmatpush1.msra.mxu0 0.0
    %673 = vmatprep.subr.mxu0 0.0
    %674 = vmatpush1.msra.mxu0 0.0
    %675 = vmatprep.mubr.f32.mxu0 0.0
    %676 = vmatmul.mubr.f32.gmra.mrb[0].mxu0 %v609
    %v677 = vpop.f32.mrb[0].mxu0
    %v678 = vadd.f32 0.0, %v677
    %v679 = vpop.f32.mrb[0].mxu0
    %v680 = vadd.f32 0.0, %v679
    %681 = vdwg.mxu0
    %v684 = vrot.slane %v678, 4
    %v685 = vrot.slane %v680, 4
    %v688 = vadd.f32 %v502, %v684
    %v689 = vadd.f32 %v503, %v685
    %v690 = vsub.f32 0.0, %v688
    %v691 = vmul.f32 %v690, 1.442695
    %v692 = vpow.pop %v691
    %v693 = vadd.f32 %v692, 1.0
    %v694 = vrcp.pop %v693
    %v695 = vtanh.pop %v689
    %v696 = vsub.f32 0.0, %v689
    %v697 = vmul.f32 %v696, 1.442695
    %v698 = vpow.pop %v697
    %v699 = vadd.f32 %v698, 1.0
    %v700 = vrcp.pop %v699
    %v702 = vrot.slane %v603, 4
    %v704 = vmul.f32 %v694, %v702
    %v705 = vmul.f32 %v694, %v695
    %707 = vrot.lane.b32.xlu0 %v705, 64
    %v708 = vpop.permute.xlu0 %707
    %v710 = vadd.f32 %v704, %v708
    %v711 = vtanh.pop %v710
    %v712 = vmul.f32 %v700, %v711
    %v715 = vrot.slane %v268, 4
    %v716 = vrot.slane %v270, 4
    %v719 = vadd.f32 %v185, %v715
    %v720 = vadd.f32 %v187, %v716
    %v722 = vrot.slane %v712, 4
    %723 = vrot.lane.b32.xlu0 %v722, 64
    %v724 = vpop.permute.xlu0 %723
    %v725 = vsel %vm292, %v724, 0
    %727 = vmatprep.subr.mxu0 %v66
    %728 = vmatpush1.msra.mxu0 %v65
    %729 = vmatprep.subr.mxu0 %v68
    %730 = vmatpush1.msra.mxu0 %v67
    %731 = vmatprep.subr.mxu0 %v70
    %732 = vmatpush1.msra.mxu0 %v69
    %733 = vmatprep.subr.mxu0 %v72
    %734 = vmatpush1.msra.mxu0 %v71
    %735 = vmatprep.subr.mxu0 %v74
    %736 = vmatpush1.msra.mxu0 %v73
    %737 = vmatprep.subr.mxu0 %v76
    %738 = vmatpush1.msra.mxu0 %v75
    %739 = vmatprep.subr.mxu0 %v78
    %740 = vmatpush1.msra.mxu0 %v77
    %741 = vmatprep.subr.mxu0 %v80
    %742 = vmatpush1.msra.mxu0 %v79
    %743 = vmatprep.subr.mxu0 0.0
    %744 = vmatpush1.msra.mxu0 0.0
    %745 = vmatprep.subr.mxu0 0.0
    %746 = vmatpush1.msra.mxu0 0.0
    %747 = vmatprep.subr.mxu0 0.0
    %748 = vmatpush1.msra.mxu0 0.0
    %749 = vmatprep.subr.mxu0 0.0
    %750 = vmatpush1.msra.mxu0 0.0
    %751 = vmatprep.subr.mxu0 0.0
    %752 = vmatpush1.msra.mxu0 0.0
    %753 = vmatprep.subr.mxu0 0.0
    %754 = vmatpush1.msra.mxu0 0.0
    %755 = vmatprep.subr.mxu0 0.0
    %756 = vmatpush1.msra.mxu0 0.0
    %757 = vmatprep.subr.mxu0 0.0
    %758 = vmatpush1.msra.mxu0 0.0
    %759 = vmatprep.subr.mxu0 0.0
    %760 = vmatpush1.msra.mxu0 0.0
    %761 = vmatprep.subr.mxu0 0.0
    %762 = vmatpush1.msra.mxu0 0.0
    %763 = vmatprep.subr.mxu0 0.0
    %764 = vmatpush1.msra.mxu0 0.0
    %765 = vmatprep.subr.mxu0 0.0
    %766 = vmatpush1.msra.mxu0 0.0
    %767 = vmatprep.subr.mxu0 0.0
    %768 = vmatpush1.msra.mxu0 0.0
    %769 = vmatprep.subr.mxu0 0.0
    %770 = vmatpush1.msra.mxu0 0.0
    %771 = vmatprep.subr.mxu0 0.0
    %772 = vmatpush1.msra.mxu0 0.0
    %773 = vmatprep.subr.mxu0 0.0
    %774 = vmatpush1.msra.mxu0 0.0
    %775 = vmatprep.subr.mxu0 0.0
    %776 = vmatpush1.msra.mxu0 0.0
    %777 = vmatprep.subr.mxu0 0.0
    %778 = vmatpush1.msra.mxu0 0.0
    %779 = vmatprep.subr.mxu0 0.0
    %780 = vmatpush1.msra.mxu0 0.0
    %781 = vmatprep.subr.mxu0 0.0
    %782 = vmatpush1.msra.mxu0 0.0
    %783 = vmatprep.subr.mxu0 0.0
    %784 = vmatpush1.msra.mxu0 0.0
    %785 = vmatprep.subr.mxu0 0.0
    %786 = vmatpush1.msra.mxu0 0.0
    %787 = vmatprep.subr.mxu0 0.0
    %788 = vmatpush1.msra.mxu0 0.0
    %789 = vmatprep.subr.mxu0 0.0
    %790 = vmatpush1.msra.mxu0 0.0
    %791 = vmatprep.mubr.f32.mxu0 0.0
    %792 = vmatmul.mubr.f32.gmra.mrb[0].mxu0 %v725
    %v793 = vpop.f32.mrb[0].mxu0
    %v794 = vadd.f32 0.0, %v793
    %v795 = vpop.f32.mrb[0].mxu0
    %v796 = vadd.f32 0.0, %v795
    %797 = vdwg.mxu0
    %v798 = vadd.f32 %v719, %v794
    %v799 = vadd.f32 %v720, %v796
    %v800 = vsub.f32 0.0, %v798
    %v801 = vmul.f32 %v800, 1.442695
    %v802 = vpow.pop %v801
    %v803 = vadd.f32 %v802, 1.0
    %v804 = vrcp.pop %v803
    %v805 = vtanh.pop %v799
    %v806 = vsub.f32 0.0, %v799
    %v807 = vmul.f32 %v806, 1.442695
    %v808 = vpow.pop %v807
    %v809 = vadd.f32 %v808, 1.0
    %v810 = vrcp.pop %v809
    %v812 = vrot.slane %v710, 4
    %v814 = vmul.f32 %v804, %v812
    %v815 = vmul.f32 %v804, %v805
    %817 = vrot.lane.b32.xlu0 %v815, 64
    %v818 = vpop.permute.xlu0 %817
    %v820 = vadd.f32 %v814, %v818
    %v821 = vtanh.pop %v820
    %v822 = vmul.f32 %v810, %v821
    %824 = vrot.lane.b32.xlu0 %v822, 64
    %v825 = vpop.permute.xlu0 %824
    %v826 = vsel %vm292, %v825, 0
    %828 = vmatprep.subr.mxu0 %v66
    %829 = vmatpush1.msra.mxu0 %v65
    %830 = vmatprep.subr.mxu0 %v68
    %831 = vmatpush1.msra.mxu0 %v67
    %832 = vmatprep.subr.mxu0 %v70
    %833 = vmatpush1.msra.mxu0 %v69
    %834 = vmatprep.subr.mxu0 %v72
    %835 = vmatpush1.msra.mxu0 %v71
    %836 = vmatprep.subr.mxu0 %v74
    %837 = vmatpush1.msra.mxu0 %v73
    %838 = vmatprep.subr.mxu0 %v76
    %839 = vmatpush1.msra.mxu0 %v75
    %840 = vmatprep.subr.mxu0 %v78
    %841 = vmatpush1.msra.mxu0 %v77
    %842 = vmatprep.subr.mxu0 %v80
    %843 = vmatpush1.msra.mxu0 %v79
    %844 = vmatprep.subr.mxu0 0.0
    %845 = vmatpush1.msra.mxu0 0.0
    %846 = vmatprep.subr.mxu0 0.0
    %847 = vmatpush1.msra.mxu0 0.0
    %848 = vmatprep.subr.mxu0 0.0
    %849 = vmatpush1.msra.mxu0 0.0
    %850 = vmatprep.subr.mxu0 0.0
    %851 = vmatpush1.msra.mxu0 0.0
    %852 = vmatprep.subr.mxu0 0.0
    %853 = vmatpush1.msra.mxu0 0.0
    %854 = vmatprep.subr.mxu0 0.0
    %855 = vmatpush1.msra.mxu0 0.0
    %856 = vmatprep.subr.mxu0 0.0
    %857 = vmatpush1.msra.mxu0 0.0
    %858 = vmatprep.subr.mxu0 0.0
    %859 = vmatpush1.msra.mxu0 0.0
    %860 = vmatprep.subr.mxu0 0.0
    %861 = vmatpush1.msra.mxu0 0.0
    %862 = vmatprep.subr.mxu0 0.0
    %863 = vmatpush1.msra.mxu0 0.0
    %864 = vmatprep.subr.mxu0 0.0
    %865 = vmatpush1.msra.mxu0 0.0
    %866 = vmatprep.subr.mxu0 0.0
    %867 = vmatpush1.msra.mxu0 0.0
    %868 = vmatprep.subr.mxu0 0.0
    %869 = vmatpush1.msra.mxu0 0.0
    %870 = vmatprep.subr.mxu0 0.0
    %871 = vmatpush1.msra.mxu0 0.0
    %872 = vmatprep.subr.mxu0 0.0
    %873 = vmatpush1.msra.mxu0 0.0
    %874 = vmatprep.subr.mxu0 0.0
    %875 = vmatpush1.msra.mxu0 0.0
    %876 = vmatprep.subr.mxu0 0.0
    %877 = vmatpush1.msra.mxu0 0.0
    %878 = vmatprep.subr.mxu0 0.0
    %879 = vmatpush1.msra.mxu0 0.0
    %880 = vmatprep.subr.mxu0 0.0
    %881 = vmatpush1.msra.mxu0 0.0
    %882 = vmatprep.subr.mxu0 0.0
    %883 = vmatpush1.msra.mxu0 0.0
    %884 = vmatprep.subr.mxu0 0.0
    %885 = vmatpush1.msra.mxu0 0.0
    %886 = vmatprep.subr.mxu0 0.0
    %887 = vmatpush1.msra.mxu0 0.0
    %888 = vmatprep.subr.mxu0 0.0
    %889 = vmatpush1.msra.mxu0 0.0
    %890 = vmatprep.subr.mxu0 0.0
    %891 = vmatpush1.msra.mxu0 0.0
    %892 = vmatprep.mubr.f32.mxu0 0.0
    %893 = vmatmul.mubr.f32.gmra.mrb[0].mxu0 %v826
    %v894 = vpop.f32.mrb[0].mxu0
    %v895 = vadd.f32 0.0, %v894
    %v896 = vpop.f32.mrb[0].mxu0
    %v897 = vadd.f32 0.0, %v896
    %898 = vdwg.mxu0
    %v901 = vrot.slane %v895, 4
    %v902 = vrot.slane %v897, 4
    %v905 = vadd.f32 %v719, %v901
    %v906 = vadd.f32 %v720, %v902
    %v907 = vsub.f32 0.0, %v905
    %v908 = vmul.f32 %v907, 1.442695
    %v909 = vpow.pop %v908
    %v910 = vadd.f32 %v909, 1.0
    %v911 = vrcp.pop %v910
    %v912 = vtanh.pop %v906
    %v913 = vsub.f32 0.0, %v906
    %v914 = vmul.f32 %v913, 1.442695
    %v915 = vpow.pop %v914
    %v916 = vadd.f32 %v915, 1.0
    %v917 = vrcp.pop %v916
    %v919 = vrot.slane %v820, 4
    %v921 = vmul.f32 %v911, %v919
    %v922 = vmul.f32 %v911, %v912
    %924 = vrot.lane.b32.xlu0 %v922, 64
    %v925 = vpop.permute.xlu0 %924
    %v927 = vadd.f32 %v921, %v925
    %v928 = vtanh.pop %v927
    %v929 = vmul.f32 %v917, %v928
    %v932 = vrot.slane %v262, 4
    %v933 = vrot.slane %v264, 4
    %v936 = vadd.f32 %v191, %v932
    %v937 = vadd.f32 %v193, %v933
    %v939 = vrot.slane %v929, 4
    %940 = vrot.lane.b32.xlu0 %v939, 64
    %v941 = vpop.permute.xlu0 %940
    %v942 = vsel %vm292, %v941, 0
    %944 = vmatprep.subr.mxu0 %v66
    %945 = vmatpush1.msra.mxu0 %v65
    %946 = vmatprep.subr.mxu0 %v68
    %947 = vmatpush1.msra.mxu0 %v67
    %948 = vmatprep.subr.mxu0 %v70
    %949 = vmatpush1.msra.mxu0 %v69
    %950 = vmatprep.subr.mxu0 %v72
    %951 = vmatpush1.msra.mxu0 %v71
    %952 = vmatprep.subr.mxu0 %v74
    %953 = vmatpush1.msra.mxu0 %v73
    %954 = vmatprep.subr.mxu0 %v76
    %955 = vmatpush1.msra.mxu0 %v75
    %956 = vmatprep.subr.mxu0 %v78
    %957 = vmatpush1.msra.mxu0 %v77
    %958 = vmatprep.subr.mxu0 %v80
    %959 = vmatpush1.msra.mxu0 %v79
    %960 = vmatprep.subr.mxu0 0.0
    %961 = vmatpush1.msra.mxu0 0.0
    %962 = vmatprep.subr.mxu0 0.0
    %963 = vmatpush1.msra.mxu0 0.0
    %964 = vmatprep.subr.mxu0 0.0
    %965 = vmatpush1.msra.mxu0 0.0
    %966 = vmatprep.subr.mxu0 0.0
    %967 = vmatpush1.msra.mxu0 0.0
    %968 = vmatprep.subr.mxu0 0.0
    %969 = vmatpush1.msra.mxu0 0.0
    %970 = vmatprep.subr.mxu0 0.0
    %971 = vmatpush1.msra.mxu0 0.0
    %972 = vmatprep.subr.mxu0 0.0
    %973 = vmatpush1.msra.mxu0 0.0
    %974 = vmatprep.subr.mxu0 0.0
    %975 = vmatpush1.msra.mxu0 0.0
    %976 = vmatprep.subr.mxu0 0.0
    %977 = vmatpush1.msra.mxu0 0.0
    %978 = vmatprep.subr.mxu0 0.0
    %979 = vmatpush1.msra.mxu0 0.0
    %980 = vmatprep.subr.mxu0 0.0
    %981 = vmatpush1.msra.mxu0 0.0
    %982 = vmatprep.subr.mxu0 0.0
    %983 = vmatpush1.msra.mxu0 0.0
    %984 = vmatprep.subr.mxu0 0.0
    %985 = vmatpush1.msra.mxu0 0.0
    %986 = vmatprep.subr.mxu0 0.0
    %987 = vmatpush1.msra.mxu0 0.0
    %988 = vmatprep.subr.mxu0 0.0
    %989 = vmatpush1.msra.mxu0 0.0
    %990 = vmatprep.subr.mxu0 0.0
    %991 = vmatpush1.msra.mxu0 0.0
    %992 = vmatprep.subr.mxu0 0.0
    %993 = vmatpush1.msra.mxu0 0.0
    %994 = vmatprep.subr.mxu0 0.0
    %995 = vmatpush1.msra.mxu0 0.0
    %996 = vmatprep.subr.mxu0 0.0
    %997 = vmatpush1.msra.mxu0 0.0
    %998 = vmatprep.subr.mxu0 0.0
    %999 = vmatpush1.msra.mxu0 0.0
    %1000 = vmatprep.subr.mxu0 0.0
    %1001 = vmatpush1.msra.mxu0 0.0
    %1002 = vmatprep.subr.mxu0 0.0
    %1003 = vmatpush1.msra.mxu0 0.0
    %1004 = vmatprep.subr.mxu0 0.0
    %1005 = vmatpush1.msra.mxu0 0.0
    %1006 = vmatprep.subr.mxu0 0.0
    %1007 = vmatpush1.msra.mxu0 0.0
    %1008 = vmatprep.mubr.f32.mxu0 0.0
    %1009 = vmatmul.mubr.f32.gmra.mrb[0].mxu0 %v942
    %v1010 = vpop.f32.mrb[0].mxu0
    %v1011 = vadd.f32 0.0, %v1010
    %v1012 = vpop.f32.mrb[0].mxu0
    %v1013 = vadd.f32 0.0, %v1012
    %1014 = vdwg.mxu0
    %v1015 = vadd.f32 %v936, %v1011
    %v1016 = vadd.f32 %v937, %v1013
    %v1017 = vsub.f32 0.0, %v1015
    %v1018 = vmul.f32 %v1017, 1.442695
    %v1019 = vpow.pop %v1018
    %v1020 = vadd.f32 %v1019, 1.0
    %v1021 = vrcp.pop %v1020
    %v1022 = vtanh.pop %v1016
    %v1023 = vsub.f32 0.0, %v1016
    %v1024 = vmul.f32 %v1023, 1.442695
    %v1025 = vpow.pop %v1024
    %v1026 = vadd.f32 %v1025, 1.0
    %v1027 = vrcp.pop %v1026
    %v1029 = vrot.slane %v927, 4
    %v1031 = vmul.f32 %v1021, %v1029
    %v1032 = vmul.f32 %v1021, %v1022
    %1034 = vrot.lane.b32.xlu0 %v1032, 64
    %v1035 = vpop.permute.xlu0 %1034
    %v1037 = vadd.f32 %v1031, %v1035
    %v1038 = vtanh.pop %v1037
    %v1039 = vmul.f32 %v1027, %v1038
    %1041 = vrot.lane.b32.xlu0 %v1039, 64
    %v1042 = vpop.permute.xlu0 %1041
    %v1043 = vsel %vm292, %v1042, 0
    %1045 = vmatprep.subr.mxu0 %v66
    %1046 = vmatpush1.msra.mxu0 %v65
    %1047 = vmatprep.subr.mxu0 %v68
    %1048 = vmatpush1.msra.mxu0 %v67
    %1049 = vmatprep.subr.mxu0 %v70
    %1050 = vmatpush1.msra.mxu0 %v69
    %1051 = vmatprep.subr.mxu0 %v72
    %1052 = vmatpush1.msra.mxu0 %v71
    %1053 = vmatprep.subr.mxu0 %v74
    %1054 = vmatpush1.msra.mxu0 %v73
    %1055 = vmatprep.subr.mxu0 %v76
    %1056 = vmatpush1.msra.mxu0 %v75
    %1057 = vmatprep.subr.mxu0 %v78
    %1058 = vmatpush1.msra.mxu0 %v77
    %1059 = vmatprep.subr.mxu0 %v80
    %1060 = vmatpush1.msra.mxu0 %v79
    %1061 = vmatprep.subr.mxu0 0.0
    %1062 = vmatpush1.msra.mxu0 0.0
    %1063 = vmatprep.subr.mxu0 0.0
    %1064 = vmatpush1.msra.mxu0 0.0
    %1065 = vmatprep.subr.mxu0 0.0
    %1066 = vmatpush1.msra.mxu0 0.0
    %1067 = vmatprep.subr.mxu0 0.0
    %1068 = vmatpush1.msra.mxu0 0.0
    %1069 = vmatprep.subr.mxu0 0.0
    %1070 = vmatpush1.msra.mxu0 0.0
    %1071 = vmatprep.subr.mxu0 0.0
    %1072 = vmatpush1.msra.mxu0 0.0
    %1073 = vmatprep.subr.mxu0 0.0
    %1074 = vmatpush1.msra.mxu0 0.0
    %1075 = vmatprep.subr.mxu0 0.0
    %1076 = vmatpush1.msra.mxu0 0.0
    %1077 = vmatprep.subr.mxu0 0.0
    %1078 = vmatpush1.msra.mxu0 0.0
    %1079 = vmatprep.subr.mxu0 0.0
    %1080 = vmatpush1.msra.mxu0 0.0
    %1081 = vmatprep.subr.mxu0 0.0
    %1082 = vmatpush1.msra.mxu0 0.0
    %1083 = vmatprep.subr.mxu0 0.0
    %1084 = vmatpush1.msra.mxu0 0.0
    %1085 = vmatprep.subr.mxu0 0.0
    %1086 = vmatpush1.msra.mxu0 0.0
    %1087 = vmatprep.subr.mxu0 0.0
    %1088 = vmatpush1.msra.mxu0 0.0
    %1089 = vmatprep.subr.mxu0 0.0
    %1090 = vmatpush1.msra.mxu0 0.0
    %1091 = vmatprep.subr.mxu0 0.0
    %1092 = vmatpush1.msra.mxu0 0.0
    %1093 = vmatprep.subr.mxu0 0.0
    %1094 = vmatpush1.msra.mxu0 0.0
    %1095 = vmatprep.subr.mxu0 0.0
    %1096 = vmatpush1.msra.mxu0 0.0
    %1097 = vmatprep.subr.mxu0 0.0
    %1098 = vmatpush1.msra.mxu0 0.0
    %1099 = vmatprep.subr.mxu0 0.0
    %1100 = vmatpush1.msra.mxu0 0.0
    %1101 = vmatprep.subr.mxu0 0.0
    %1102 = vmatpush1.msra.mxu0 0.0
    %1103 = vmatprep.subr.mxu0 0.0
    %1104 = vmatpush1.msra.mxu0 0.0
    %1105 = vmatprep.subr.mxu0 0.0
    %1106 = vmatpush1.msra.mxu0 0.0
    %1107 = vmatprep.subr.mxu0 0.0
    %1108 = vmatpush1.msra.mxu0 0.0
    %1109 = vmatprep.mubr.f32.mxu0 0.0
    %1110 = vmatmul.mubr.f32.gmra.mrb[0].mxu0 %v1043
    %v1111 = vpop.f32.mrb[0].mxu0
    %v1112 = vadd.f32 0.0, %v1111
    %v1113 = vpop.f32.mrb[0].mxu0
    %v1114 = vadd.f32 0.0, %v1113
    %1115 = vdwg.mxu0
    %v1118 = vrot.slane %v1112, 4
    %v1119 = vrot.slane %v1114, 4
    %v1122 = vadd.f32 %v936, %v1118
    %v1123 = vadd.f32 %v937, %v1119
    %v1124 = vsub.f32 0.0, %v1122
    %v1125 = vmul.f32 %v1124, 1.442695
    %v1126 = vpow.pop %v1125
    %v1127 = vadd.f32 %v1126, 1.0
    %v1128 = vrcp.pop %v1127
    %v1129 = vtanh.pop %v1123
    %v1130 = vsub.f32 0.0, %v1123
    %v1131 = vmul.f32 %v1130, 1.442695
    %v1132 = vpow.pop %v1131
    %v1133 = vadd.f32 %v1132, 1.0
    %v1134 = vrcp.pop %v1133
    %v1136 = vrot.slane %v1037, 4
    %v1138 = vmul.f32 %v1128, %v1136
    %v1139 = vmul.f32 %v1128, %v1129
    %1141 = vrot.lane.b32.xlu0 %v1139, 64
    %v1142 = vpop.permute.xlu0 %1141
    %v1144 = vadd.f32 %v1138, %v1142
    %v1145 = vtanh.pop %v1144
    %v1146 = vmul.f32 %v1134, %v1145
    %v1148 = vadd.f32 %v388, %v505
    %v1149 = vmax.f32 %v388, %v505
    %v1150 = vadd.f32 %v1148, %v605
    %v1151 = vmax.f32 %v1149, %v605
    %v1153 = vadd.f32 %v1150, %v722
    %v1154 = vmax.f32 %v1151, %v722
    %v1155 = vadd.f32 %v1153, %v822
    %v1156 = vmax.f32 %v1154, %v822
    %v1158 = vadd.f32 %v1155, %v939
    %v1159 = vmax.f32 %v1156, %v939
    %v1160 = vadd.f32 %v1158, %v1039
    %v1161 = vmax.f32 %v1159, %v1039
    %v1163 = vrot.slane %v1146, 4
    %v1165 = vadd.f32 %v1160, %v1163
    %v1166 = vmax.f32 %v1161, %v1163
    %v1167 = vmul.f32 %v1165, 0.125
    %1169 = vrot.lane.b32.xlu0 %v1167, 64
    %v1170 = vpop.permute.xlu0 %1169
    %v1172 = vsel %vm292, %v1170, %v1166
    %v1174 = vrot.slane %v1172, 2
    %v1176 = vld [vmem:[%s5] sm:$0xff]
    %v1177 = vld [vmem:[%s5 + $0x8] sm:$0xff]
    %v1178 = vld [vmem:[%s5 + $0x10] sm:$0xff]
    %v1179 = vld [vmem:[%s5 + $0x18] sm:$0xff]
    %v1180 = vld [vmem:[%s5 + $0x20] sm:$0xff]
    %v1181 = vld [vmem:[%s5 + $0x28] sm:$0xff]
    %v1182 = vld [vmem:[%s5 + $0x30] sm:$0xff]
    %v1183 = vld [vmem:[%s5 + $0x38] sm:$0xff]
    %v1184 = vld [vmem:[%s5 + $0x40] sm:$0xff]
    %v1185 = vld [vmem:[%s5 + $0x48] sm:$0xff]
    %v1186 = vld [vmem:[%s5 + $0x50] sm:$0xff]
    %v1187 = vld [vmem:[%s5 + $0x58] sm:$0xff]
    %v1188 = vld [vmem:[%s5 + $0x60] sm:$0xff]
    %v1189 = vld [vmem:[%s5 + $0x68] sm:$0xff]
    %v1190 = vld [vmem:[%s5 + $0x70] sm:$0xff]
    %v1191 = vld [vmem:[%s5 + $0x78] sm:$0xff]
    %v1192 = vld [vmem:[%s5 + $0x80] sm:$0xff]
    %v1193 = vld [vmem:[%s5 + $0x88] sm:$0xff]
    %v1194 = vld [vmem:[%s5 + $0x90] sm:$0xff]
    %v1195 = vld [vmem:[%s5 + $0x98] sm:$0xff]
    %v1196 = vld [vmem:[%s5 + $0xa0] sm:$0xff]
    %v1197 = vld [vmem:[%s5 + $0xa8] sm:$0xff]
    %v1198 = vld [vmem:[%s5 + $0xb0] sm:$0xff]
    %v1199 = vld [vmem:[%s5 + $0xb8] sm:$0xff]
    %v1200 = vld [vmem:[%s5 + $0xc0] sm:$0xff]
    %v1201 = vld [vmem:[%s5 + $0xc8] sm:$0xff]
    %v1202 = vld [vmem:[%s5 + $0xd0] sm:$0xff]
    %v1203 = vld [vmem:[%s5 + $0xd8] sm:$0xff]
    %v1204 = vld [vmem:[%s5 + $0xe0] sm:$0xff]
    %v1205 = vld [vmem:[%s5 + $0xe8] sm:$0xff]
    %v1206 = vld [vmem:[%s5 + $0xf0] sm:$0xff]
    %v1207 = vld [vmem:[%s5 + $0xf8] sm:$0xff]
    %v1208 = vld [vmem:[%s6] sm:$0x1]
    %v1210 = vlaneseq
    %v1211 = vshrl.u32 %v1210, 7
    %v1212 = vsub.s32 0, %v1211
    %v1213 = vrot.slane %v1208, %v1212
    %1215 = vmatprep.subr.mxu0 0.0
    %1216 = vmatpush1.msra.mxu0 %v1176
    %1217 = vmatprep.subr.mxu0 0.0
    %1218 = vmatpush1.msra.mxu0 %v1177
    %1219 = vmatprep.subr.mxu0 0.0
    %1220 = vmatpush1.msra.mxu0 %v1178
    %1221 = vmatprep.subr.mxu0 0.0
    %1222 = vmatpush1.msra.mxu0 %v1179
    %1223 = vmatprep.subr.mxu0 0.0
    %1224 = vmatpush1.msra.mxu0 %v1180
    %1225 = vmatprep.subr.mxu0 0.0
    %1226 = vmatpush1.msra.mxu0 %v1181
    %1227 = vmatprep.subr.mxu0 0.0
    %1228 = vmatpush1.msra.mxu0 %v1182
    %1229 = vmatprep.subr.mxu0 0.0
    %1230 = vmatpush1.msra.mxu0 %v1183
    %1231 = vmatprep.subr.mxu0 0.0
    %1232 = vmatpush1.msra.mxu0 %v1184
    %1233 = vmatprep.subr.mxu0 0.0
    %1234 = vmatpush1.msra.mxu0 %v1185
    %1235 = vmatprep.subr.mxu0 0.0
    %1236 = vmatpush1.msra.mxu0 %v1186
    %1237 = vmatprep.subr.mxu0 0.0
    %1238 = vmatpush1.msra.mxu0 %v1187
    %1239 = vmatprep.subr.mxu0 0.0
    %1240 = vmatpush1.msra.mxu0 %v1188
    %1241 = vmatprep.subr.mxu0 0.0
    %1242 = vmatpush1.msra.mxu0 %v1189
    %1243 = vmatprep.subr.mxu0 0.0
    %1244 = vmatpush1.msra.mxu0 %v1190
    %1245 = vmatprep.subr.mxu0 0.0
    %1246 = vmatpush1.msra.mxu0 %v1191
    %1247 = vmatprep.subr.mxu0 0.0
    %1248 = vmatpush1.msra.mxu0 %v1192
    %1249 = vmatprep.subr.mxu0 0.0
    %1250 = vmatpush1.msra.mxu0 %v1193
    %1251 = vmatprep.subr.mxu0 0.0
    %1252 = vmatpush1.msra.mxu0 %v1194
    %1253 = vmatprep.subr.mxu0 0.0
    %1254 = vmatpush1.msra.mxu0 %v1195
    %1255 = vmatprep.subr.mxu0 0.0
    %1256 = vmatpush1.msra.mxu0 %v1196
    %1257 = vmatprep.subr.mxu0 0.0
    %1258 = vmatpush1.msra.mxu0 %v1197
    %1259 = vmatprep.subr.mxu0 0.0
    %1260 = vmatpush1.msra.mxu0 %v1198
    %1261 = vmatprep.subr.mxu0 0.0
    %1262 = vmatpush1.msra.mxu0 %v1199
    %1263 = vmatprep.subr.mxu0 0.0
    %1264 = vmatpush1.msra.mxu0 %v1200
    %1265 = vmatprep.subr.mxu0 0.0
    %1266 = vmatpush1.msra.mxu0 %v1201
    %1267 = vmatprep.subr.mxu0 0.0
    %1268 = vmatpush1.msra.mxu0 %v1202
    %1269 = vmatprep.subr.mxu0 0.0
    %1270 = vmatpush1.msra.mxu0 %v1203
    %1271 = vmatprep.subr.mxu0 0.0
    %1272 = vmatpush1.msra.mxu0 %v1204
    %1273 = vmatprep.subr.mxu0 0.0
    %1274 = vmatpush1.msra.mxu0 %v1205
    %1275 = vmatprep.subr.mxu0 0.0
    %1276 = vmatpush1.msra.mxu0 %v1206
    %1277 = vmatprep.subr.mxu0 0.0
    %1278 = vmatpush1.msra.mxu0 %v1207
    %1279 = vmatprep.mubr.f32.mxu0 %v1174
    %1280 = vmatmul.mubr.f32.gmra.mrb[0].mxu0 %v1172
    %v1281 = vpop.f32.mrb[0].mxu0
    %v1282 = vadd.f32 %v1213, %v1281
    %v1283 = vpop.f32.mrb[0].mxu0
    %1284 = vdwg.mxu0
    %v1285 = vmax.f32 %v1282, 0.0
    %v1286 = vld [vmem:[%s7] sm:$0xff]
    %v1287 = vld [vmem:[%s7 + $0x8] sm:$0xff]
    %v1288 = vld [vmem:[%s7 + $0x10] sm:$0xff]
    %v1289 = vld [vmem:[%s7 + $0x18] sm:$0xff]
    %v1290 = vld [vmem:[%s7 + $0x20] sm:$0xff]
    %v1291 = vld [vmem:[%s7 + $0x28] sm:$0xff]
    %v1292 = vld [vmem:[%s7 + $0x30] sm:$0xff]
    %v1293 = vld [vmem:[%s7 + $0x38] sm:$0xff]
    %v1294 = vld [vmem:[%s8] sm:$0x1]
    %v1296 = vlaneseq
    %v1297 = vshrl.u32 %v1296, 7
    %v1298 = vsub.s32 0, %v1297
    %v1299 = vrot.slane %v1294, %v1298
    %v1302 = vsel %vm292, %v1285, 0
    %1304 = vmatprep.subr.mxu0 0.0
    %1305 = vmatpush1.msra.mxu0 %v1286
    %1306 = vmatprep.subr.mxu0 0.0
    %1307 = vmatpush1.msra.mxu0 %v1287
    %1308 = vmatprep.subr.mxu0 0.0
    %1309 = vmatpush1.msra.mxu0 %v1288
    %1310 = vmatprep.subr.mxu0 0.0
    %1311 = vmatpush1.msra.mxu0 %v1289
    %1312 = vmatprep.subr.mxu0 0.0
    %1313 = vmatpush1.msra.mxu0 %v1290
    %1314 = vmatprep.subr.mxu0 0.0
    %1315 = vmatpush1.msra.mxu0 %v1291
    %1316 = vmatprep.subr.mxu0 0.0
    %1317 = vmatpush1.msra.mxu0 %v1292
    %1318 = vmatprep.subr.mxu0 0.0
    %1319 = vmatpush1.msra.mxu0 %v1293
    %1320 = vmatprep.subr.mxu0 0.0
    %1321 = vmatpush1.msra.mxu0 0.0
    %1322 = vmatprep.subr.mxu0 0.0
    %1323 = vmatpush1.msra.mxu0 0.0
    %1324 = vmatprep.subr.mxu0 0.0
    %1325 = vmatpush1.msra.mxu0 0.0
    %1326 = vmatprep.subr.mxu0 0.0
    %1327 = vmatpush1.msra.mxu0 0.0
    %1328 = vmatprep.subr.mxu0 0.0
    %1329 = vmatpush1.msra.mxu0 0.0
    %1330 = vmatprep.subr.mxu0 0.0
    %1331 = vmatpush1.msra.mxu0 0.0
    %1332 = vmatprep.subr.mxu0 0.0
    %1333 = vmatpush1.msra.mxu0 0.0
    %1334 = vmatprep.subr.mxu0 0.0
    %1335 = vmatpush1.msra.mxu0 0.0
    %1336 = vmatprep.subr.mxu0 0.0
    %1337 = vmatpush1.msra.mxu0 0.0
    %1338 = vmatprep.subr.mxu0 0.0
    %1339 = vmatpush1.msra.mxu0 0.0
    %1340 = vmatprep.subr.mxu0 0.0
    %1341 = vmatpush1.msra.mxu0 0.0
    %1342 = vmatprep.subr.mxu0 0.0
    %1343 = vmatpush1.msra.mxu0 0.0
    %1344 = vmatprep.subr.mxu0 0.0
    %1345 = vmatpush1.msra.mxu0 0.0
    %1346 = vmatprep.subr.mxu0 0.0
    %1347 = vmatpush1.msra.mxu0 0.0
    %1348 = vmatprep.subr.mxu0 0.0
    %1349 = vmatpush1.msra.mxu0 0.0
    %1350 = vmatprep.subr.mxu0 0.0
    %1351 = vmatpush1.msra.mxu0 0.0
    %1352 = vmatprep.subr.mxu0 0.0
    %1353 = vmatpush1.msra.mxu0 0.0
    %1354 = vmatprep.subr.mxu0 0.0
    %1355 = vmatpush1.msra.mxu0 0.0
    %1356 = vmatprep.subr.mxu0 0.0
    %1357 = vmatpush1.msra.mxu0 0.0
    %1358 = vmatprep.subr.mxu0 0.0
    %1359 = vmatpush1.msra.mxu0 0.0
    %1360 = vmatprep.subr.mxu0 0.0
    %1361 = vmatpush1.msra.mxu0 0.0
    %1362 = vmatprep.subr.mxu0 0.0
    %1363 = vmatpush1.msra.mxu0 0.0
    %1364 = vmatprep.subr.mxu0 0.0
    %1365 = vmatpush1.msra.mxu0 0.0
    %1366 = vmatprep.subr.mxu0 0.0
    %1367 = vmatpush1.msra.mxu0 0.0
    %1368 = vmatprep.mubr.f32.mxu0 0.0
    %1369 = vmatmul.mubr.f32.gmra.mrb[0].mxu0 %v1302
    %v1370 = vpop.f32.mrb[0].mxu0
    %v1371 = vadd.f32 %v1299, %v1370
    %v1372 = vpop.f32.mrb[0].mxu0
    %1373 = vdwg.mxu0
    %v1374 = vtanh.pop %v1371
    %v1375 = vld [vmem:[%s9] sm:$0xff]
    %v1376 = vld [vmem:[%s9 + $0x8] sm:$0xff]
    %v1377 = vld [vmem:[%s9 + $0x10] sm:$0xff]
    %v1378 = vld [vmem:[%s9 + $0x18] sm:$0xff]
    %v1379 = vld [vmem:[%s10] sm:$0x1]
    %v1381 = vlaneseq
    %v1382 = vshrl.u32 %v1381, 7
    %v1383 = vsub.s32 0, %v1382
    %v1384 = vrot.slane %v1379, %v1383
    %v1387 = vsel %vm93, %v1374, 0
    %1389 = vmatprep.subr.mxu0 0.0
    %1390 = vmatpush1.msra.mxu0 %v1375
    %1391 = vmatprep.subr.mxu0 0.0
    %1392 = vmatpush1.msra.mxu0 %v1376
    %1393 = vmatprep.subr.mxu0 0.0
    %1394 = vmatpush1.msra.mxu0 %v1377
    %1395 = vmatprep.subr.mxu0 0.0
    %1396 = vmatpush1.msra.mxu0 %v1378
    %1397 = vmatprep.subr.mxu0 0.0
    %1398 = vmatpush1.msra.mxu0 0.0
    %1399 = vmatprep.subr.mxu0 0.0
    %1400 = vmatpush1.msra.mxu0 0.0
    %1401 = vmatprep.subr.mxu0 0.0
    %1402 = vmatpush1.msra.mxu0 0.0
    %1403 = vmatprep.subr.mxu0 0.0
    %1404 = vmatpush1.msra.mxu0 0.0
    %1405 = vmatprep.subr.mxu0 0.0
    %1406 = vmatpush1.msra.mxu0 0.0
    %1407 = vmatprep.subr.mxu0 0.0
    %1408 = vmatpush1.msra.mxu0 0.0
    %1409 = vmatprep.subr.mxu0 0.0
    %1410 = vmatpush1.msra.mxu0 0.0
    %1411 = vmatprep.subr.mxu0 0.0
    %1412 = vmatpush1.msra.mxu0 0.0
    %1413 = vmatprep.subr.mxu0 0.0
    %1414 = vmatpush1.msra.mxu0 0.0
    %1415 = vmatprep.subr.mxu0 0.0
    %1416 = vmatpush1.msra.mxu0 0.0
    %1417 = vmatprep.subr.mxu0 0.0
    %1418 = vmatpush1.msra.mxu0 0.0
    %1419 = vmatprep.subr.mxu0 0.0
    %1420 = vmatpush1.msra.mxu0 0.0
    %1421 = vmatprep.subr.mxu0 0.0
    %1422 = vmatpush1.msra.mxu0 0.0
    %1423 = vmatprep.subr.mxu0 0.0
    %1424 = vmatpush1.msra.mxu0 0.0
    %1425 = vmatprep.subr.mxu0 0.0
    %1426 = vmatpush1.msra.mxu0 0.0
    %1427 = vmatprep.subr.mxu0 0.0
    %1428 = vmatpush1.msra.mxu0 0.0
    %1429 = vmatprep.subr.mxu0 0.0
    %1430 = vmatpush1.msra.mxu0 0.0
    %1431 = vmatprep.subr.mxu0 0.0
    %1432 = vmatpush1.msra.mxu0 0.0
    %1433 = vmatprep.subr.mxu0 0.0
    %1434 = vmatpush1.msra.mxu0 0.0
    %1435 = vmatprep.subr.mxu0 0.0
    %1436 = vmatpush1.msra.mxu0 0.0
    %1437 = vmatprep.subr.mxu0 0.0
    %1438 = vmatpush1.msra.mxu0 0.0
    %1439 = vmatprep.subr.mxu0 0.0
    %1440 = vmatpush1.msra.mxu0 0.0
    %1441 = vmatprep.subr.mxu0 0.0
    %1442 = vmatpush1.msra.mxu0 0.0
    %1443 = vmatprep.subr.mxu0 0.0
    %1444 = vmatpush1.msra.mxu0 0.0
    %1445 = vmatprep.subr.mxu0 0.0
    %1446 = vmatpush1.msra.mxu0 0.0
    %1447 = vmatprep.subr.mxu0 0.0
    %1448 = vmatpush1.msra.mxu0 0.0
    %1449 = vmatprep.subr.mxu0 0.0
    %1450 = vmatpush1.msra.mxu0 0.0
    %1451 = vmatprep.subr.mxu0 0.0
    %1452 = vmatpush1.msra.mxu0 0.0
    %1453 = vmatprep.mubr.f32.mxu0 0.0
    %1454 = vmatmul.mubr.f32.gmra.mrb[0].mxu0 %v1387
    %v1455 = vpop.f32.mrb[0].mxu0
    %v1456 = vadd.f32 %v1384, %v1455
    %v1457 = vpop.f32.mrb[0].mxu0
    %1458 = vdwg.mxu0
    %v1459 = vmax.f32 %v1456, 0.0
    %v1460 = vld [vmem:[%s11] sm:$0xf]
    %v1461 = vld [vmem:[%s12] sm:$0x1]
    %v1463 = vlaneseq
    %v1464 = vshrl.u32 %v1463, 7
    %v1465 = vsub.s32 0, %v1464
    %v1466 = vrot.slane %v1461, %v1465
    %vm1468 = vcmask 31744
    %v1470 = vsel %vm1468, %v1459, 0
    %vm1472 = vcmask 1043456
    %v1474 = vsel %vm1472, %v1460, 0
    %1476 = vmatprep.subr.mxu0 0.0
    %1477 = vmatpush1.msra.mxu0 %v1474
    %1478 = vmatprep.subr.mxu0 0.0
    %1479 = vmatpush1.msra.mxu0 0.0
    %1480 = vmatprep.subr.mxu0 0.0
    %1481 = vmatpush1.msra.mxu0 0.0
    %1482 = vmatprep.subr.mxu0 0.0
    %1483 = vmatpush1.msra.mxu0 0.0
    %1484 = vmatprep.subr.mxu0 0.0
    %1485 = vmatpush1.msra.mxu0 0.0
    %1486 = vmatprep.subr.mxu0 0.0
    %1487 = vmatpush1.msra.mxu0 0.0
    %1488 = vmatprep.subr.mxu0 0.0
    %1489 = vmatpush1.msra.mxu0 0.0
    %1490 = vmatprep.subr.mxu0 0.0
    %1491 = vmatpush1.msra.mxu0 0.0
    %1492 = vmatprep.subr.mxu0 0.0
    %1493 = vmatpush1.msra.mxu0 0.0
    %1494 = vmatprep.subr.mxu0 0.0
    %1495 = vmatpush1.msra.mxu0 0.0
    %1496 = vmatprep.subr.mxu0 0.0
    %1497 = vmatpush1.msra.mxu0 0.0
    %1498 = vmatprep.subr.mxu0 0.0
    %1499 = vmatpush1.msra.mxu0 0.0
    %1500 = vmatprep.subr.mxu0 0.0
    %1501 = vmatpush1.msra.mxu0 0.0
    %1502 = vmatprep.subr.mxu0 0.0
    %1503 = vmatpush1.msra.mxu0 0.0
    %1504 = vmatprep.subr.mxu0 0.0
    %1505 = vmatpush1.msra.mxu0 0.0
    %1506 = vmatprep.subr.mxu0 0.0
    %1507 = vmatpush1.msra.mxu0 0.0
    %1508 = vmatprep.subr.mxu0 0.0
    %1509 = vmatpush1.msra.mxu0 0.0
    %1510 = vmatprep.subr.mxu0 0.0
    %1511 = vmatpush1.msra.mxu0 0.0
    %1512 = vmatprep.subr.mxu0 0.0
    %1513 = vmatpush1.msra.mxu0 0.0
    %1514 = vmatprep.subr.mxu0 0.0
    %1515 = vmatpush1.msra.mxu0 0.0
    %1516 = vmatprep.subr.mxu0 0.0
    %1517 = vmatpush1.msra.mxu0 0.0
    %1518 = vmatprep.subr.mxu0 0.0
    %1519 = vmatpush1.msra.mxu0 0.0
    %1520 = vmatprep.subr.mxu0 0.0
    %1521 = vmatpush1.msra.mxu0 0.0
    %1522 = vmatprep.subr.mxu0 0.0
    %1523 = vmatpush1.msra.mxu0 0.0
    %1524 = vmatprep.subr.mxu0 0.0
    %1525 = vmatpush1.msra.mxu0 0.0
    %1526 = vmatprep.subr.mxu0 0.0
    %1527 = vmatpush1.msra.mxu0 0.0
    %1528 = vmatprep.subr.mxu0 0.0
    %1529 = vmatpush1.msra.mxu0 0.0
    %1530 = vmatprep.subr.mxu0 0.0
    %1531 = vmatpush1.msra.mxu0 0.0
    %1532 = vmatprep.subr.mxu0 0.0
    %1533 = vmatpush1.msra.mxu0 0.0
    %1534 = vmatprep.subr.mxu0 0.0
    %1535 = vmatpush1.msra.mxu0 0.0
    %1536 = vmatprep.subr.mxu0 0.0
    %1537 = vmatpush1.msra.mxu0 0.0
    %1538 = vmatprep.subr.mxu0 0.0
    %1539 = vmatpush1.msra.mxu0 0.0
    %1540 = vmatprep.mubr.f32.mxu0 0.0
    %1541 = vmatmul.mubr.f32.gmra.mrb[0].mxu0 %v1470
    %v1542 = vpop.f32.mrb[0].mxu0
    %v1543 = vadd.f32 %v1466, %v1542
    %v1544 = vpop.f32.mrb[0].mxu0
    %1545 = vdwg.mxu0
    %vm1546 = vcmask 17408
    %1547 = vst.msk [vmem:[#allocation2] sm:$0x3] %vm1546, %v1543
    // Predicated region
    $region54: #{esim_forward.5} parent=1 // pred_check
      _
    $region55: #{esim_forward.5} parent=1 // pred_check_branch
      %1549 = sbr.rel (0) target = $region57
    $region56: #{esim_forward.5} parent=1 // pred_region
      %s1551 = ssub.s32 32, 32
      %1552 = vsyncadd [#allocation3], %s1551
      %s1554 = sshll.u32 [#allocation2], 4
      %s1555 = int_to_ptr.vmem [resolvable:$true] %s1554
      %1557 = dma.vmem_to_hbm [thread:$0]  %s1555, 32, %s13, [#allocation3]
    $region57: #{esim_forward.5} parent=1 // pred_fallthru
      _
    // Predicated region
    $region58: #{esim_forward.5} parent=1 // pred_check
      _
    $region59: #{esim_forward.5} parent=1 // pred_check_branch
      %1559 = sbr.rel (0) target = $region61
    $region60: #{esim_forward.5} parent=1 // pred_region
      %1560 = dma.done [#allocation3], 32
    $region61: #{esim_forward.5} parent=1 // pred_fallthru
      _
    %1561 = vsyncpa [#allocation3], 1

</llo_original>
